<compile_context>
chip_gen: v5e
topology: v5e:2x2
jax: 0.10.0
libtpu: 0.0.40
codegen_flags: <defaults>
</compile_context>

<pallas_src>
import functools

import jax
import jax.numpy as jnp
from jax.experimental import pallas as pl
from jax.experimental.pallas import tpu as pltpu

_LANE = 128


def _round_up(x, m):
    return ((x + m - 1) // m) * m


def _vmem_budget_bytes():
    """Per-generation scoped-VMEM budget (~96 MiB on v5e/v6e, 48 MiB on v7x)."""
    phys = 64 * 1024 * 1024            # conservative default (v7x per-core VMEM)
    try:
        phys = int(pltpu.get_tpu_info().vmem_capacity_bytes)
    except Exception:                  # CPU host / older JAX: keep the default
        pass
    return max(phys - (32 << 20), (phys * 3) // 4)


_VMEM_BUDGET = _vmem_budget_bytes()
# Bigger row tiles on 128-MiB-VMEM parts (v5e/v6e); 256 on v7x (64 MiB).
_DEFAULT_TM = 512 if _VMEM_BUDGET >= (80 << 20) else 256
_NUM_LAYERS = 3


# --------------------------------------------------------------------------- #
# Fused kernel: 3 x (aggregate + MLP + ReLU) + global_add_pool
# --------------------------------------------------------------------------- #
def _fused_gin_kernel(a_ref, x_ref, p_ref, w1_ref, b1_ref, w2_ref, b2_ref,
                      out_ref, h_scr, *, tm, np_, hp, w, a_resident):
    """grid = (layer, row_tile); both axes sequential ('arbitrary')."""
    l = pl.program_id(0)
    i = pl.program_id(1)

    @pl.when((l == 0) & (i == 0))
    def _init():
        out_ref[...] = jnp.zeros_like(out_ref)        # pooled accumulator
        h_scr[pl.ds(np_, np_), :] = x_ref[...]        # slot 1 <- padded input x

    # Ping-pong node features between scratch slots: layer l reads slot
    # (l+1)%2 and writes slot l%2 (layer 0 reads the x copy in slot 1).
    read0 = pl.multiple_of(((l + 1) % 2) * np_, 8)
    h_in = h_scr[pl.ds(read0, np_), :]                # [Np, W] bf16

    if a_resident:
        row0 = pl.multiple_of(i * tm, 8)
        a_tile = a_ref[pl.ds(row0, tm), :]            # A resident in VMEM
    else:
        a_tile = a_ref[...]                           # A row strip streamed

    # (A + I) @ h : neighbour sum + (1+eps)*x self term (eps=0) in one bf16
    # MXU matmul with f32 accumulation.
    agg = jnp.dot(a_tile, h_in, preferred_element_type=jnp.float32)   # [TM, W]

    # MLP (Linear -> ReLU -> Linear) + the outer ReLU from GINNet.forward.
    z = jnp.dot(agg.astype(jnp.bfloat16), w1_ref[0],
                preferred_element_type=jnp.float32) + b1_ref[0]
    z = jnp.maximum(z, 0.0)
    z = jnp.dot(z.astype(jnp.bfloat16), w2_ref[0],
                preferred_element_type=jnp.float32) + b2_ref[0]
    y = jnp.maximum(z, 0.0)                           # [TM, Hp] f32
    y_bf = y.astype(jnp.bfloat16)

    # Stash this tile for the next layer (bf16, never leaves VMEM).
    y_store = jnp.pad(y_bf, ((0, 0), (0, w - hp))) if w > hp else y_bf
    dst0 = pl.multiple_of((l % 2) * np_ + i * tm, 8)
    h_scr[pl.ds(dst0, tm), :] = y_store

    # Fused global_add_pool on the last layer: h3 never round-trips to HBM.
    @pl.when(l == pl.num_programs(0) - 1)
    def _pool():
        out_ref[...] += jnp.dot(p_ref[...], y_bf,
                                preferred_element_type=jnp.float32)


# --------------------------------------------------------------------------- #
# pallas_call wrapper
# --------------------------------------------------------------------------- #
def _fused_gin_call(adj, xpad, pool, w1s, b1s, w2s, b2s, *, tm, a_resident,
                    single_buffer_residents):
    num_layers = w1s.shape[0]
    np_ = adj.shape[0]
    gp = pool.shape[0]
    w = xpad.shape[1]
    hp = w1s.shape[2]
    nt = np_ // tm

    def resident(shape, index_map):
        if single_buffer_residents:
            return pl.BlockSpec(shape, index_map, pipeline_mode=pl.Buffered(1))
        return pl.BlockSpec(shape, index_map)

    if a_resident:
        a_spec = resident((np_, np_), lambda l, i: (0, 0))     # DMA'd once
    else:
        a_spec = pl.BlockSpec((tm, np_), lambda l, i: (i, 0))  # streamed rows

    kernel = functools.partial(_fused_gin_kernel, tm=tm, np_=np_, hp=hp, w=w,
                               a_resident=a_resident)
    return pl.pallas_call(
        kernel,
        out_shape=jax.ShapeDtypeStruct((gp, hp), jnp.float32),
        grid_spec=pltpu.PrefetchScalarGridSpec(
            num_scalar_prefetch=0,
            grid=(num_layers, nt),
            in_specs=[
                a_spec,                                           # (A + I)
                resident((np_, w), lambda l, i: (0, 0)),          # x: resident
                pl.BlockSpec((gp, tm), lambda l, i: (0, i)),      # P columns
                pl.BlockSpec((1, w, hp), lambda l, i: (l, 0, 0)),   # w1[l]
                pl.BlockSpec((1, 1, hp), lambda l, i: (l, 0, 0)),   # b1[l]
                pl.BlockSpec((1, hp, hp), lambda l, i: (l, 0, 0)),  # w2[l]
                pl.BlockSpec((1, 1, hp), lambda l, i: (l, 0, 0)),   # b2[l]
            ],
            out_specs=pl.BlockSpec((gp, hp), lambda l, i: (0, 0)),  # resident acc
            scratch_shapes=[pltpu.VMEM((2 * np_, w), jnp.bfloat16)],
        ),
        compiler_params=pltpu.CompilerParams(
            # Layer ping-pong + pooled accumulator are scratch-carried across
            # both grid axes, so both must run sequentially on one core.
            # TODO(synk): v7x megacore -- split row tiles over a leading 2-wide
            # core axis and sum the two [Gp, Hp] partials in XLA.
            dimension_semantics=("arbitrary", "arbitrary"),
            vmem_limit_bytes=_VMEM_BUDGET,
        ),
    )(adj, xpad, pool, w1s, b1s, w2s, b2s)


# --------------------------------------------------------------------------- #
# Forward pass
# --------------------------------------------------------------------------- #
def gin_net_forward(x, edge_index, batch, params, num_graphs, *, tile_m=None,
                    edge_attr=None, force_stream_a=False,
                    single_buffer_residents=True):
    """GINNet.forward: 3x(GINConv -> ReLU), global_add_pool, Linear(H,1), squeeze."""
    del edge_attr  # GINConv ignores edge_attr

    (w1_0, b1_0, w2_0, b2_0,
     w1_1, b1_1, w2_1, b2_1,
     w1_2, b1_2, w2_2, b2_2,
     wlin, blin) = params

    n, d = x.shape
    hdim = w2_0.shape[1]
    dp = _round_up(d, _LANE)
    hp = _round_up(hdim, _LANE)
    w = max(dp, hp)

    tile_m = _DEFAULT_TM if tile_m is None else tile_m
    tm = min(_round_up(tile_m, _LANE), _round_up(n, _LANE))
    np_ = _round_up(n, tm)
    gp = _round_up(max(num_graphs, 1), 8)

    # ---- decide whether the full (A + I) fits the VMEM budget ---------------
    est = (np_ * np_ * 2                      # resident (A + I), single-buffered
           + 3 * np_ * w * 2                  # resident x + h ping-pong scratch
           + 2 * tm * np_ * 2                 # in-flight A row tiles / headroom
           + 8 * hp * (w + hp)                # double-buffered MLP weights (bf16)
           + 2 * gp * tm * 2 + gp * hp * 4)   # P tiles + pooled accumulator
    a_resident = (not force_stream_a) and est <= int(0.85 * _VMEM_BUDGET)
    # TODO(synk): for graphs where even the streamed variant's resident h
    # (~4*Np*W bytes) overflows VMEM, add a contraction (node) grid axis with a
    # [TM, Hp] f32 accumulator instead of keeping the full h resident.

    src, dst = edge_index[0], edge_index[1]
    diag = jnp.arange(np_, dtype=jnp.int32)
    # (A + I) built directly in bf16 (exact for edge multiplicities < 256);
    # no N^2 f32 temporaries and no materialized jnp.eye.
    adj = jnp.zeros((np_, np_), jnp.bfloat16)
    adj = adj.at[dst, src].add(1.0)
    adj = adj.at[diag, diag].add(1.0)

    # P[g, n] = 1 iff node n is in graph g.  Padded nodes get graph id gp (out
    # of range) so the bias garbage padded rows accumulate never reaches output.
    batch_p = jnp.concatenate(
        [batch.astype(jnp.int32), jnp.full((np_ - n,), gp, jnp.int32)])
    pool = (jnp.arange(gp, dtype=jnp.int32)[:, None]
            == batch_p[None, :]).astype(jnp.bfloat16)

    xpad = jnp.pad(x, ((0, np_ - n), (0, w - d))).astype(jnp.bfloat16)

    def pad2(a, r, c):
        return jnp.pad(a, ((0, r - a.shape[0]), (0, c - a.shape[1])))

    w1s = jnp.stack([pad2(w1_0, w, hp), pad2(w1_1, w, hp),
                     pad2(w1_2, w, hp)]).astype(jnp.bfloat16)
    w2s = jnp.stack([pad2(w2_0, hp, hp), pad2(w2_1, hp, hp),
                     pad2(w2_2, hp, hp)]).astype(jnp.bfloat16)
    b1s = jnp.stack([pad2(b1_0, 1, hp), pad2(b1_1, 1, hp), pad2(b1_2, 1, hp)])
    b2s = jnp.stack([pad2(b2_0, 1, hp), pad2(b2_1, 1, hp), pad2(b2_2, 1, hp)])

    pooled = _fused_gin_call(adj, xpad, pool, w1s, b1s, w2s, b2s, tm=tm,
                             a_resident=a_resident,
                             single_buffer_residents=single_buffer_residents)
    pooled = pooled[:num_graphs, :hdim]

    # Tiny Linear(H, 1) + squeeze readout stays in XLA so the kernel output is
    # lane-dense (128-wide) instead of a 1-wide masked store.
    return jnp.squeeze(pooled @ wlin + blin)


# --------------------------------------------------------------------------- #
# Parameters / reference
# --------------------------------------------------------------------------- #
def init_params(key, input_dim, hidden_dim=64, num_layers=3):
    """Deterministic synthetic parameters matching the PyTorch module's shapes."""
    params = []
    keys = jax.random.split(key, num_layers * 4 + 2)
    k = 0
    for i in range(num_layers):
        d_in = input_dim if i == 0 else hidden_dim
        w1 = jax.random.normal(keys[k], (d_in, hidden_dim), jnp.float32) * 0.1; k += 1
        b1 = jax.random.normal(keys[k], (1, hidden_dim), jnp.float32) * 0.1;    k += 1
        w2 = jax.random.normal(keys[k], (hidden_dim, hidden_dim), jnp.float32) * 0.1; k += 1
        b2 = jax.random.normal(keys[k], (1, hidden_dim), jnp.float32) * 0.1;    k += 1
        params.extend([w1, b1, w2, b2])
    wlin = jax.random.normal(keys[k], (hidden_dim, 1), jnp.float32) * 0.1; k += 1
    blin = jax.random.normal(keys[k], (1, 1), jnp.float32) * 0.1
    params.extend([wlin, blin])
    return tuple(params)


def _reference_forward(x, edge_index, batch, params, num_graphs):
    """Pure-JAX f32 reference (scatter-add aggregation) for a sanity check."""
    (w1_0, b1_0, w2_0, b2_0,
     w1_1, b1_1, w2_1, b2_1,
     w1_2, b1_2, w2_2, b2_2,
     wlin, blin) = params
    src, dst = edge_index[0], edge_index[1]

    def layer(h, w1, b1, w2, b2):
        agg = jnp.zeros_like(h).at[dst].add(h[src]) + h
        z = jnp.maximum(agg @ w1 + b1, 0.0)
        z = z @ w2 + b2
        return jnp.maximum(z, 0.0)

    h = layer(x, w1_0, b1_0, w2_0, b2_0)
    h = layer(h, w1_1, b1_1, w2_1, b2_1)
    h = layer(h, w1_2, b1_2, w2_2, b2_2)
    pooled = jnp.zeros((num_graphs, h.shape[1]), h.dtype).at[batch].add(h)
    return jnp.squeeze(pooled @ wlin + blin)


# --------------------------------------------------------------------------- #
# Self-test
# --------------------------------------------------------------------------- #
if __name__ == "__main__":
    key = jax.random.PRNGKey(0)
    k_x, k_p = jax.random.split(key)

    nodes_per_graph = 64
    num_graphs = 8
    num_nodes = nodes_per_graph * num_graphs      # 512 nodes -> 4 row tiles @128
    input_dim = 8
    hidden_dim = 32

    x = jax.random.normal(k_x, (num_nodes, input_dim), jnp.float32)

    # Deterministic edges: bidirectional ring within each graph.
    edges = []
    for g in range(num_graphs):
        base = g * nodes_per_graph
        for i in range(nodes_per_graph):
            u, v = base + i, base + (i + 1) % nodes_per_graph
            edges.append((u, v))
            edges.append((v, u))
    edge_index = jnp.array(edges, dtype=jnp.int32).T                  # [2, E]
    batch = jnp.repeat(jnp.arange(num_graphs, dtype=jnp.int32), nodes_per_graph)

    params = init_params(k_p, input_dim, hidden_dim=hidden_dim, num_layers=3)
    ref = _reference_forward(x, edge_index, batch, params, num_graphs)

    def close(a, b, tol=5e-2):
        return float(jnp.max(jnp.abs(a - b))) <= tol * (1.0 + float(jnp.max(jnp.abs(b))))

    def run(**kw):
        fwd = jax.jit(functools.partial(gin_net_forward, num_graphs=num_graphs,
                                        tile_m=128, **kw))
        return jax.block_until_ready(fwd(x, edge_index, batch, params))

    # tile_m=128 -> grid = (3 layers, 4 row tiles): exercises the layer
    # ping-pong, the resident-A path and the fused pooling accumulator.
    try:
        out = run()
        single_buf = True
    except Exception:
        # Fallback for JAX builds where pl.Buffered(1) is rejected.
        out = run(single_buffer_residents=False)
        single_buf = False

    assert out.shape == (num_graphs,), out.shape
    assert close(out, ref), (out, ref)

    # Streamed-A fallback path (A row strips DMA'd from HBM per grid step).
    out_s = run(force_stream_a=True, single_buffer_residents=single_buf)
    assert close(out_s, ref), (out_s, ref)

    print("KERNEL_OK")
</pallas_src>

<mosaic_0001>
module attributes {stable_mosaic.version = 11 : i64} {
  func.func @_fused_gin_kernel(%arg0: i32, %arg1: i32, %arg2: memref<512x512xbf16, #tpu.memory_space<vmem>>, %arg3: memref<512x128xbf16, #tpu.memory_space<vmem>>, %arg4: memref<8x128xbf16, #tpu.memory_space<vmem>>, %arg5: memref<1x128x128xbf16, #tpu.memory_space<vmem>>, %arg6: memref<1x1x128xf32, #tpu.memory_space<vmem>>, %arg7: memref<1x128x128xbf16, #tpu.memory_space<vmem>>, %arg8: memref<1x1x128xf32, #tpu.memory_space<vmem>>, %arg9: memref<8x128xf32, #tpu.memory_space<vmem>>, %arg10: memref<1024x128xbf16, #tpu.memory_space<vmem>>) attributes {dimension_semantics = [#tpu.dimension_semantics<arbitrary>, #tpu.dimension_semantics<arbitrary>], iteration_bounds = array<i64: 3, 4>, scalar_prefetch = 0 : i64, scratch_operands = 1 : i64, tpu.core_type = #tpu.core_type<tc>, window_params = [{pipeline_mode = #tpu.pipeline_mode<synchronous>, transform_indices = @transform_0, window_bounds = array<i64: 512, 512>}, {pipeline_mode = #tpu.pipeline_mode<synchronous>, transform_indices = @transform_1, window_bounds = array<i64: 512, 128>}, {transform_indices = @transform_2, window_bounds = array<i64: 8, 128>}, {transform_indices = @transform_3, window_bounds = array<i64: 1, 128, 128>}, {transform_indices = @transform_4, window_bounds = array<i64: 1, 1, 128>}, {transform_indices = @transform_5, window_bounds = array<i64: 1, 128, 128>}, {transform_indices = @transform_6, window_bounds = array<i64: 1, 1, 128>}, {pipeline_mode = #tpu.pipeline_mode<synchronous>, transform_indices = @transform_7, window_bounds = array<i64: 8, 128>}]} {
    %c0_i32 = arith.constant 0 : i32
    %0 = arith.cmpi eq, %arg0, %c0_i32 : i32
    %c0_i32_0 = arith.constant 0 : i32
    %1 = arith.cmpi eq, %arg1, %c0_i32_0 : i32
    %2 = arith.andi %0, %1 : i1
    %3 = arith.extui %2 : i1 to i32
    %c0_i32_1 = arith.constant 0 : i32
    %4 = arith.cmpi ne, %3, %c0_i32_1 : i32
    scf.if %4 {
      %cst_35 = arith.constant 0.000000e+00 : f32
      %65 = vector.broadcast %cst_35 : f32 to vector<8x128xf32>
      %c0_36 = arith.constant 0 : index
      %c0_37 = arith.constant 0 : index
      %66 = vector.load %arg9[%c0_36, %c0_37] : memref<8x128xf32, #tpu.memory_space<vmem>>, vector<8x128xf32>
      tpu.vector_store %arg9[%c0_36, %c0_37], %65 {strides = array<i32>} : memref<8x128xf32, #tpu.memory_space<vmem>>, vector<8x128xf32>,
      %c0_38 = arith.constant 0 : index
      %c0_39 = arith.constant 0 : index
      %67 = vector.load %arg3[%c0_38, %c0_39] : memref<512x128xbf16, #tpu.memory_space<vmem>>, vector<512x128xbf16>
      %c512 = arith.constant 512 : index
      %c0_40 = arith.constant 0 : index
      %68 = vector.load %arg10[%c512, %c0_40] : memref<1024x128xbf16, #tpu.memory_space<vmem>>, vector<512x128xbf16>
      tpu.vector_store %arg10[%c512, %c0_40], %67 {strides = array<i32>} : memref<1024x128xbf16, #tpu.memory_space<vmem>>, vector<512x128xbf16>,
    } else {
    }
    %c1_i32 = arith.constant 1 : i32
    %5 = arith.addi %arg0, %c1_i32 : i32
    %c2_i32 = arith.constant 2 : i32
    %c0_i32_2 = arith.constant 0 : i32
    %6 = arith.cmpi eq, %c2_i32, %c0_i32_2 : i32
    %c1_i32_3 = arith.constant 1 : i32
    %7 = arith.select %6, %c1_i32_3, %c2_i32 : i32
    %8 = arith.remsi %5, %7 : i32
    %c0_i32_4 = arith.constant 0 : i32
    %9 = arith.cmpi ne, %8, %c0_i32_4 : i32
    %c0_i32_5 = arith.constant 0 : i32
    %10 = arith.cmpi slt, %8, %c0_i32_5 : i32
    %c0_i32_6 = arith.constant 0 : i32
    %11 = arith.cmpi slt, %7, %c0_i32_6 : i32
    %12 = arith.xori %10, %11 : i1
    %13 = arith.andi %12, %9 : i1
    %14 = arith.addi %8, %7 : i32
    %15 = arith.select %13, %14, %8 : i32
    %c512_i32 = arith.constant 512 : i32
    %16 = arith.muli %15, %c512_i32 : i32
    %17 = tpu.assume_multiple %16, 8 : i32
    %18 = arith.index_cast %17 : i32 to index
    %c0 = arith.constant 0 : index
    %19 = vector.load %arg10[%18, %c0] : memref<1024x128xbf16, #tpu.memory_space<vmem>>, vector<512x128xbf16>
    %c128_i32 = arith.constant 128 : i32
    %20 = arith.muli %arg1, %c128_i32 : i32
    %21 = tpu.assume_multiple %20, 8 : i32
    %22 = arith.index_cast %21 : i32 to index
    %c0_7 = arith.constant 0 : index
    %23 = vector.load %arg2[%22, %c0_7] : memref<512x512xbf16, #tpu.memory_space<vmem>>, vector<128x512xbf16>
    %cst = arith.constant dense<0.000000e+00> : vector<128x128xf32>
    %24 = tpu.matmul %23, %19, %cst {dimension_numbers = #tpu.dot_dimension_numbers<[1], [0], [0], [1], [0, 0, 1, 1], [], []>} : vector<128x512xbf16>, vector<512x128xbf16>, vector<128x128xf32> -> vector<128x128xf32>
    %25 = arith.truncf %24 : vector<128x128xf32> to vector<128x128xbf16>
    %c0_8 = arith.constant 0 : index
    %c0_9 = arith.constant 0 : index
    %c0_10 = arith.constant 0 : index
    %26 = vector.load %arg5[%c0_8, %c0_9, %c0_10] : memref<1x128x128xbf16, #tpu.memory_space<vmem>>, vector<1x128x128xbf16>
    %27 = vector.shape_cast %26 : vector<1x128x128xbf16> to vector<128x128xbf16>
    %cst_11 = arith.constant dense<0.000000e+00> : vector<128x128xf32>
    %28 = tpu.matmul %25, %27, %cst_11 {dimension_numbers = #tpu.dot_dimension_numbers<[1], [0], [0], [1], [0, 0, 1, 1], [], []>} : vector<128x128xbf16>, vector<128x128xbf16>, vector<128x128xf32> -> vector<128x128xf32>
    %c0_12 = arith.constant 0 : index
    %c0_13 = arith.constant 0 : index
    %c0_14 = arith.constant 0 : index
    %29 = vector.load %arg6[%c0_12, %c0_13, %c0_14] : memref<1x1x128xf32, #tpu.memory_space<vmem>>, vector<1x1x128xf32>
    %30 = vector.shape_cast %29 : vector<1x1x128xf32> to vector<1x128xf32>
    %31 = vector.broadcast %30 : vector<1x128xf32> to vector<128x128xf32>
    %32 = arith.addf %28, %31 : vector<128x128xf32>
    %cst_15 = arith.constant 0.000000e+00 : f32
    %33 = vector.broadcast %cst_15 : f32 to vector<128x128xf32>
    %34 = arith.maximumf %32, %33 : vector<128x128xf32>
    %35 = arith.truncf %34 : vector<128x128xf32> to vector<128x128xbf16>
    %c0_16 = arith.constant 0 : index
    %c0_17 = arith.constant 0 : index
    %c0_18 = arith.constant 0 : index
    %36 = vector.load %arg7[%c0_16, %c0_17, %c0_18] : memref<1x128x128xbf16, #tpu.memory_space<vmem>>, vector<1x128x128xbf16>
    %37 = vector.shape_cast %36 : vector<1x128x128xbf16> to vector<128x128xbf16>
    %cst_19 = arith.constant dense<0.000000e+00> : vector<128x128xf32>
    %38 = tpu.matmul %35, %37, %cst_19 {dimension_numbers = #tpu.dot_dimension_numbers<[1], [0], [0], [1], [0, 0, 1, 1], [], []>} : vector<128x128xbf16>, vector<128x128xbf16>, vector<128x128xf32> -> vector<128x128xf32>
    %c0_20 = arith.constant 0 : index
    %c0_21 = arith.constant 0 : index
    %c0_22 = arith.constant 0 : index
    %39 = vector.load %arg8[%c0_20, %c0_21, %c0_22] : memref<1x1x128xf32, #tpu.memory_space<vmem>>, vector<1x1x128xf32>
    %40 = vector.shape_cast %39 : vector<1x1x128xf32> to vector<1x128xf32>
    %41 = vector.broadcast %40 : vector<1x128xf32> to vector<128x128xf32>
    %42 = arith.addf %38, %41 : vector<128x128xf32>
    %cst_23 = arith.constant 0.000000e+00 : f32
    %43 = vector.broadcast %cst_23 : f32 to vector<128x128xf32>
    %44 = arith.maximumf %42, %43 : vector<128x128xf32>
    %45 = arith.truncf %44 : vector<128x128xf32> to vector<128x128xbf16>
    %c2_i32_24 = arith.constant 2 : i32
    %c0_i32_25 = arith.constant 0 : i32
    %46 = arith.cmpi eq, %c2_i32_24, %c0_i32_25 : i32
    %c1_i32_26 = arith.constant 1 : i32
    %47 = arith.select %46, %c1_i32_26, %c2_i32_24 : i32
    %48 = arith.remsi %arg0, %47 : i32
    %c0_i32_27 = arith.constant 0 : i32
    %49 = arith.cmpi ne, %48, %c0_i32_27 : i32
    %c0_i32_28 = arith.constant 0 : i32
    %50 = arith.cmpi slt, %48, %c0_i32_28 : i32
    %c0_i32_29 = arith.constant 0 : i32
    %51 = arith.cmpi slt, %47, %c0_i32_29 : i32
    %52 = arith.xori %50, %51 : i1
    %53 = arith.andi %52, %49 : i1
    %54 = arith.addi %48, %47 : i32
    %55 = arith.select %53, %54, %48 : i32
    %c512_i32_30 = arith.constant 512 : i32
    %56 = arith.muli %55, %c512_i32_30 : i32
    %c128_i32_31 = arith.constant 128 : i32
    %57 = arith.muli %arg1, %c128_i32_31 : i32
    %58 = arith.addi %56, %57 : i32
    %59 = tpu.assume_multiple %58, 8 : i32
    %60 = arith.index_cast %59 : i32 to index
    %c0_32 = arith.constant 0 : index
    %61 = vector.load %arg10[%60, %c0_32] : memref<1024x128xbf16, #tpu.memory_space<vmem>>, vector<128x128xbf16>
    tpu.vector_store %arg10[%60, %c0_32], %45 {strides = array<i32>} : memref<1024x128xbf16, #tpu.memory_space<vmem>>, vector<128x128xbf16>,
    %c2_i32_33 = arith.constant 2 : i32
    %62 = arith.cmpi eq, %arg0, %c2_i32_33 : i32
    %63 = arith.extui %62 : i1 to i32
    %c0_i32_34 = arith.constant 0 : i32
    %64 = arith.cmpi ne, %63, %c0_i32_34 : i32
    scf.if %64 {
      %c0_35 = arith.constant 0 : index
      %c0_36 = arith.constant 0 : index
      %65 = vector.load %arg9[%c0_35, %c0_36] : memref<8x128xf32, #tpu.memory_space<vmem>>, vector<8x128xf32>
      %c0_37 = arith.constant 0 : index
      %c0_38 = arith.constant 0 : index
      %66 = vector.load %arg4[%c0_37, %c0_38] : memref<8x128xbf16, #tpu.memory_space<vmem>>, vector<8x128xbf16>
      %cst_39 = arith.constant dense<0.000000e+00> : vector<8x128xf32>
      %67 = tpu.matmul %66, %45, %cst_39 {dimension_numbers = #tpu.dot_dimension_numbers<[1], [0], [0], [1], [0, 0, 1, 1], [], []>} : vector<8x128xbf16>, vector<128x128xbf16>, vector<8x128xf32> -> vector<8x128xf32>
      %68 = arith.addf %65, %67 : vector<8x128xf32>
      %c0_40 = arith.constant 0 : index
      %c0_41 = arith.constant 0 : index
      %69 = vector.load %arg9[%c0_40, %c0_41] : memref<8x128xf32, #tpu.memory_space<vmem>>, vector<8x128xf32>
      tpu.vector_store %arg9[%c0_40, %c0_41], %68 {strides = array<i32>} : memref<8x128xf32, #tpu.memory_space<vmem>>, vector<8x128xf32>,
    } else {
    }
    return
  }
  func.func @transform_0(%arg0: i32, %arg1: i32) -> (i32, i32) {
    %c0_i32 = arith.constant 0 : i32
    %c0_i32_0 = arith.constant 0 : i32
    %c0_i32_1 = arith.constant 0 : i32
    return %c0_i32, %c0_i32_0 : i32, i32
  }
  func.func @transform_1(%arg0: i32, %arg1: i32) -> (i32, i32) {
    %c0_i32 = arith.constant 0 : i32
    %c0_i32_0 = arith.constant 0 : i32
    %c0_i32_1 = arith.constant 0 : i32
    return %c0_i32, %c0_i32_0 : i32, i32
  }
  func.func @transform_2(%arg0: i32, %arg1: i32) -> (i32, i32) {
    %c0_i32 = arith.constant 0 : i32
    %c0_i32_0 = arith.constant 0 : i32
    return %c0_i32, %arg1 : i32, i32
  }
  func.func @transform_3(%arg0: i32, %arg1: i32) -> (i32, i32, i32) {
    %c0_i32 = arith.constant 0 : i32
    %c0_i32_0 = arith.constant 0 : i32
    %c0_i32_1 = arith.constant 0 : i32
    return %arg0, %c0_i32, %c0_i32_0 : i32, i32, i32
  }
  func.func @transform_4(%arg0: i32, %arg1: i32) -> (i32, i32, i32) {
    %c0_i32 = arith.constant 0 : i32
    %c0_i32_0 = arith.constant 0 : i32
    %c0_i32_1 = arith.constant 0 : i32
    return %arg0, %c0_i32, %c0_i32_0 : i32, i32, i32
  }
  func.func @transform_5(%arg0: i32, %arg1: i32) -> (i32, i32, i32) {
    %c0_i32 = arith.constant 0 : i32
    %c0_i32_0 = arith.constant 0 : i32
    %c0_i32_1 = arith.constant 0 : i32
    return %arg0, %c0_i32, %c0_i32_0 : i32, i32, i32
  }
  func.func @transform_6(%arg0: i32, %arg1: i32) -> (i32, i32, i32) {
    %c0_i32 = arith.constant 0 : i32
    %c0_i32_0 = arith.constant 0 : i32
    %c0_i32_1 = arith.constant 0 : i32
    return %arg0, %c0_i32, %c0_i32_0 : i32, i32, i32
  }
  func.func @transform_7(%arg0: i32, %arg1: i32) -> (i32, i32) {
    %c0_i32 = arith.constant 0 : i32
    %c0_i32_0 = arith.constant 0 : i32
    %c0_i32_1 = arith.constant 0 : i32
    return %c0_i32, %c0_i32_0 : i32, i32
  }
}

module attributes {stable_mosaic.version = 11 : i64} {
  func.func @_fused_gin_kernel(%arg0: i32, %arg1: i32, %arg2: memref<512x512xbf16, #tpu.memory_space<vmem>>, %arg3: memref<512x128xbf16, #tpu.memory_space<vmem>>, %arg4: memref<8x128xbf16, #tpu.memory_space<vmem>>, %arg5: memref<1x128x128xbf16, #tpu.memory_space<vmem>>, %arg6: memref<1x1x128xf32, #tpu.memory_space<vmem>>, %arg7: memref<1x128x128xbf16, #tpu.memory_space<vmem>>, %arg8: memref<1x1x128xf32, #tpu.memory_space<vmem>>, %arg9: memref<8x128xf32, #tpu.memory_space<vmem>>, %arg10: memref<1024x128xbf16, #tpu.memory_space<vmem>>) attributes {dimension_semantics = [#tpu.dimension_semantics<arbitrary>, #tpu.dimension_semantics<arbitrary>], iteration_bounds = array<i64: 3, 4>, scalar_prefetch = 0 : i64, scratch_operands = 1 : i64, tpu.core_type = #tpu.core_type<tc>, window_params = [{pipeline_mode = #tpu.pipeline_mode<synchronous>, transform_indices = @transform_0, window_bounds = array<i64: 512, 512>}, {pipeline_mode = #tpu.pipeline_mode<synchronous>, transform_indices = @transform_1, window_bounds = array<i64: 512, 128>}, {transform_indices = @transform_2, window_bounds = array<i64: 8, 128>}, {transform_indices = @transform_3, window_bounds = array<i64: 1, 128, 128>}, {transform_indices = @transform_4, window_bounds = array<i64: 1, 1, 128>}, {transform_indices = @transform_5, window_bounds = array<i64: 1, 128, 128>}, {transform_indices = @transform_6, window_bounds = array<i64: 1, 1, 128>}, {pipeline_mode = #tpu.pipeline_mode<synchronous>, transform_indices = @transform_7, window_bounds = array<i64: 8, 128>}]} {
    %c0_i32 = arith.constant 0 : i32
    %0 = arith.cmpi eq, %arg0, %c0_i32 : i32
    %c0_i32_0 = arith.constant 0 : i32
    %1 = arith.cmpi eq, %arg1, %c0_i32_0 : i32
    %2 = arith.andi %0, %1 : i1
    %3 = arith.extui %2 : i1 to i32
    %c0_i32_1 = arith.constant 0 : i32
    %4 = arith.cmpi ne, %3, %c0_i32_1 : i32
    scf.if %4 {
      %cst_35 = arith.constant 0.000000e+00 : f32
      %65 = vector.broadcast %cst_35 : f32 to vector<8x128xf32>
      %c0_36 = arith.constant 0 : index
      %c0_37 = arith.constant 0 : index
      %66 = vector.load %arg9[%c0_36, %c0_37] : memref<8x128xf32, #tpu.memory_space<vmem>>, vector<8x128xf32>
      tpu.vector_store %arg9[%c0_36, %c0_37], %65 {strides = array<i32>} : memref<8x128xf32, #tpu.memory_space<vmem>>, vector<8x128xf32>,
      %c0_38 = arith.constant 0 : index
      %c0_39 = arith.constant 0 : index
      %67 = vector.load %arg3[%c0_38, %c0_39] : memref<512x128xbf16, #tpu.memory_space<vmem>>, vector<512x128xbf16>
      %c512 = arith.constant 512 : index
      %c0_40 = arith.constant 0 : index
      %68 = vector.load %arg10[%c512, %c0_40] : memref<1024x128xbf16, #tpu.memory_space<vmem>>, vector<512x128xbf16>
      tpu.vector_store %arg10[%c512, %c0_40], %67 {strides = array<i32>} : memref<1024x128xbf16, #tpu.memory_space<vmem>>, vector<512x128xbf16>,
    } else {
    }
    %c1_i32 = arith.constant 1 : i32
    %5 = arith.addi %arg0, %c1_i32 : i32
    %c2_i32 = arith.constant 2 : i32
    %c0_i32_2 = arith.constant 0 : i32
    %6 = arith.cmpi eq, %c2_i32, %c0_i32_2 : i32
    %c1_i32_3 = arith.constant 1 : i32
    %7 = arith.select %6, %c1_i32_3, %c2_i32 : i32
    %8 = arith.remsi %5, %7 : i32
    %c0_i32_4 = arith.constant 0 : i32
    %9 = arith.cmpi ne, %8, %c0_i32_4 : i32
    %c0_i32_5 = arith.constant 0 : i32
    %10 = arith.cmpi slt, %8, %c0_i32_5 : i32
    %c0_i32_6 = arith.constant 0 : i32
    %11 = arith.cmpi slt, %7, %c0_i32_6 : i32
    %12 = arith.xori %10, %11 : i1
    %13 = arith.andi %12, %9 : i1
    %14 = arith.addi %8, %7 : i32
    %15 = arith.select %13, %14, %8 : i32
    %c512_i32 = arith.constant 512 : i32
    %16 = arith.muli %15, %c512_i32 : i32
    %17 = tpu.assume_multiple %16, 8 : i32
    %18 = arith.index_cast %17 : i32 to index
    %c0 = arith.constant 0 : index
    %19 = vector.load %arg10[%18, %c0] : memref<1024x128xbf16, #tpu.memory_space<vmem>>, vector<512x128xbf16>
    %c128_i32 = arith.constant 128 : i32
    %20 = arith.muli %arg1, %c128_i32 : i32
    %21 = tpu.assume_multiple %20, 8 : i32
    %22 = arith.index_cast %21 : i32 to index
    %c0_7 = arith.constant 0 : index
    %23 = vector.load %arg2[%22, %c0_7] : memref<512x512xbf16, #tpu.memory_space<vmem>>, vector<128x512xbf16>
    %cst = arith.constant dense<0.000000e+00> : vector<128x128xf32>
    %24 = tpu.matmul %23, %19, %cst {dimension_numbers = #tpu.dot_dimension_numbers<[1], [0], [0], [1], [0, 0, 1, 1], [], []>} : vector<128x512xbf16>, vector<512x128xbf16>, vector<128x128xf32> -> vector<128x128xf32>
    %25 = arith.truncf %24 : vector<128x128xf32> to vector<128x128xbf16>
    %c0_8 = arith.constant 0 : index
    %c0_9 = arith.constant 0 : index
    %c0_10 = arith.constant 0 : index
    %26 = vector.load %arg5[%c0_8, %c0_9, %c0_10] : memref<1x128x128xbf16, #tpu.memory_space<vmem>>, vector<1x128x128xbf16>
    %27 = vector.shape_cast %26 : vector<1x128x128xbf16> to vector<128x128xbf16>
    %cst_11 = arith.constant dense<0.000000e+00> : vector<128x128xf32>
    %28 = tpu.matmul %25, %27, %cst_11 {dimension_numbers = #tpu.dot_dimension_numbers<[1], [0], [0], [1], [0, 0, 1, 1], [], []>} : vector<128x128xbf16>, vector<128x128xbf16>, vector<128x128xf32> -> vector<128x128xf32>
    %c0_12 = arith.constant 0 : index
    %c0_13 = arith.constant 0 : index
    %c0_14 = arith.constant 0 : index
    %29 = vector.load %arg6[%c0_12, %c0_13, %c0_14] : memref<1x1x128xf32, #tpu.memory_space<vmem>>, vector<1x1x128xf32>
    %30 = vector.shape_cast %29 : vector<1x1x128xf32> to vector<1x128xf32>
    %31 = vector.broadcast %30 : vector<1x128xf32> to vector<128x128xf32>
    %32 = arith.addf %28, %31 : vector<128x128xf32>
    %cst_15 = arith.constant 0.000000e+00 : f32
    %33 = vector.broadcast %cst_15 : f32 to vector<128x128xf32>
    %34 = arith.maximumf %32, %33 : vector<128x128xf32>
    %35 = arith.truncf %34 : vector<128x128xf32> to vector<128x128xbf16>
    %c0_16 = arith.constant 0 : index
    %c0_17 = arith.constant 0 : index
    %c0_18 = arith.constant 0 : index
    %36 = vector.load %arg7[%c0_16, %c0_17, %c0_18] : memref<1x128x128xbf16, #tpu.memory_space<vmem>>, vector<1x128x128xbf16>
    %37 = vector.shape_cast %36 : vector<1x128x128xbf16> to vector<128x128xbf16>
    %cst_19 = arith.constant dense<0.000000e+00> : vector<128x128xf32>
    %38 = tpu.matmul %35, %37, %cst_19 {dimension_numbers = #tpu.dot_dimension_numbers<[1], [0], [0], [1], [0, 0, 1, 1], [], []>} : vector<128x128xbf16>, vector<128x128xbf16>, vector<128x128xf32> -> vector<128x128xf32>
    %c0_20 = arith.constant 0 : index
    %c0_21 = arith.constant 0 : index
    %c0_22 = arith.constant 0 : index
    %39 = vector.load %arg8[%c0_20, %c0_21, %c0_22] : memref<1x1x128xf32, #tpu.memory_space<vmem>>, vector<1x1x128xf32>
    %40 = vector.shape_cast %39 : vector<1x1x128xf32> to vector<1x128xf32>
    %41 = vector.broadcast %40 : vector<1x128xf32> to vector<128x128xf32>
    %42 = arith.addf %38, %41 : vector<128x128xf32>
    %cst_23 = arith.constant 0.000000e+00 : f32
    %43 = vector.broadcast %cst_23 : f32 to vector<128x128xf32>
    %44 = arith.maximumf %42, %43 : vector<128x128xf32>
    %45 = arith.truncf %44 : vector<128x128xf32> to vector<128x128xbf16>
    %c2_i32_24 = arith.constant 2 : i32
    %c0_i32_25 = arith.constant 0 : i32
    %46 = arith.cmpi eq, %c2_i32_24, %c0_i32_25 : i32
    %c1_i32_26 = arith.constant 1 : i32
    %47 = arith.select %46, %c1_i32_26, %c2_i32_24 : i32
    %48 = arith.remsi %arg0, %47 : i32
    %c0_i32_27 = arith.constant 0 : i32
    %49 = arith.cmpi ne, %48, %c0_i32_27 : i32
    %c0_i32_28 = arith.constant 0 : i32
    %50 = arith.cmpi slt, %48, %c0_i32_28 : i32
    %c0_i32_29 = arith.constant 0 : i32
    %51 = arith.cmpi slt, %47, %c0_i32_29 : i32
    %52 = arith.xori %50, %51 : i1
    %53 = arith.andi %52, %49 : i1
    %54 = arith.addi %48, %47 : i32
    %55 = arith.select %53, %54, %48 : i32
    %c512_i32_30 = arith.constant 512 : i32
    %56 = arith.muli %55, %c512_i32_30 : i32
    %c128_i32_31 = arith.constant 128 : i32
    %57 = arith.muli %arg1, %c128_i32_31 : i32
    %58 = arith.addi %56, %57 : i32
    %59 = tpu.assume_multiple %58, 8 : i32
    %60 = arith.index_cast %59 : i32 to index
    %c0_32 = arith.constant 0 : index
    %61 = vector.load %arg10[%60, %c0_32] : memref<1024x128xbf16, #tpu.memory_space<vmem>>, vector<128x128xbf16>
    tpu.vector_store %arg10[%60, %c0_32], %45 {strides = array<i32>} : memref<1024x128xbf16, #tpu.memory_space<vmem>>, vector<128x128xbf16>,
    %c2_i32_33 = arith.constant 2 : i32
    %62 = arith.cmpi eq, %arg0, %c2_i32_33 : i32
    %63 = arith.extui %62 : i1 to i32
    %c0_i32_34 = arith.constant 0 : i32
    %64 = arith.cmpi ne, %63, %c0_i32_34 : i32
    scf.if %64 {
      %c0_35 = arith.constant 0 : index
      %c0_36 = arith.constant 0 : index
      %65 = vector.load %arg9[%c0_35, %c0_36] : memref<8x128xf32, #tpu.memory_space<vmem>>, vector<8x128xf32>
      %c0_37 = arith.constant 0 : index
      %c0_38 = arith.constant 0 : index
      %66 = vector.load %arg4[%c0_37, %c0_38] : memref<8x128xbf16, #tpu.memory_space<vmem>>, vector<8x128xbf16>
      %cst_39 = arith.constant dense<0.000000e+00> : vector<8x128xf32>
      %67 = tpu.matmul %66, %45, %cst_39 {dimension_numbers = #tpu.dot_dimension_numbers<[1], [0], [0], [1], [0, 0, 1, 1], [], []>} : vector<8x128xbf16>, vector<128x128xbf16>, vector<8x128xf32> -> vector<8x128xf32>
      %68 = arith.addf %65, %67 : vector<8x128xf32>
      %c0_40 = arith.constant 0 : index
      %c0_41 = arith.constant 0 : index
      %69 = vector.load %arg9[%c0_40, %c0_41] : memref<8x128xf32, #tpu.memory_space<vmem>>, vector<8x128xf32>
      tpu.vector_store %arg9[%c0_40, %c0_41], %68 {strides = array<i32>} : memref<8x128xf32, #tpu.memory_space<vmem>>, vector<8x128xf32>,
    } else {
    }
    return
  }
  func.func @transform_0(%arg0: i32, %arg1: i32) -> (i32, i32) {
    %c0_i32 = arith.constant 0 : i32
    %c0_i32_0 = arith.constant 0 : i32
    %c0_i32_1 = arith.constant 0 : i32
    return %c0_i32, %c0_i32_0 : i32, i32
  }
  func.func @transform_1(%arg0: i32, %arg1: i32) -> (i32, i32) {
    %c0_i32 = arith.constant 0 : i32
    %c0_i32_0 = arith.constant 0 : i32
    %c0_i32_1 = arith.constant 0 : i32
    return %c0_i32, %c0_i32_0 : i32, i32
  }
  func.func @transform_2(%arg0: i32, %arg1: i32) -> (i32, i32) {
    %c0_i32 = arith.constant 0 : i32
    %c0_i32_0 = arith.constant 0 : i32
    return %c0_i32, %arg1 : i32, i32
  }
  func.func @transform_3(%arg0: i32, %arg1: i32) -> (i32, i32, i32) {
    %c0_i32 = arith.constant 0 : i32
    %c0_i32_0 = arith.constant 0 : i32
    %c0_i32_1 = arith.constant 0 : i32
    return %arg0, %c0_i32, %c0_i32_0 : i32, i32, i32
  }
  func.func @transform_4(%arg0: i32, %arg1: i32) -> (i32, i32, i32) {
    %c0_i32 = arith.constant 0 : i32
    %c0_i32_0 = arith.constant 0 : i32
    %c0_i32_1 = arith.constant 0 : i32
    return %arg0, %c0_i32, %c0_i32_0 : i32, i32, i32
  }
  func.func @transform_5(%arg0: i32, %arg1: i32) -> (i32, i32, i32) {
    %c0_i32 = arith.constant 0 : i32
    %c0_i32_0 = arith.constant 0 : i32
    %c0_i32_1 = arith.constant 0 : i32
    return %arg0, %c0_i32, %c0_i32_0 : i32, i32, i32
  }
  func.func @transform_6(%arg0: i32, %arg1: i32) -> (i32, i32, i32) {
    %c0_i32 = arith.constant 0 : i32
    %c0_i32_0 = arith.constant 0 : i32
    %c0_i32_1 = arith.constant 0 : i32
    return %arg0, %c0_i32, %c0_i32_0 : i32, i32, i32
  }
  func.func @transform_7(%arg0: i32, %arg1: i32) -> (i32, i32) {
    %c0_i32 = arith.constant 0 : i32
    %c0_i32_0 = arith.constant 0 : i32
    %c0_i32_1 = arith.constant 0 : i32
    return %c0_i32, %c0_i32_0 : i32, i32
  }
}

</mosaic_0001>

<llo_original>
// kernel: gin_net_forward.1
$region0: #{gin_net_forward.1}
  #allocation0 [shape = 'u32[]', space=smem, size = 0x4, offset = 0x4, fixed_abs, tag = 'smem constant byte address 0x4 - core index']
  #allocation1 [shape = 'u32[72,128]{1,0:T(1,128)}', space=vmem, size = 0x9000, scoped, tag = 'internal scratch']
  #allocation2 [shape = 'bf16[1024,128]{1,0:T(8,128)(2,1)}', space=vmem, size = 0x40000, scoped, tag = 'scratch operand']
  %s0 = inlined_call_operand.vmem [shape: bf16[512,512], index: 0, kind: input, shape index: {}]
  %s1 = inlined_call_operand.vmem [shape: bf16[512,128], index: 1, kind: input, shape index: {}]
  %s2 = inlined_call_operand.vmem [shape: bf16[8,512], index: 2, kind: input, shape index: {}]
  %s3 = inlined_call_operand.vmem [shape: bf16[3,128,128], index: 3, kind: input, shape index: {}]
  %s4 = inlined_call_operand.vmem [shape: f32[3,1,128], index: 4, kind: input, shape index: {}]
  %s5 = inlined_call_operand.vmem [shape: bf16[3,128,128], index: 5, kind: input, shape index: {}]
  %s6 = inlined_call_operand.vmem [shape: f32[3,1,128], index: 6, kind: input, shape index: {}]
  %s7 = inlined_call_operand.vmem [shape: f32[8,128], index: 7, kind: output, shape index: {}]
  %s8 = sld [smem:[#allocation0]]
  $region69: #{gin_net_forward.1} parent=0
    _
  %s10 = ssub.s32 1, %s8
  %s11 = scalar_select 0, %s10, %s8
  loop: start=0, step=1, limit=14
  $region2: #{gin_net_forward.1} parent=0 // loop_pre_header
    _
  $region3: #{gin_net_forward.1} parent=0 // loop_header
    %s13 = sphi 0, %s17
    %p14 = scmp.ge.s32.totalorder %s13, 14
    %s20 = sphi 0, %s32
    %s21 = sphi 0, %s28
    %s22 = sphi 0, %s20
    %s23 = sphi 0, %s21
    %s24 = sphi 0, %s22
    %s25 = sphi 0, %s23
    %s33 = sphi 0, %s33
    %s35 = sphi 0, %s33
    %s36 = sphi 0, %s35
    %s50 = sphi 0, %s36
    %s54 = sphi 0, %s54
    %s56 = sphi 0, %s54
    %s57 = sphi 0, %s56
    %s71 = sphi 0, %s57
    %s77 = sphi 0, %s79
    %s80 = sphi 0, %s77
    %s81 = sphi 0, %s80
    %s97 = sphi 0, %s81
    %s103 = sphi 0, %s105
    %s106 = sphi 0, %s103
    %s107 = sphi 0, %s106
    %s123 = sphi 0, %s107
    %s129 = sphi 0, %s131
    %s132 = sphi 0, %s129
    %s133 = sphi 0, %s132
    %s149 = sphi 0, %s133
    %s155 = sphi 0, %s157
    %s158 = sphi 0, %s155
    %s159 = sphi 0, %s158
    %s175 = sphi 0, %s159
    %s181 = sphi 0, %s183
    %s184 = sphi 0, %s181
    %s185 = sphi 0, %s184
    %s201 = sphi 0, %s185
    %s205 = sphi 0, %s205
    %s207 = sphi 0, %s205
    %s208 = sphi 0, %s207
    %s222 = sphi 0, %s208
  $region4: #{gin_net_forward.1} parent=0 // loop_header_branch
    %16 = sbr.rel (%p14) target = $region8
  $region5: #{gin_net_forward.1} parent=0 // loop_body
    %s18 = ssub.s32 %s13, 1
    %s19 = ssub.s32 %s13, 2
    %s26 = sadd.s32 1, %s21
    %p27 = scmp.ge.s32.totalorder %s26, 4
    %s28 = scalar_select %p27, 0, %s26
    %s29 = sadd.s32 1, %s20
    %s30 = scalar_select %p27, %s29, %s20
    %p31 = scmp.ge.s32.totalorder %s30, 3
    %s32 = scalar_select %p31, 0, %s30
    %s34 = sadd.s32 %s33, 1
    %p37 = scmp.eq.s32.totalorder %s13, 11
    %p38 = scmp.ne.s32.totalorder %s33, %s35
    %p39 = scmp.eq.s32.totalorder %s13, 0
    %p40 = por %p38, %p39
    %p41 = scmp.ne.s32.totalorder %s33, %s35
    %p42 = scmp.eq.s32.totalorder %s18, 11
    %p43 = por %p41, %p42
    %p44 = scmp.ne.s32.totalorder %s35, %s36
    %p45 = scmp.eq.s32.totalorder %s18, 0
    %p46 = por %p44, %p45
    %p47 = scmp.ne.s32.totalorder %s35, %s36
    %p48 = scmp.eq.s32.totalorder %s19, 11
    %p49 = por %p47, %p48
    %p51 = scmp.ne.s32.totalorder %s36, %s50
    %p52 = scmp.eq.s32.totalorder %s19, 0
    %p53 = por %p51, %p52
    %s55 = sadd.s32 %s54, 1
    %p58 = scmp.eq.s32.totalorder %s13, 11
    %p59 = scmp.ne.s32.totalorder %s54, %s56
    %p60 = scmp.eq.s32.totalorder %s13, 0
    %p61 = por %p59, %p60
    %p62 = scmp.ne.s32.totalorder %s54, %s56
    %p63 = scmp.eq.s32.totalorder %s18, 11
    %p64 = por %p62, %p63
    %p65 = scmp.ne.s32.totalorder %s56, %s57
    %p66 = scmp.eq.s32.totalorder %s18, 0
    %p67 = por %p65, %p66
    %p68 = scmp.ne.s32.totalorder %s56, %s57
    %p69 = scmp.eq.s32.totalorder %s19, 11
    %p70 = por %p68, %p69
    %p72 = scmp.ne.s32.totalorder %s57, %s71
    %p73 = scmp.eq.s32.totalorder %s19, 0
    %p74 = por %p72, %p73
    %s75 = ssub.s32 %s21, %s28
    %p76 = scmp.eq.s32.totalorder %s75, 0
    %s78 = sadd.s32 %s77, 1
    %s79 = scalar_select %p76, %s77, %s78
    %p82 = pneg %p76
    %p83 = scmp.eq.s32.totalorder %s13, 11
    %p84 = por %p82, %p83
    %p85 = scmp.ne.s32.totalorder %s77, %s80
    %p86 = scmp.eq.s32.totalorder %s13, 0
    %p87 = por %p85, %p86
    %p88 = scmp.ne.s32.totalorder %s77, %s80
    %p89 = scmp.eq.s32.totalorder %s18, 11
    %p90 = por %p88, %p89
    %p91 = scmp.ne.s32.totalorder %s80, %s81
    %p92 = scmp.eq.s32.totalorder %s18, 0
    %p93 = por %p91, %p92
    %p94 = scmp.ne.s32.totalorder %s80, %s81
    %p95 = scmp.eq.s32.totalorder %s19, 11
    %p96 = por %p94, %p95
    %p98 = scmp.ne.s32.totalorder %s81, %s97
    %p99 = scmp.eq.s32.totalorder %s19, 0
    %p100 = por %p98, %p99
    %s101 = ssub.s32 %s20, %s32
    %p102 = scmp.eq.s32.totalorder %s101, 0
    %s104 = sadd.s32 %s103, 1
    %s105 = scalar_select %p102, %s103, %s104
    %p108 = pneg %p102
    %p109 = scmp.eq.s32.totalorder %s13, 11
    %p110 = por %p108, %p109
    %p111 = scmp.ne.s32.totalorder %s103, %s106
    %p112 = scmp.eq.s32.totalorder %s13, 0
    %p113 = por %p111, %p112
    %p114 = scmp.ne.s32.totalorder %s103, %s106
    %p115 = scmp.eq.s32.totalorder %s18, 11
    %p116 = por %p114, %p115
    %p117 = scmp.ne.s32.totalorder %s106, %s107
    %p118 = scmp.eq.s32.totalorder %s18, 0
    %p119 = por %p117, %p118
    %p120 = scmp.ne.s32.totalorder %s106, %s107
    %p121 = scmp.eq.s32.totalorder %s19, 11
    %p122 = por %p120, %p121
    %p124 = scmp.ne.s32.totalorder %s107, %s123
    %p125 = scmp.eq.s32.totalorder %s19, 0
    %p126 = por %p124, %p125
    %s127 = ssub.s32 %s20, %s32
    %p128 = scmp.eq.s32.totalorder %s127, 0
    %s130 = sadd.s32 %s129, 1
    %s131 = scalar_select %p128, %s129, %s130
    %p134 = pneg %p128
    %p135 = scmp.eq.s32.totalorder %s13, 11
    %p136 = por %p134, %p135
    %p137 = scmp.ne.s32.totalorder %s129, %s132
    %p138 = scmp.eq.s32.totalorder %s13, 0
    %p139 = por %p137, %p138
    %p140 = scmp.ne.s32.totalorder %s129, %s132
    %p141 = scmp.eq.s32.totalorder %s18, 11
    %p142 = por %p140, %p141
    %p143 = scmp.ne.s32.totalorder %s132, %s133
    %p144 = scmp.eq.s32.totalorder %s18, 0
    %p145 = por %p143, %p144
    %p146 = scmp.ne.s32.totalorder %s132, %s133
    %p147 = scmp.eq.s32.totalorder %s19, 11
    %p148 = por %p146, %p147
    %p150 = scmp.ne.s32.totalorder %s133, %s149
    %p151 = scmp.eq.s32.totalorder %s19, 0
    %p152 = por %p150, %p151
    %s153 = ssub.s32 %s20, %s32
    %p154 = scmp.eq.s32.totalorder %s153, 0
    %s156 = sadd.s32 %s155, 1
    %s157 = scalar_select %p154, %s155, %s156
    %p160 = pneg %p154
    %p161 = scmp.eq.s32.totalorder %s13, 11
    %p162 = por %p160, %p161
    %p163 = scmp.ne.s32.totalorder %s155, %s158
    %p164 = scmp.eq.s32.totalorder %s13, 0
    %p165 = por %p163, %p164
    %p166 = scmp.ne.s32.totalorder %s155, %s158
    %p167 = scmp.eq.s32.totalorder %s18, 11
    %p168 = por %p166, %p167
    %p169 = scmp.ne.s32.totalorder %s158, %s159
    %p170 = scmp.eq.s32.totalorder %s18, 0
    %p171 = por %p169, %p170
    %p172 = scmp.ne.s32.totalorder %s158, %s159
    %p173 = scmp.eq.s32.totalorder %s19, 11
    %p174 = por %p172, %p173
    %p176 = scmp.ne.s32.totalorder %s159, %s175
    %p177 = scmp.eq.s32.totalorder %s19, 0
    %p178 = por %p176, %p177
    %s179 = ssub.s32 %s20, %s32
    %p180 = scmp.eq.s32.totalorder %s179, 0
    %s182 = sadd.s32 %s181, 1
    %s183 = scalar_select %p180, %s181, %s182
    %p186 = pneg %p180
    %p187 = scmp.eq.s32.totalorder %s13, 11
    %p188 = por %p186, %p187
    %p189 = scmp.ne.s32.totalorder %s181, %s184
    %p190 = scmp.eq.s32.totalorder %s13, 0
    %p191 = por %p189, %p190
    %p192 = scmp.ne.s32.totalorder %s181, %s184
    %p193 = scmp.eq.s32.totalorder %s18, 11
    %p194 = por %p192, %p193
    %p195 = scmp.ne.s32.totalorder %s184, %s185
    %p196 = scmp.eq.s32.totalorder %s18, 0
    %p197 = por %p195, %p196
    %p198 = scmp.ne.s32.totalorder %s184, %s185
    %p199 = scmp.eq.s32.totalorder %s19, 11
    %p200 = por %p198, %p199
    %p202 = scmp.ne.s32.totalorder %s185, %s201
    %p203 = scmp.eq.s32.totalorder %s19, 0
    %p204 = por %p202, %p203
    %s206 = sadd.s32 %s205, 1
    %p209 = scmp.eq.s32.totalorder %s13, 11
    %p210 = scmp.ne.s32.totalorder %s205, %s207
    %p211 = scmp.eq.s32.totalorder %s13, 0
    %p212 = por %p210, %p211
    %p213 = scmp.ne.s32.totalorder %s205, %s207
    %p214 = scmp.eq.s32.totalorder %s18, 11
    %p215 = por %p213, %p214
    %p216 = scmp.ne.s32.totalorder %s207, %s208
    %p217 = scmp.eq.s32.totalorder %s18, 0
    %p218 = por %p216, %p217
    %p219 = scmp.ne.s32.totalorder %s207, %s208
    %p220 = scmp.eq.s32.totalorder %s19, 11
    %p221 = por %p219, %p220
    %p223 = scmp.ne.s32.totalorder %s208, %s222
    %p224 = scmp.eq.s32.totalorder %s19, 0
    %p225 = por %p223, %p224
    %p226 = scmp.le.s32.totalorder 1, %s13
    %p227 = scmp.lt.s32.totalorder %s13, 13
    %p228 = pnand %p226, %p227
    %p229 = pneg %p228
    // Predicated region
    $region9: #{gin_net_forward.1} parent=5 // pred_check
      _
    $region10: #{gin_net_forward.1} parent=5 // pred_check_branch
      %231 = sbr.rel (%p228) target = $region12
    $region11: #{gin_net_forward.1} parent=5 // pred_region
      %s232 = ssub.s32 %s13, 1
      // Predicated region
      $region13: #{gin_net_forward.1} parent=11 // pred_check
        %p233 = pneg %p46
      $region14: #{gin_net_forward.1} parent=11 // pred_check_branch
        %235 = sbr.rel (%p233) target = $region16
      $region15: #{gin_net_forward.1} parent=11 // pred_region
        _
      $region16: #{gin_net_forward.1} parent=11 // pred_fallthru
        _
      // Predicated region
      $region17: #{gin_net_forward.1} parent=11 // pred_check
        %p236 = pneg %p67
      $region18: #{gin_net_forward.1} parent=11 // pred_check_branch
        %238 = sbr.rel (%p236) target = $region20
      $region19: #{gin_net_forward.1} parent=11 // pred_region
        _
      $region20: #{gin_net_forward.1} parent=11 // pred_fallthru
        _
    $region12: #{gin_net_forward.1} parent=5 // pred_fallthru
      _
    %p239 = scmp.lt.s32.totalorder %s13, 12
    // Predicated region
    $region21: #{gin_net_forward.1} parent=5 // pred_check
      %p240 = pneg %p239
    $region22: #{gin_net_forward.1} parent=5 // pred_check_branch
      %242 = sbr.rel (%p240) target = $region24
    $region23: #{gin_net_forward.1} parent=5 // pred_region
      // Predicated region
      $region25: #{gin_net_forward.1} parent=23 // pred_check
        %p243 = pneg %p87
      $region26: #{gin_net_forward.1} parent=23 // pred_check_branch
        %245 = sbr.rel (%p243) target = $region28
      $region27: #{gin_net_forward.1} parent=23 // pred_region
        %p246 = scmp.lt.s32.totalorder %s21, 3
        %s247 = scalar_select %p246, %s21, 3
        %s248 = smul.addr %s247, 4
        %s249 = scalar_lea.vmem %s2, %s248
      $region28: #{gin_net_forward.1} parent=23 // pred_fallthru
        _
      // Predicated region
      $region29: #{gin_net_forward.1} parent=23 // pred_check
        %p250 = pneg %p113
      $region30: #{gin_net_forward.1} parent=23 // pred_check_branch
        %252 = sbr.rel (%p250) target = $region32
      $region31: #{gin_net_forward.1} parent=23 // pred_region
        %p253 = scmp.lt.s32.totalorder %s20, 2
        %s254 = scalar_select %p253, %s20, 2
        %s255 = smul.addr %s254, 16
        %s256 = smul.addr %s255, 4
        %s257 = scalar_lea.vmem %s3, %s256
      $region32: #{gin_net_forward.1} parent=23 // pred_fallthru
        _
      // Predicated region
      $region33: #{gin_net_forward.1} parent=23 // pred_check
        %p258 = pneg %p139
      $region34: #{gin_net_forward.1} parent=23 // pred_check_branch
        %260 = sbr.rel (%p258) target = $region36
      $region35: #{gin_net_forward.1} parent=23 // pred_region
        %p261 = scmp.lt.s32.totalorder %s20, 2
        %s262 = scalar_select %p261, %s20, 2
        %s263 = scalar_lea.vmem %s4, %s262
      $region36: #{gin_net_forward.1} parent=23 // pred_fallthru
        _
      // Predicated region
      $region37: #{gin_net_forward.1} parent=23 // pred_check
        %p264 = pneg %p165
      $region38: #{gin_net_forward.1} parent=23 // pred_check_branch
        %266 = sbr.rel (%p264) target = $region40
      $region39: #{gin_net_forward.1} parent=23 // pred_region
        %p267 = scmp.lt.s32.totalorder %s20, 2
        %s268 = scalar_select %p267, %s20, 2
        %s269 = smul.addr %s268, 16
        %s270 = smul.addr %s269, 4
        %s271 = scalar_lea.vmem %s5, %s270
      $region40: #{gin_net_forward.1} parent=23 // pred_fallthru
        _
      // Predicated region
      $region41: #{gin_net_forward.1} parent=23 // pred_check
        %p272 = pneg %p191
      $region42: #{gin_net_forward.1} parent=23 // pred_check_branch
        %274 = sbr.rel (%p272) target = $region44
      $region43: #{gin_net_forward.1} parent=23 // pred_region
        %p275 = scmp.lt.s32.totalorder %s20, 2
        %s276 = scalar_select %p275, %s20, 2
        %s277 = scalar_lea.vmem %s6, %s276
      $region44: #{gin_net_forward.1} parent=23 // pred_fallthru
        _
    $region24: #{gin_net_forward.1} parent=5 // pred_fallthru
      _
    %p278 = scmp.le.s32.totalorder 1, %s13
    %p279 = scmp.lt.s32.totalorder %s13, 13
    %p280 = pnand %p278, %p279
    %p281 = pneg %p280
    // Predicated region
    $region45: #{gin_net_forward.1} parent=5 // pred_check
      _
    $region46: #{gin_net_forward.1} parent=5 // pred_check_branch
      %283 = sbr.rel (%p280) target = $region48
    $region47: #{gin_net_forward.1} parent=5 // pred_region
      %s284 = ssub.s32 %s13, 1
      %p285 = pneg %p46
      %p286 = pneg %p43
      %p287 = pneg %p67
      %p288 = pneg %p64
      %p289 = scmp.lt.s32.totalorder %s23, 3
      %s290 = scalar_select %p289, %s23, 3
      %s291 = smul.addr %s290, 4
      %s292 = scalar_lea.vmem %s2, %s291
      %p293 = pneg %p93
      %p294 = pneg %p90
      %p295 = scmp.lt.s32.totalorder %s22, 2
      %s296 = scalar_select %p295, %s22, 2
      %s297 = smul.addr %s296, 16
      %s298 = smul.addr %s297, 4
      %s299 = scalar_lea.vmem %s3, %s298
      %p300 = pneg %p119
      %p301 = pneg %p116
      %p302 = scmp.lt.s32.totalorder %s22, 2
      %s303 = scalar_select %p302, %s22, 2
      %s304 = scalar_lea.vmem %s4, %s303
      %p305 = pneg %p145
      %p306 = pneg %p142
      %p307 = scmp.lt.s32.totalorder %s22, 2
      %s308 = scalar_select %p307, %s22, 2
      %s309 = smul.addr %s308, 16
      %s310 = smul.addr %s309, 4
      %s311 = scalar_lea.vmem %s5, %s310
      %p312 = pneg %p171
      %p313 = pneg %p168
      %p314 = scmp.lt.s32.totalorder %s22, 2
      %s315 = scalar_select %p314, %s22, 2
      %s316 = scalar_lea.vmem %s6, %s315
      %p317 = pneg %p197
      %p318 = pneg %p194
      %p319 = pneg %p218
      %p320 = pneg %p215
      %p321 = scmp.lt.s32.totalorder %s23, 3
      %s322 = scalar_select %p321, %s23, 3
      %s323 = smul.addr %s322, 4
      %s324 = scalar_lea.vmem %s2, %s323
      %p325 = scmp.lt.s32.totalorder %s22, 2
      %s326 = scalar_select %p325, %s22, 2
      %s327 = smul.addr %s326, 16
      %s328 = smul.addr %s327, 4
      %s329 = scalar_lea.vmem %s3, %s328
      %p330 = scmp.lt.s32.totalorder %s22, 2
      %s331 = scalar_select %p330, %s22, 2
      %s332 = scalar_lea.vmem %s4, %s331
      %p333 = scmp.lt.s32.totalorder %s22, 2
      %s334 = scalar_select %p333, %s22, 2
      %s335 = smul.addr %s334, 16
      %s336 = smul.addr %s335, 4
      %s337 = scalar_lea.vmem %s5, %s336
      %p338 = scmp.lt.s32.totalorder %s22, 2
      %s339 = scalar_select %p338, %s22, 2
      %s340 = scalar_lea.vmem %s6, %s339
      %p341 = scmp.eq.s32.totalorder %s22, 0
      %p342 = scmp.eq.s32.totalorder %s23, 0
      %p343 = pnand %p341, %p342
      %p344 = pneg %p343
      // Predicated region
      $region49: #{gin_net_forward.1} parent=47 // pred_check
        _
      $region50: #{gin_net_forward.1} parent=47 // pred_check_branch
        %346 = sbr.rel (%p343) target = $region52
      $region51: #{gin_net_forward.1} parent=47 // pred_region
        %347 = vst [vmem:[%s7] sm:$0xff] 0.0
        %v348 = vld [vmem:[%s1] sm:$0xf]
        %v349 = vld [vmem:[%s1 + $0x4] sm:$0xf]
        %v350 = vld [vmem:[%s1 + $0x8] sm:$0xf]
        %v351 = vld [vmem:[%s1 + $0xc] sm:$0xf]
        %v352 = vld [vmem:[%s1 + $0x10] sm:$0xf]
        %v353 = vld [vmem:[%s1 + $0x14] sm:$0xf]
        %v354 = vld [vmem:[%s1 + $0x18] sm:$0xf]
        %v355 = vld [vmem:[%s1 + $0x1c] sm:$0xf]
        %v356 = vld [vmem:[%s1 + $0x20] sm:$0xf]
        %v357 = vld [vmem:[%s1 + $0x24] sm:$0xf]
        %v358 = vld [vmem:[%s1 + $0x28] sm:$0xf]
        %v359 = vld [vmem:[%s1 + $0x2c] sm:$0xf]
        %v360 = vld [vmem:[%s1 + $0x30] sm:$0xf]
        %v361 = vld [vmem:[%s1 + $0x34] sm:$0xf]
        %v362 = vld [vmem:[%s1 + $0x38] sm:$0xf]
        %v363 = vld [vmem:[%s1 + $0x3c] sm:$0xf]
        %v364 = vld [vmem:[%s1 + $0x40] sm:$0xf]
        %v365 = vld [vmem:[%s1 + $0x44] sm:$0xf]
        %v366 = vld [vmem:[%s1 + $0x48] sm:$0xf]
        %v367 = vld [vmem:[%s1 + $0x4c] sm:$0xf]
        %v368 = vld [vmem:[%s1 + $0x50] sm:$0xf]
        %v369 = vld [vmem:[%s1 + $0x54] sm:$0xf]
        %v370 = vld [vmem:[%s1 + $0x58] sm:$0xf]
        %v371 = vld [vmem:[%s1 + $0x5c] sm:$0xf]
        %v372 = vld [vmem:[%s1 + $0x60] sm:$0xf]
        %v373 = vld [vmem:[%s1 + $0x64] sm:$0xf]
        %v374 = vld [vmem:[%s1 + $0x68] sm:$0xf]
        %v375 = vld [vmem:[%s1 + $0x6c] sm:$0xf]
        %v376 = vld [vmem:[%s1 + $0x70] sm:$0xf]
        %v377 = vld [vmem:[%s1 + $0x74] sm:$0xf]
        %v378 = vld [vmem:[%s1 + $0x78] sm:$0xf]
        %v379 = vld [vmem:[%s1 + $0x7c] sm:$0xf]
        %v380 = vld [vmem:[%s1 + $0x80] sm:$0xf]
        %v381 = vld [vmem:[%s1 + $0x84] sm:$0xf]
        %v382 = vld [vmem:[%s1 + $0x88] sm:$0xf]
        %v383 = vld [vmem:[%s1 + $0x8c] sm:$0xf]
        %v384 = vld [vmem:[%s1 + $0x90] sm:$0xf]
        %v385 = vld [vmem:[%s1 + $0x94] sm:$0xf]
        %v386 = vld [vmem:[%s1 + $0x98] sm:$0xf]
        %v387 = vld [vmem:[%s1 + $0x9c] sm:$0xf]
        %v388 = vld [vmem:[%s1 + $0xa0] sm:$0xf]
        %v389 = vld [vmem:[%s1 + $0xa4] sm:$0xf]
        %v390 = vld [vmem:[%s1 + $0xa8] sm:$0xf]
        %v391 = vld [vmem:[%s1 + $0xac] sm:$0xf]
        %v392 = vld [vmem:[%s1 + $0xb0] sm:$0xf]
        %v393 = vld [vmem:[%s1 + $0xb4] sm:$0xf]
        %v394 = vld [vmem:[%s1 + $0xb8] sm:$0xf]
        %v395 = vld [vmem:[%s1 + $0xbc] sm:$0xf]
        %v396 = vld [vmem:[%s1 + $0xc0] sm:$0xf]
        %v397 = vld [vmem:[%s1 + $0xc4] sm:$0xf]
        %v398 = vld [vmem:[%s1 + $0xc8] sm:$0xf]
        %v399 = vld [vmem:[%s1 + $0xcc] sm:$0xf]
        %v400 = vld [vmem:[%s1 + $0xd0] sm:$0xf]
        %v401 = vld [vmem:[%s1 + $0xd4] sm:$0xf]
        %v402 = vld [vmem:[%s1 + $0xd8] sm:$0xf]
        %v403 = vld [vmem:[%s1 + $0xdc] sm:$0xf]
        %v404 = vld [vmem:[%s1 + $0xe0] sm:$0xf]
        %v405 = vld [vmem:[%s1 + $0xe4] sm:$0xf]
        %v406 = vld [vmem:[%s1 + $0xe8] sm:$0xf]
        %v407 = vld [vmem:[%s1 + $0xec] sm:$0xf]
        %v408 = vld [vmem:[%s1 + $0xf0] sm:$0xf]
        %v409 = vld [vmem:[%s1 + $0xf4] sm:$0xf]
        %v410 = vld [vmem:[%s1 + $0xf8] sm:$0xf]
        %v411 = vld [vmem:[%s1 + $0xfc] sm:$0xf]
        %412 = vst [vmem:[#allocation2 + $0x100] sm:$0xf] %v348
        %413 = vst [vmem:[#allocation2 + $0x104] sm:$0xf] %v349
        %414 = vst [vmem:[#allocation2 + $0x108] sm:$0xf] %v350
        %415 = vst [vmem:[#allocation2 + $0x10c] sm:$0xf] %v351
        %416 = vst [vmem:[#allocation2 + $0x110] sm:$0xf] %v352
        %417 = vst [vmem:[#allocation2 + $0x114] sm:$0xf] %v353
        %418 = vst [vmem:[#allocation2 + $0x118] sm:$0xf] %v354
        %419 = vst [vmem:[#allocation2 + $0x11c] sm:$0xf] %v355
        %420 = vst [vmem:[#allocation2 + $0x120] sm:$0xf] %v356
        %421 = vst [vmem:[#allocation2 + $0x124] sm:$0xf] %v357
        %422 = vst [vmem:[#allocation2 + $0x128] sm:$0xf] %v358
        %423 = vst [vmem:[#allocation2 + $0x12c] sm:$0xf] %v359
        %424 = vst [vmem:[#allocation2 + $0x130] sm:$0xf] %v360
        %425 = vst [vmem:[#allocation2 + $0x134] sm:$0xf] %v361
        %426 = vst [vmem:[#allocation2 + $0x138] sm:$0xf] %v362
        %427 = vst [vmem:[#allocation2 + $0x13c] sm:$0xf] %v363
        %428 = vst [vmem:[#allocation2 + $0x140] sm:$0xf] %v364
        %429 = vst [vmem:[#allocation2 + $0x144] sm:$0xf] %v365
        %430 = vst [vmem:[#allocation2 + $0x148] sm:$0xf] %v366
        %431 = vst [vmem:[#allocation2 + $0x14c] sm:$0xf] %v367
        %432 = vst [vmem:[#allocation2 + $0x150] sm:$0xf] %v368
        %433 = vst [vmem:[#allocation2 + $0x154] sm:$0xf] %v369
        %434 = vst [vmem:[#allocation2 + $0x158] sm:$0xf] %v370
        %435 = vst [vmem:[#allocation2 + $0x15c] sm:$0xf] %v371
        %436 = vst [vmem:[#allocation2 + $0x160] sm:$0xf] %v372
        %437 = vst [vmem:[#allocation2 + $0x164] sm:$0xf] %v373
        %438 = vst [vmem:[#allocation2 + $0x168] sm:$0xf] %v374
        %439 = vst [vmem:[#allocation2 + $0x16c] sm:$0xf] %v375
        %440 = vst [vmem:[#allocation2 + $0x170] sm:$0xf] %v376
        %441 = vst [vmem:[#allocation2 + $0x174] sm:$0xf] %v377
        %442 = vst [vmem:[#allocation2 + $0x178] sm:$0xf] %v378
        %443 = vst [vmem:[#allocation2 + $0x17c] sm:$0xf] %v379
        %444 = vst [vmem:[#allocation2 + $0x180] sm:$0xf] %v380
        %445 = vst [vmem:[#allocation2 + $0x184] sm:$0xf] %v381
        %446 = vst [vmem:[#allocation2 + $0x188] sm:$0xf] %v382
        %447 = vst [vmem:[#allocation2 + $0x18c] sm:$0xf] %v383
        %448 = vst [vmem:[#allocation2 + $0x190] sm:$0xf] %v384
        %449 = vst [vmem:[#allocation2 + $0x194] sm:$0xf] %v385
        %450 = vst [vmem:[#allocation2 + $0x198] sm:$0xf] %v386
        %451 = vst [vmem:[#allocation2 + $0x19c] sm:$0xf] %v387
        %452 = vst [vmem:[#allocation2 + $0x1a0] sm:$0xf] %v388
        %453 = vst [vmem:[#allocation2 + $0x1a4] sm:$0xf] %v389
        %454 = vst [vmem:[#allocation2 + $0x1a8] sm:$0xf] %v390
        %455 = vst [vmem:[#allocation2 + $0x1ac] sm:$0xf] %v391
        %456 = vst [vmem:[#allocation2 + $0x1b0] sm:$0xf] %v392
        %457 = vst [vmem:[#allocation2 + $0x1b4] sm:$0xf] %v393
        %458 = vst [vmem:[#allocation2 + $0x1b8] sm:$0xf] %v394
        %459 = vst [vmem:[#allocation2 + $0x1bc] sm:$0xf] %v395
        %460 = vst [vmem:[#allocation2 + $0x1c0] sm:$0xf] %v396
        %461 = vst [vmem:[#allocation2 + $0x1c4] sm:$0xf] %v397
        %462 = vst [vmem:[#allocation2 + $0x1c8] sm:$0xf] %v398
        %463 = vst [vmem:[#allocation2 + $0x1cc] sm:$0xf] %v399
        %464 = vst [vmem:[#allocation2 + $0x1d0] sm:$0xf] %v400
        %465 = vst [vmem:[#allocation2 + $0x1d4] sm:$0xf] %v401
        %466 = vst [vmem:[#allocation2 + $0x1d8] sm:$0xf] %v402
        %467 = vst [vmem:[#allocation2 + $0x1dc] sm:$0xf] %v403
        %468 = vst [vmem:[#allocation2 + $0x1e0] sm:$0xf] %v404
        %469 = vst [vmem:[#allocation2 + $0x1e4] sm:$0xf] %v405
        %470 = vst [vmem:[#allocation2 + $0x1e8] sm:$0xf] %v406
        %471 = vst [vmem:[#allocation2 + $0x1ec] sm:$0xf] %v407
        %472 = vst [vmem:[#allocation2 + $0x1f0] sm:$0xf] %v408
        %473 = vst [vmem:[#allocation2 + $0x1f4] sm:$0xf] %v409
        %474 = vst [vmem:[#allocation2 + $0x1f8] sm:$0xf] %v410
        %475 = vst [vmem:[#allocation2 + $0x1fc] sm:$0xf] %v411
      $region52: #{gin_net_forward.1} parent=47 // pred_fallthru
        _
      %s476 = sadd.s32 %s22, 1
      %p477 = scmp.lt.s32.totalorder %s476, 0
      %s478 = ssub.s32 0, %s476
      %s479 = scalar_select %p477, %s478, %s476
      %s480 = sand.u32 %s479, 1
      %s481 = ssub.s32 0, %s480
      %s482 = scalar_select %p477, %s481, %s480
      %p483 = scmp.ne.s32.totalorder %s482, 0
      %p484 = scmp.lt.s32.totalorder %s482, 0
      %p485 = pnand %p484, %p483
      %p486 = pneg %p485
      %s487 = sadd.s32 %s482, 2
      %s488 = scalar_select %p486, %s487, %s482
      %s489 = smul.u32 %s488, 512
      %s490 = sshra.s32 %s489, 3
      %s491 = sand.u32 %s489, 7
      %s492 = smul.addr %s490, 4
      %s493 = scalar_lea.vmem [#allocation2], %s492
      %v494 = vld [vmem:[%s493] sm:$0xf]
      %v495 = vld [vmem:[%s493 + $0x4] sm:$0xf]
      %v496 = vld [vmem:[%s493 + $0x8] sm:$0xf]
      %v497 = vld [vmem:[%s493 + $0xc] sm:$0xf]
      %v498 = vld [vmem:[%s493 + $0x10] sm:$0xf]
      %v499 = vld [vmem:[%s493 + $0x14] sm:$0xf]
      %v500 = vld [vmem:[%s493 + $0x18] sm:$0xf]
      %v501 = vld [vmem:[%s493 + $0x1c] sm:$0xf]
      %v502 = vld [vmem:[%s493 + $0x20] sm:$0xf]
      %v503 = vld [vmem:[%s493 + $0x24] sm:$0xf]
      %v504 = vld [vmem:[%s493 + $0x28] sm:$0xf]
      %v505 = vld [vmem:[%s493 + $0x2c] sm:$0xf]
      %v506 = vld [vmem:[%s493 + $0x30] sm:$0xf]
      %v507 = vld [vmem:[%s493 + $0x34] sm:$0xf]
      %v508 = vld [vmem:[%s493 + $0x38] sm:$0xf]
      %v509 = vld [vmem:[%s493 + $0x3c] sm:$0xf]
      %v510 = vld [vmem:[%s493 + $0x40] sm:$0xf]
      %v511 = vld [vmem:[%s493 + $0x44] sm:$0xf]
      %v512 = vld [vmem:[%s493 + $0x48] sm:$0xf]
      %v513 = vld [vmem:[%s493 + $0x4c] sm:$0xf]
      %v514 = vld [vmem:[%s493 + $0x50] sm:$0xf]
      %v515 = vld [vmem:[%s493 + $0x54] sm:$0xf]
      %v516 = vld [vmem:[%s493 + $0x58] sm:$0xf]
      %v517 = vld [vmem:[%s493 + $0x5c] sm:$0xf]
      %v518 = vld [vmem:[%s493 + $0x60] sm:$0xf]
      %v519 = vld [vmem:[%s493 + $0x64] sm:$0xf]
      %v520 = vld [vmem:[%s493 + $0x68] sm:$0xf]
      %v521 = vld [vmem:[%s493 + $0x6c] sm:$0xf]
      %v522 = vld [vmem:[%s493 + $0x70] sm:$0xf]
      %v523 = vld [vmem:[%s493 + $0x74] sm:$0xf]
      %v524 = vld [vmem:[%s493 + $0x78] sm:$0xf]
      %v525 = vld [vmem:[%s493 + $0x7c] sm:$0xf]
      %v526 = vld [vmem:[%s493 + $0x80] sm:$0xf]
      %v527 = vld [vmem:[%s493 + $0x84] sm:$0xf]
      %v528 = vld [vmem:[%s493 + $0x88] sm:$0xf]
      %v529 = vld [vmem:[%s493 + $0x8c] sm:$0xf]
      %v530 = vld [vmem:[%s493 + $0x90] sm:$0xf]
      %v531 = vld [vmem:[%s493 + $0x94] sm:$0xf]
      %v532 = vld [vmem:[%s493 + $0x98] sm:$0xf]
      %v533 = vld [vmem:[%s493 + $0x9c] sm:$0xf]
      %v534 = vld [vmem:[%s493 + $0xa0] sm:$0xf]
      %v535 = vld [vmem:[%s493 + $0xa4] sm:$0xf]
      %v536 = vld [vmem:[%s493 + $0xa8] sm:$0xf]
      %v537 = vld [vmem:[%s493 + $0xac] sm:$0xf]
      %v538 = vld [vmem:[%s493 + $0xb0] sm:$0xf]
      %v539 = vld [vmem:[%s493 + $0xb4] sm:$0xf]
      %v540 = vld [vmem:[%s493 + $0xb8] sm:$0xf]
      %v541 = vld [vmem:[%s493 + $0xbc] sm:$0xf]
      %v542 = vld [vmem:[%s493 + $0xc0] sm:$0xf]
      %v543 = vld [vmem:[%s493 + $0xc4] sm:$0xf]
      %v544 = vld [vmem:[%s493 + $0xc8] sm:$0xf]
      %v545 = vld [vmem:[%s493 + $0xcc] sm:$0xf]
      %v546 = vld [vmem:[%s493 + $0xd0] sm:$0xf]
      %v547 = vld [vmem:[%s493 + $0xd4] sm:$0xf]
      %v548 = vld [vmem:[%s493 + $0xd8] sm:$0xf]
      %v549 = vld [vmem:[%s493 + $0xdc] sm:$0xf]
      %v550 = vld [vmem:[%s493 + $0xe0] sm:$0xf]
      %v551 = vld [vmem:[%s493 + $0xe4] sm:$0xf]
      %v552 = vld [vmem:[%s493 + $0xe8] sm:$0xf]
      %v553 = vld [vmem:[%s493 + $0xec] sm:$0xf]
      %v554 = vld [vmem:[%s493 + $0xf0] sm:$0xf]
      %v555 = vld [vmem:[%s493 + $0xf4] sm:$0xf]
      %v556 = vld [vmem:[%s493 + $0xf8] sm:$0xf]
      %v557 = vld [vmem:[%s493 + $0xfc] sm:$0xf]
      %s558 = smul.u32 %s23, 128
      %s559 = sshra.s32 %s558, 3
      %s560 = sand.u32 %s558, 7
      %s561 = smul.u32 %s559, 4
      %s562 = smul.addr %s561, 4
      %s563 = scalar_lea.vmem %s0, %s562
      %v564 = vld [vmem:[%s563] sm:$0xff]
      %v565 = vld [vmem:[%s563 + $0x8] sm:$0xff]
      %v566 = vld [vmem:[%s563 + $0x10] sm:$0xff]
      %v567 = vld [vmem:[%s563 + $0x18] sm:$0xff]
      %v568 = vld [vmem:[%s563 + $0x20] sm:$0xff]
      %v569 = vld [vmem:[%s563 + $0x28] sm:$0xff]
      %v570 = vld [vmem:[%s563 + $0x30] sm:$0xff]
      %v571 = vld [vmem:[%s563 + $0x38] sm:$0xff]
      %v572 = vld [vmem:[%s563 + $0x40] sm:$0xff]
      %v573 = vld [vmem:[%s563 + $0x48] sm:$0xff]
      %v574 = vld [vmem:[%s563 + $0x50] sm:$0xff]
      %v575 = vld [vmem:[%s563 + $0x58] sm:$0xff]
      %v576 = vld [vmem:[%s563 + $0x60] sm:$0xff]
      %v577 = vld [vmem:[%s563 + $0x68] sm:$0xff]
      %v578 = vld [vmem:[%s563 + $0x70] sm:$0xff]
      %v579 = vld [vmem:[%s563 + $0x78] sm:$0xff]
      %v580 = vld [vmem:[%s563 + $0x80] sm:$0xff]
      %v581 = vld [vmem:[%s563 + $0x88] sm:$0xff]
      %v582 = vld [vmem:[%s563 + $0x90] sm:$0xff]
      %v583 = vld [vmem:[%s563 + $0x98] sm:$0xff]
      %v584 = vld [vmem:[%s563 + $0xa0] sm:$0xff]
      %v585 = vld [vmem:[%s563 + $0xa8] sm:$0xff]
      %v586 = vld [vmem:[%s563 + $0xb0] sm:$0xff]
      %v587 = vld [vmem:[%s563 + $0xb8] sm:$0xff]
      %v588 = vld [vmem:[%s563 + $0xc0] sm:$0xff]
      %v589 = vld [vmem:[%s563 + $0xc8] sm:$0xff]
      %v590 = vld [vmem:[%s563 + $0xd0] sm:$0xff]
      %v591 = vld [vmem:[%s563 + $0xd8] sm:$0xff]
      %v592 = vld [vmem:[%s563 + $0xe0] sm:$0xff]
      %v593 = vld [vmem:[%s563 + $0xe8] sm:$0xff]
      %v594 = vld [vmem:[%s563 + $0xf0] sm:$0xff]
      %v595 = vld [vmem:[%s563 + $0xf8] sm:$0xff]
      %v628 = vunpack.c.l.b16 %v564
      %v629 = vunpack.c.h.b16 %v564
      %v630 = vunpack.c.l.b16 %v565
      %v631 = vunpack.c.h.b16 %v565
      %v632 = vunpack.c.l.b16 %v566
      %v633 = vunpack.c.h.b16 %v566
      %v634 = vunpack.c.l.b16 %v567
      %v635 = vunpack.c.h.b16 %v567
      %v636 = vunpack.c.l.b16 %v568
      %v637 = vunpack.c.h.b16 %v568
      %v638 = vunpack.c.l.b16 %v569
      %v639 = vunpack.c.h.b16 %v569
      %v640 = vunpack.c.l.b16 %v570
      %v641 = vunpack.c.h.b16 %v570
      %v642 = vunpack.c.l.b16 %v571
      %v643 = vunpack.c.h.b16 %v571
      %v644 = vunpack.c.l.b16 %v572
      %v645 = vunpack.c.h.b16 %v572
      %v646 = vunpack.c.l.b16 %v573
      %v647 = vunpack.c.h.b16 %v573
      %v648 = vunpack.c.l.b16 %v574
      %v649 = vunpack.c.h.b16 %v574
      %v650 = vunpack.c.l.b16 %v575
      %v651 = vunpack.c.h.b16 %v575
      %v652 = vunpack.c.l.b16 %v576
      %v653 = vunpack.c.h.b16 %v576
      %v654 = vunpack.c.l.b16 %v577
      %v655 = vunpack.c.h.b16 %v577
      %v656 = vunpack.c.l.b16 %v578
      %v657 = vunpack.c.h.b16 %v578
      %v658 = vunpack.c.l.b16 %v579
      %v659 = vunpack.c.h.b16 %v579
      %v660 = vunpack.c.l.b16 %v580
      %v661 = vunpack.c.h.b16 %v580
      %v662 = vunpack.c.l.b16 %v581
      %v663 = vunpack.c.h.b16 %v581
      %v664 = vunpack.c.l.b16 %v582
      %v665 = vunpack.c.h.b16 %v582
      %v666 = vunpack.c.l.b16 %v583
      %v667 = vunpack.c.h.b16 %v583
      %v668 = vunpack.c.l.b16 %v584
      %v669 = vunpack.c.h.b16 %v584
      %v670 = vunpack.c.l.b16 %v585
      %v671 = vunpack.c.h.b16 %v585
      %v672 = vunpack.c.l.b16 %v586
      %v673 = vunpack.c.h.b16 %v586
      %v674 = vunpack.c.l.b16 %v587
      %v675 = vunpack.c.h.b16 %v587
      %v676 = vunpack.c.l.b16 %v588
      %v677 = vunpack.c.h.b16 %v588
      %v678 = vunpack.c.l.b16 %v589
      %v679 = vunpack.c.h.b16 %v589
      %v680 = vunpack.c.l.b16 %v590
      %v681 = vunpack.c.h.b16 %v590
      %v682 = vunpack.c.l.b16 %v591
      %v683 = vunpack.c.h.b16 %v591
      %v684 = vunpack.c.l.b16 %v592
      %v685 = vunpack.c.h.b16 %v592
      %v686 = vunpack.c.l.b16 %v593
      %v687 = vunpack.c.h.b16 %v593
      %v688 = vunpack.c.l.b16 %v594
      %v689 = vunpack.c.h.b16 %v594
      %v690 = vunpack.c.l.b16 %v595
      %v691 = vunpack.c.h.b16 %v595
      %v692 = vpack.c.b16 %v632, %v628
      %v693 = vpack.c.b16 %v633, %v629
      %v694 = vpack.c.b16 %v634, %v630
      %v695 = vpack.c.b16 %v635, %v631
      %v696 = vpack.c.b16 %v640, %v636
      %v697 = vpack.c.b16 %v641, %v637
      %v698 = vpack.c.b16 %v642, %v638
      %v699 = vpack.c.b16 %v643, %v639
      %v700 = vpack.c.b16 %v648, %v644
      %v701 = vpack.c.b16 %v649, %v645
      %v702 = vpack.c.b16 %v650, %v646
      %v703 = vpack.c.b16 %v651, %v647
      %v704 = vpack.c.b16 %v656, %v652
      %v705 = vpack.c.b16 %v657, %v653
      %v706 = vpack.c.b16 %v658, %v654
      %v707 = vpack.c.b16 %v659, %v655
      %v708 = vpack.c.b16 %v664, %v660
      %v709 = vpack.c.b16 %v665, %v661
      %v710 = vpack.c.b16 %v666, %v662
      %v711 = vpack.c.b16 %v667, %v663
      %v712 = vpack.c.b16 %v672, %v668
      %v713 = vpack.c.b16 %v673, %v669
      %v714 = vpack.c.b16 %v674, %v670
      %v715 = vpack.c.b16 %v675, %v671
      %v716 = vpack.c.b16 %v680, %v676
      %v717 = vpack.c.b16 %v681, %v677
      %v718 = vpack.c.b16 %v682, %v678
      %v719 = vpack.c.b16 %v683, %v679
      %v720 = vpack.c.b16 %v688, %v684
      %v721 = vpack.c.b16 %v689, %v685
      %v722 = vpack.c.b16 %v690, %v686
      %v723 = vpack.c.b16 %v691, %v687
      %v820 = vunpack.c.l.b16 %v494
      %v821 = vunpack.c.l.b16 %v495
      %v822 = vunpack.c.l.b16 %v496
      %v823 = vunpack.c.l.b16 %v497
      %v824 = vunpack.c.l.b16 %v498
      %v825 = vunpack.c.l.b16 %v499
      %v826 = vunpack.c.l.b16 %v500
      %v827 = vunpack.c.l.b16 %v501
      %v828 = vunpack.c.l.b16 %v502
      %v829 = vunpack.c.l.b16 %v503
      %v830 = vunpack.c.l.b16 %v504
      %v831 = vunpack.c.l.b16 %v505
      %v832 = vunpack.c.l.b16 %v506
      %v833 = vunpack.c.l.b16 %v507
      %v834 = vunpack.c.l.b16 %v508
      %v835 = vunpack.c.l.b16 %v509
      %v836 = vunpack.c.l.b16 %v510
      %v837 = vunpack.c.l.b16 %v511
      %v838 = vunpack.c.l.b16 %v512
      %v839 = vunpack.c.l.b16 %v513
      %v840 = vunpack.c.l.b16 %v514
      %v841 = vunpack.c.l.b16 %v515
      %v842 = vunpack.c.l.b16 %v516
      %v843 = vunpack.c.l.b16 %v517
      %v844 = vunpack.c.l.b16 %v518
      %v845 = vunpack.c.l.b16 %v519
      %v846 = vunpack.c.l.b16 %v520
      %v847 = vunpack.c.l.b16 %v521
      %v848 = vunpack.c.l.b16 %v522
      %v849 = vunpack.c.l.b16 %v523
      %v850 = vunpack.c.l.b16 %v524
      %v851 = vunpack.c.l.b16 %v525
      %v852 = vunpack.c.l.b16 %v526
      %v853 = vunpack.c.l.b16 %v527
      %v854 = vunpack.c.l.b16 %v528
      %v855 = vunpack.c.l.b16 %v529
      %v856 = vunpack.c.l.b16 %v530
      %v857 = vunpack.c.l.b16 %v531
      %v858 = vunpack.c.l.b16 %v532
      %v859 = vunpack.c.l.b16 %v533
      %v860 = vunpack.c.l.b16 %v534
      %v861 = vunpack.c.l.b16 %v535
      %v862 = vunpack.c.l.b16 %v536
      %v863 = vunpack.c.l.b16 %v537
      %v864 = vunpack.c.l.b16 %v538
      %v865 = vunpack.c.l.b16 %v539
      %v866 = vunpack.c.l.b16 %v540
      %v867 = vunpack.c.l.b16 %v541
      %v868 = vunpack.c.l.b16 %v542
      %v869 = vunpack.c.l.b16 %v543
      %v870 = vunpack.c.l.b16 %v544
      %v871 = vunpack.c.l.b16 %v545
      %v872 = vunpack.c.l.b16 %v546
      %v873 = vunpack.c.l.b16 %v547
      %v874 = vunpack.c.l.b16 %v548
      %v875 = vunpack.c.l.b16 %v549
      %v876 = vunpack.c.l.b16 %v550
      %v877 = vunpack.c.l.b16 %v551
      %v878 = vunpack.c.l.b16 %v552
      %v879 = vunpack.c.l.b16 %v553
      %v880 = vunpack.c.l.b16 %v554
      %v881 = vunpack.c.l.b16 %v555
      %v882 = vunpack.c.l.b16 %v556
      %v883 = vunpack.c.l.b16 %v557
      %v884 = vpack.c.b16 %v821, %v820
      %v885 = vpack.c.b16 %v823, %v822
      %v886 = vpack.c.b16 %v825, %v824
      %v887 = vpack.c.b16 %v827, %v826
      %v888 = vpack.c.b16 %v829, %v828
      %v889 = vpack.c.b16 %v831, %v830
      %v890 = vpack.c.b16 %v833, %v832
      %v891 = vpack.c.b16 %v835, %v834
      %v892 = vpack.c.b16 %v837, %v836
      %v893 = vpack.c.b16 %v839, %v838
      %v894 = vpack.c.b16 %v841, %v840
      %v895 = vpack.c.b16 %v843, %v842
      %v896 = vpack.c.b16 %v845, %v844
      %v897 = vpack.c.b16 %v847, %v846
      %v898 = vpack.c.b16 %v849, %v848
      %v899 = vpack.c.b16 %v851, %v850
      %v900 = vpack.c.b16 %v853, %v852
      %v901 = vpack.c.b16 %v855, %v854
      %v902 = vpack.c.b16 %v857, %v856
      %v903 = vpack.c.b16 %v859, %v858
      %v904 = vpack.c.b16 %v861, %v860
      %v905 = vpack.c.b16 %v863, %v862
      %v906 = vpack.c.b16 %v865, %v864
      %v907 = vpack.c.b16 %v867, %v866
      %v908 = vpack.c.b16 %v869, %v868
      %v909 = vpack.c.b16 %v871, %v870
      %v910 = vpack.c.b16 %v873, %v872
      %v911 = vpack.c.b16 %v875, %v874
      %v912 = vpack.c.b16 %v877, %v876
      %v913 = vpack.c.b16 %v879, %v878
      %v914 = vpack.c.b16 %v881, %v880
      %v915 = vpack.c.b16 %v883, %v882
      %948 = vmatpush.bf16.msra.mxu0 %v891
      %949 = vmatpush.bf16.msra.mxu0 %v890
      %950 = vmatpush.bf16.msra.mxu0 %v889
      %951 = vmatpush.bf16.msra.mxu0 %v888
      %952 = vmatpush.bf16.msra.mxu0 %v887
      %953 = vmatpush.bf16.msra.mxu0 %v886
      %954 = vmatpush.bf16.msra.mxu0 %v885
      %955 = vmatpush.bf16.msra.mxu0 %v884
      %956 = vmatmul.bf16.gmra.mxu0 %v692
      %v957 = vpop.f32.mrf.mxu0
      %v958 = vadd.f32 0.0, %v957
      %v959 = vpop.f32.mrf.mxu0
      %v960 = vadd.f32 0.0, %v959
      %961 = vmatmul.bf16.gmra.mxu0 %v696
      %v962 = vpop.f32.mrf.mxu0
      %v963 = vadd.f32 0.0, %v962
      %v964 = vpop.f32.mrf.mxu0
      %v965 = vadd.f32 0.0, %v964
      %966 = vmatmul.bf16.gmra.mxu0 %v700
      %v967 = vpop.f32.mrf.mxu0
      %v968 = vadd.f32 0.0, %v967
      %v969 = vpop.f32.mrf.mxu0
      %v970 = vadd.f32 0.0, %v969
      %971 = vmatmul.bf16.gmra.mxu0 %v704
      %v972 = vpop.f32.mrf.mxu0
      %v973 = vadd.f32 0.0, %v972
      %v974 = vpop.f32.mrf.mxu0
      %v975 = vadd.f32 0.0, %v974
      %976 = vmatmul.bf16.gmra.mxu0 %v708
      %v977 = vpop.f32.mrf.mxu0
      %v978 = vadd.f32 0.0, %v977
      %v979 = vpop.f32.mrf.mxu0
      %v980 = vadd.f32 0.0, %v979
      %981 = vmatmul.bf16.gmra.mxu0 %v712
      %v982 = vpop.f32.mrf.mxu0
      %v983 = vadd.f32 0.0, %v982
      %v984 = vpop.f32.mrf.mxu0
      %v985 = vadd.f32 0.0, %v984
      %986 = vmatmul.bf16.gmra.mxu0 %v716
      %v987 = vpop.f32.mrf.mxu0
      %v988 = vadd.f32 0.0, %v987
      %v989 = vpop.f32.mrf.mxu0
      %v990 = vadd.f32 0.0, %v989
      %991 = vmatmul.bf16.gmra.mxu0 %v720
      %v992 = vpop.f32.mrf.mxu0
      %v993 = vadd.f32 0.0, %v992
      %v994 = vpop.f32.mrf.mxu0
      %v995 = vadd.f32 0.0, %v994
      %996 = vdwg.mxu0
      %997 = vmatpush.bf16.msra.mxu0 %v899
      %998 = vmatpush.bf16.msra.mxu0 %v898
      %999 = vmatpush.bf16.msra.mxu0 %v897
      %1000 = vmatpush.bf16.msra.mxu0 %v896
      %1001 = vmatpush.bf16.msra.mxu0 %v895
      %1002 = vmatpush.bf16.msra.mxu0 %v894
      %1003 = vmatpush.bf16.msra.mxu0 %v893
      %1004 = vmatpush.bf16.msra.mxu0 %v892
      %1005 = vmatmul.bf16.gmra.mxu0 %v693
      %v1006 = vpop.f32.mrf.mxu0
      %v1007 = vadd.f32 %v958, %v1006
      %v1008 = vpop.f32.mrf.mxu0
      %v1009 = vadd.f32 %v960, %v1008
      %1010 = vmatmul.bf16.gmra.mxu0 %v697
      %v1011 = vpop.f32.mrf.mxu0
      %v1012 = vadd.f32 %v963, %v1011
      %v1013 = vpop.f32.mrf.mxu0
      %v1014 = vadd.f32 %v965, %v1013
      %1015 = vmatmul.bf16.gmra.mxu0 %v701
      %v1016 = vpop.f32.mrf.mxu0
      %v1017 = vadd.f32 %v968, %v1016
      %v1018 = vpop.f32.mrf.mxu0
      %v1019 = vadd.f32 %v970, %v1018
      %1020 = vmatmul.bf16.gmra.mxu0 %v705
      %v1021 = vpop.f32.mrf.mxu0
      %v1022 = vadd.f32 %v973, %v1021
      %v1023 = vpop.f32.mrf.mxu0
      %v1024 = vadd.f32 %v975, %v1023
      %1025 = vmatmul.bf16.gmra.mxu0 %v709
      %v1026 = vpop.f32.mrf.mxu0
      %v1027 = vadd.f32 %v978, %v1026
      %v1028 = vpop.f32.mrf.mxu0
      %v1029 = vadd.f32 %v980, %v1028
      %1030 = vmatmul.bf16.gmra.mxu0 %v713
      %v1031 = vpop.f32.mrf.mxu0
      %v1032 = vadd.f32 %v983, %v1031
      %v1033 = vpop.f32.mrf.mxu0
      %v1034 = vadd.f32 %v985, %v1033
      %1035 = vmatmul.bf16.gmra.mxu0 %v717
      %v1036 = vpop.f32.mrf.mxu0
      %v1037 = vadd.f32 %v988, %v1036
      %v1038 = vpop.f32.mrf.mxu0
      %v1039 = vadd.f32 %v990, %v1038
      %1040 = vmatmul.bf16.gmra.mxu0 %v721
      %v1041 = vpop.f32.mrf.mxu0
      %v1042 = vadd.f32 %v993, %v1041
      %v1043 = vpop.f32.mrf.mxu0
      %v1044 = vadd.f32 %v995, %v1043
      %1045 = vdwg.mxu0
      %1046 = vmatpush.bf16.msra.mxu0 %v907
      %1047 = vmatpush.bf16.msra.mxu0 %v906
      %1048 = vmatpush.bf16.msra.mxu0 %v905
      %1049 = vmatpush.bf16.msra.mxu0 %v904
      %1050 = vmatpush.bf16.msra.mxu0 %v903
      %1051 = vmatpush.bf16.msra.mxu0 %v902
      %1052 = vmatpush.bf16.msra.mxu0 %v901
      %1053 = vmatpush.bf16.msra.mxu0 %v900
      %1054 = vmatmul.bf16.gmra.mxu0 %v694
      %v1055 = vpop.f32.mrf.mxu0
      %v1056 = vadd.f32 %v1007, %v1055
      %v1057 = vpop.f32.mrf.mxu0
      %v1058 = vadd.f32 %v1009, %v1057
      %1059 = vmatmul.bf16.gmra.mxu0 %v698
      %v1060 = vpop.f32.mrf.mxu0
      %v1061 = vadd.f32 %v1012, %v1060
      %v1062 = vpop.f32.mrf.mxu0
      %v1063 = vadd.f32 %v1014, %v1062
      %1064 = vmatmul.bf16.gmra.mxu0 %v702
      %v1065 = vpop.f32.mrf.mxu0
      %v1066 = vadd.f32 %v1017, %v1065
      %v1067 = vpop.f32.mrf.mxu0
      %v1068 = vadd.f32 %v1019, %v1067
      %1069 = vmatmul.bf16.gmra.mxu0 %v706
      %v1070 = vpop.f32.mrf.mxu0
      %v1071 = vadd.f32 %v1022, %v1070
      %v1072 = vpop.f32.mrf.mxu0
      %v1073 = vadd.f32 %v1024, %v1072
      %1074 = vmatmul.bf16.gmra.mxu0 %v710
      %v1075 = vpop.f32.mrf.mxu0
      %v1076 = vadd.f32 %v1027, %v1075
      %v1077 = vpop.f32.mrf.mxu0
      %v1078 = vadd.f32 %v1029, %v1077
      %1079 = vmatmul.bf16.gmra.mxu0 %v714
      %v1080 = vpop.f32.mrf.mxu0
      %v1081 = vadd.f32 %v1032, %v1080
      %v1082 = vpop.f32.mrf.mxu0
      %v1083 = vadd.f32 %v1034, %v1082
      %1084 = vmatmul.bf16.gmra.mxu0 %v718
      %v1085 = vpop.f32.mrf.mxu0
      %v1086 = vadd.f32 %v1037, %v1085
      %v1087 = vpop.f32.mrf.mxu0
      %v1088 = vadd.f32 %v1039, %v1087
      %1089 = vmatmul.bf16.gmra.mxu0 %v722
      %v1090 = vpop.f32.mrf.mxu0
      %v1091 = vadd.f32 %v1042, %v1090
      %v1092 = vpop.f32.mrf.mxu0
      %v1093 = vadd.f32 %v1044, %v1092
      %1094 = vdwg.mxu0
      %1095 = vmatpush.bf16.msra.mxu0 %v915
      %1096 = vmatpush.bf16.msra.mxu0 %v914
      %1097 = vmatpush.bf16.msra.mxu0 %v913
      %1098 = vmatpush.bf16.msra.mxu0 %v912
      %1099 = vmatpush.bf16.msra.mxu0 %v911
      %1100 = vmatpush.bf16.msra.mxu0 %v910
      %1101 = vmatpush.bf16.msra.mxu0 %v909
      %1102 = vmatpush.bf16.msra.mxu0 %v908
      %1103 = vmatmul.bf16.gmra.mxu0 %v695
      %v1104 = vpop.f32.mrf.mxu0
      %v1105 = vadd.f32 %v1056, %v1104
      %v1106 = vpop.f32.mrf.mxu0
      %v1107 = vadd.f32 %v1058, %v1106
      %1108 = vmatmul.bf16.gmra.mxu0 %v699
      %v1109 = vpop.f32.mrf.mxu0
      %v1110 = vadd.f32 %v1061, %v1109
      %v1111 = vpop.f32.mrf.mxu0
      %v1112 = vadd.f32 %v1063, %v1111
      %1113 = vmatmul.bf16.gmra.mxu0 %v703
      %v1114 = vpop.f32.mrf.mxu0
      %v1115 = vadd.f32 %v1066, %v1114
      %v1116 = vpop.f32.mrf.mxu0
      %v1117 = vadd.f32 %v1068, %v1116
      %1118 = vmatmul.bf16.gmra.mxu0 %v707
      %v1119 = vpop.f32.mrf.mxu0
      %v1120 = vadd.f32 %v1071, %v1119
      %v1121 = vpop.f32.mrf.mxu0
      %v1122 = vadd.f32 %v1073, %v1121
      %1123 = vmatmul.bf16.gmra.mxu0 %v711
      %v1124 = vpop.f32.mrf.mxu0
      %v1125 = vadd.f32 %v1076, %v1124
      %v1126 = vpop.f32.mrf.mxu0
      %v1127 = vadd.f32 %v1078, %v1126
      %1128 = vmatmul.bf16.gmra.mxu0 %v715
      %v1129 = vpop.f32.mrf.mxu0
      %v1130 = vadd.f32 %v1081, %v1129
      %v1131 = vpop.f32.mrf.mxu0
      %v1132 = vadd.f32 %v1083, %v1131
      %1133 = vmatmul.bf16.gmra.mxu0 %v719
      %v1134 = vpop.f32.mrf.mxu0
      %v1135 = vadd.f32 %v1086, %v1134
      %v1136 = vpop.f32.mrf.mxu0
      %v1137 = vadd.f32 %v1088, %v1136
      %1138 = vmatmul.bf16.gmra.mxu0 %v723
      %v1139 = vpop.f32.mrf.mxu0
      %v1140 = vadd.f32 %v1091, %v1139
      %v1141 = vpop.f32.mrf.mxu0
      %v1142 = vadd.f32 %v1093, %v1141
      %1143 = vdwg.mxu0
      %v1144 = vpack.c.bf16 %v1107, %v1105
      %v1145 = vpack.c.bf16 %v1112, %v1110
      %v1146 = vpack.c.bf16 %v1117, %v1115
      %v1147 = vpack.c.bf16 %v1122, %v1120
      %v1148 = vpack.c.bf16 %v1127, %v1125
      %v1149 = vpack.c.bf16 %v1132, %v1130
      %v1150 = vpack.c.bf16 %v1137, %v1135
      %v1151 = vpack.c.bf16 %v1142, %v1140
      %v1152 = vld [vmem:[%s329] sm:$0xf]
      %v1153 = vld [vmem:[%s329 + $0x4] sm:$0xf]
      %v1154 = vld [vmem:[%s329 + $0x8] sm:$0xf]
      %v1155 = vld [vmem:[%s329 + $0xc] sm:$0xf]
      %v1156 = vld [vmem:[%s329 + $0x10] sm:$0xf]
      %v1157 = vld [vmem:[%s329 + $0x14] sm:$0xf]
      %v1158 = vld [vmem:[%s329 + $0x18] sm:$0xf]
      %v1159 = vld [vmem:[%s329 + $0x1c] sm:$0xf]
      %v1160 = vld [vmem:[%s329 + $0x20] sm:$0xf]
      %v1161 = vld [vmem:[%s329 + $0x24] sm:$0xf]
      %v1162 = vld [vmem:[%s329 + $0x28] sm:$0xf]
      %v1163 = vld [vmem:[%s329 + $0x2c] sm:$0xf]
      %v1164 = vld [vmem:[%s329 + $0x30] sm:$0xf]
      %v1165 = vld [vmem:[%s329 + $0x34] sm:$0xf]
      %v1166 = vld [vmem:[%s329 + $0x38] sm:$0xf]
      %v1167 = vld [vmem:[%s329 + $0x3c] sm:$0xf]
      %v1168 = vld [vmem:[%s332] sm:$0x1]
      %v1170 = vperm.slane %v1168, 0
      %v1188 = vunpack.c.l.b16 %v1152
      %v1189 = vunpack.c.l.b16 %v1153
      %v1190 = vunpack.c.l.b16 %v1154
      %v1191 = vunpack.c.l.b16 %v1155
      %v1192 = vunpack.c.l.b16 %v1156
      %v1193 = vunpack.c.l.b16 %v1157
      %v1194 = vunpack.c.l.b16 %v1158
      %v1195 = vunpack.c.l.b16 %v1159
      %v1196 = vunpack.c.l.b16 %v1160
      %v1197 = vunpack.c.l.b16 %v1161
      %v1198 = vunpack.c.l.b16 %v1162
      %v1199 = vunpack.c.l.b16 %v1163
      %v1200 = vunpack.c.l.b16 %v1164
      %v1201 = vunpack.c.l.b16 %v1165
      %v1202 = vunpack.c.l.b16 %v1166
      %v1203 = vunpack.c.l.b16 %v1167
      %v1204 = vpack.c.b16 %v1189, %v1188
      %v1205 = vpack.c.b16 %v1191, %v1190
      %v1206 = vpack.c.b16 %v1193, %v1192
      %v1207 = vpack.c.b16 %v1195, %v1194
      %v1208 = vpack.c.b16 %v1197, %v1196
      %v1209 = vpack.c.b16 %v1199, %v1198
      %v1210 = vpack.c.b16 %v1201, %v1200
      %v1211 = vpack.c.b16 %v1203, %v1202
      %1220 = vmatpush.bf16.msra.mxu0 %v1211
      %1221 = vmatpush.bf16.msra.mxu0 %v1210
      %1222 = vmatpush.bf16.msra.mxu0 %v1209
      %1223 = vmatpush.bf16.msra.mxu0 %v1208
      %1224 = vmatpush.bf16.msra.mxu0 %v1207
      %1225 = vmatpush.bf16.msra.mxu0 %v1206
      %1226 = vmatpush.bf16.msra.mxu0 %v1205
      %1227 = vmatpush.bf16.msra.mxu0 %v1204
      %1228 = vmatmul.bf16.gmra.mxu0 %v1144
      %v1229 = vpop.f32.mrf.mxu0
      %v1230 = vadd.f32 %v1170, %v1229
      %v1231 = vpop.f32.mrf.mxu0
      %v1232 = vadd.f32 %v1170, %v1231
      %1233 = vmatmul.bf16.gmra.mxu0 %v1145
      %v1234 = vpop.f32.mrf.mxu0
      %v1235 = vadd.f32 %v1170, %v1234
      %v1236 = vpop.f32.mrf.mxu0
      %v1237 = vadd.f32 %v1170, %v1236
      %1238 = vmatmul.bf16.gmra.mxu0 %v1146
      %v1239 = vpop.f32.mrf.mxu0
      %v1240 = vadd.f32 %v1170, %v1239
      %v1241 = vpop.f32.mrf.mxu0
      %v1242 = vadd.f32 %v1170, %v1241
      %1243 = vmatmul.bf16.gmra.mxu0 %v1147
      %v1244 = vpop.f32.mrf.mxu0
      %v1245 = vadd.f32 %v1170, %v1244
      %v1246 = vpop.f32.mrf.mxu0
      %v1247 = vadd.f32 %v1170, %v1246
      %1248 = vmatmul.bf16.gmra.mxu0 %v1148
      %v1249 = vpop.f32.mrf.mxu0
      %v1250 = vadd.f32 %v1170, %v1249
      %v1251 = vpop.f32.mrf.mxu0
      %v1252 = vadd.f32 %v1170, %v1251
      %1253 = vmatmul.bf16.gmra.mxu0 %v1149
      %v1254 = vpop.f32.mrf.mxu0
      %v1255 = vadd.f32 %v1170, %v1254
      %v1256 = vpop.f32.mrf.mxu0
      %v1257 = vadd.f32 %v1170, %v1256
      %1258 = vmatmul.bf16.gmra.mxu0 %v1150
      %v1259 = vpop.f32.mrf.mxu0
      %v1260 = vadd.f32 %v1170, %v1259
      %v1261 = vpop.f32.mrf.mxu0
      %v1262 = vadd.f32 %v1170, %v1261
      %1263 = vmatmul.bf16.gmra.mxu0 %v1151
      %v1264 = vpop.f32.mrf.mxu0
      %v1265 = vadd.f32 %v1170, %v1264
      %v1266 = vpop.f32.mrf.mxu0
      %v1267 = vadd.f32 %v1170, %v1266
      %1268 = vdwg.mxu0
      %v1269 = vmax.f32 %v1230, 0.0
      %v1270 = vmax.f32 %v1232, 0.0
      %v1271 = vmax.f32 %v1235, 0.0
      %v1272 = vmax.f32 %v1237, 0.0
      %v1273 = vmax.f32 %v1240, 0.0
      %v1274 = vmax.f32 %v1242, 0.0
      %v1275 = vmax.f32 %v1245, 0.0
      %v1276 = vmax.f32 %v1247, 0.0
      %v1277 = vmax.f32 %v1250, 0.0
      %v1278 = vmax.f32 %v1252, 0.0
      %v1279 = vmax.f32 %v1255, 0.0
      %v1280 = vmax.f32 %v1257, 0.0
      %v1281 = vmax.f32 %v1260, 0.0
      %v1282 = vmax.f32 %v1262, 0.0
      %v1283 = vmax.f32 %v1265, 0.0
      %v1284 = vmax.f32 %v1267, 0.0
      %v1285 = vpack.c.bf16 %v1270, %v1269
      %v1286 = vpack.c.bf16 %v1272, %v1271
      %v1287 = vpack.c.bf16 %v1274, %v1273
      %v1288 = vpack.c.bf16 %v1276, %v1275
      %v1289 = vpack.c.bf16 %v1278, %v1277
      %v1290 = vpack.c.bf16 %v1280, %v1279
      %v1291 = vpack.c.bf16 %v1282, %v1281
      %v1292 = vpack.c.bf16 %v1284, %v1283
      %v1293 = vld [vmem:[%s337] sm:$0xf]
      %v1294 = vld [vmem:[%s337 + $0x4] sm:$0xf]
      %v1295 = vld [vmem:[%s337 + $0x8] sm:$0xf]
      %v1296 = vld [vmem:[%s337 + $0xc] sm:$0xf]
      %v1297 = vld [vmem:[%s337 + $0x10] sm:$0xf]
      %v1298 = vld [vmem:[%s337 + $0x14] sm:$0xf]
      %v1299 = vld [vmem:[%s337 + $0x18] sm:$0xf]
      %v1300 = vld [vmem:[%s337 + $0x1c] sm:$0xf]
      %v1301 = vld [vmem:[%s337 + $0x20] sm:$0xf]
      %v1302 = vld [vmem:[%s337 + $0x24] sm:$0xf]
      %v1303 = vld [vmem:[%s337 + $0x28] sm:$0xf]
      %v1304 = vld [vmem:[%s337 + $0x2c] sm:$0xf]
      %v1305 = vld [vmem:[%s337 + $0x30] sm:$0xf]
      %v1306 = vld [vmem:[%s337 + $0x34] sm:$0xf]
      %v1307 = vld [vmem:[%s337 + $0x38] sm:$0xf]
      %v1308 = vld [vmem:[%s337 + $0x3c] sm:$0xf]
      %v1309 = vld [vmem:[%s340] sm:$0x1]
      %v1311 = vperm.slane %v1309, 0
      %v1329 = vunpack.c.l.b16 %v1293
      %v1330 = vunpack.c.l.b16 %v1294
      %v1331 = vunpack.c.l.b16 %v1295
      %v1332 = vunpack.c.l.b16 %v1296
      %v1333 = vunpack.c.l.b16 %v1297
      %v1334 = vunpack.c.l.b16 %v1298
      %v1335 = vunpack.c.l.b16 %v1299
      %v1336 = vunpack.c.l.b16 %v1300
      %v1337 = vunpack.c.l.b16 %v1301
      %v1338 = vunpack.c.l.b16 %v1302
      %v1339 = vunpack.c.l.b16 %v1303
      %v1340 = vunpack.c.l.b16 %v1304
      %v1341 = vunpack.c.l.b16 %v1305
      %v1342 = vunpack.c.l.b16 %v1306
      %v1343 = vunpack.c.l.b16 %v1307
      %v1344 = vunpack.c.l.b16 %v1308
      %v1345 = vpack.c.b16 %v1330, %v1329
      %v1346 = vpack.c.b16 %v1332, %v1331
      %v1347 = vpack.c.b16 %v1334, %v1333
      %v1348 = vpack.c.b16 %v1336, %v1335
      %v1349 = vpack.c.b16 %v1338, %v1337
      %v1350 = vpack.c.b16 %v1340, %v1339
      %v1351 = vpack.c.b16 %v1342, %v1341
      %v1352 = vpack.c.b16 %v1344, %v1343
      %1361 = vmatpush.bf16.msra.mxu0 %v1352
      %1362 = vmatpush.bf16.msra.mxu0 %v1351
      %1363 = vmatpush.bf16.msra.mxu0 %v1350
      %1364 = vmatpush.bf16.msra.mxu0 %v1349
      %1365 = vmatpush.bf16.msra.mxu0 %v1348
      %1366 = vmatpush.bf16.msra.mxu0 %v1347
      %1367 = vmatpush.bf16.msra.mxu0 %v1346
      %1368 = vmatpush.bf16.msra.mxu0 %v1345
      %1369 = vmatmul.bf16.gmra.mxu0 %v1285
      %v1370 = vpop.f32.mrf.mxu0
      %v1371 = vadd.f32 %v1311, %v1370
      %v1372 = vpop.f32.mrf.mxu0
      %v1373 = vadd.f32 %v1311, %v1372
      %1374 = vmatmul.bf16.gmra.mxu0 %v1286
      %v1375 = vpop.f32.mrf.mxu0
      %v1376 = vadd.f32 %v1311, %v1375
      %v1377 = vpop.f32.mrf.mxu0
      %v1378 = vadd.f32 %v1311, %v1377
      %1379 = vmatmul.bf16.gmra.mxu0 %v1287
      %v1380 = vpop.f32.mrf.mxu0
      %v1381 = vadd.f32 %v1311, %v1380
      %v1382 = vpop.f32.mrf.mxu0
      %v1383 = vadd.f32 %v1311, %v1382
      %1384 = vmatmul.bf16.gmra.mxu0 %v1288
      %v1385 = vpop.f32.mrf.mxu0
      %v1386 = vadd.f32 %v1311, %v1385
      %v1387 = vpop.f32.mrf.mxu0
      %v1388 = vadd.f32 %v1311, %v1387
      %1389 = vmatmul.bf16.gmra.mxu0 %v1289
      %v1390 = vpop.f32.mrf.mxu0
      %v1391 = vadd.f32 %v1311, %v1390
      %v1392 = vpop.f32.mrf.mxu0
      %v1393 = vadd.f32 %v1311, %v1392
      %1394 = vmatmul.bf16.gmra.mxu0 %v1290
      %v1395 = vpop.f32.mrf.mxu0
      %v1396 = vadd.f32 %v1311, %v1395
      %v1397 = vpop.f32.mrf.mxu0
      %v1398 = vadd.f32 %v1311, %v1397
      %1399 = vmatmul.bf16.gmra.mxu0 %v1291
      %v1400 = vpop.f32.mrf.mxu0
      %v1401 = vadd.f32 %v1311, %v1400
      %v1402 = vpop.f32.mrf.mxu0
      %v1403 = vadd.f32 %v1311, %v1402
      %1404 = vmatmul.bf16.gmra.mxu0 %v1292
      %v1405 = vpop.f32.mrf.mxu0
      %v1406 = vadd.f32 %v1311, %v1405
      %v1407 = vpop.f32.mrf.mxu0
      %v1408 = vadd.f32 %v1311, %v1407
      %1409 = vdwg.mxu0
      %v1410 = vmax.f32 %v1371, 0.0
      %v1411 = vmax.f32 %v1373, 0.0
      %v1412 = vmax.f32 %v1376, 0.0
      %v1413 = vmax.f32 %v1378, 0.0
      %v1414 = vmax.f32 %v1381, 0.0
      %v1415 = vmax.f32 %v1383, 0.0
      %v1416 = vmax.f32 %v1386, 0.0
      %v1417 = vmax.f32 %v1388, 0.0
      %v1418 = vmax.f32 %v1391, 0.0
      %v1419 = vmax.f32 %v1393, 0.0
      %v1420 = vmax.f32 %v1396, 0.0
      %v1421 = vmax.f32 %v1398, 0.0
      %v1422 = vmax.f32 %v1401, 0.0
      %v1423 = vmax.f32 %v1403, 0.0
      %v1424 = vmax.f32 %v1406, 0.0
      %v1425 = vmax.f32 %v1408, 0.0
      %v1426 = vpack.c.bf16 %v1410, %v1410
      %v1427 = vpack.c.bf16 %v1411, %v1411
      %v1428 = vpack.c.bf16 %v1412, %v1412
      %v1429 = vpack.c.bf16 %v1413, %v1413
      %v1430 = vpack.c.bf16 %v1414, %v1414
      %v1431 = vpack.c.bf16 %v1415, %v1415
      %v1432 = vpack.c.bf16 %v1416, %v1416
      %v1433 = vpack.c.bf16 %v1417, %v1417
      %v1434 = vpack.c.bf16 %v1418, %v1418
      %v1435 = vpack.c.bf16 %v1419, %v1419
      %v1436 = vpack.c.bf16 %v1420, %v1420
      %v1437 = vpack.c.bf16 %v1421, %v1421
      %v1438 = vpack.c.bf16 %v1422, %v1422
      %v1439 = vpack.c.bf16 %v1423, %v1423
      %v1440 = vpack.c.bf16 %v1424, %v1424
      %v1441 = vpack.c.bf16 %v1425, %v1425
      %p1442 = scmp.lt.s32.totalorder %s22, 0
      %s1443 = ssub.s32 0, %s22
      %s1444 = scalar_select %p1442, %s1443, %s22
      %s1445 = sand.u32 %s1444, 1
      %s1446 = ssub.s32 0, %s1445
      %s1447 = scalar_select %p1442, %s1446, %s1445
      %p1448 = scmp.ne.s32.totalorder %s1447, 0
      %p1449 = scmp.lt.s32.totalorder %s1447, 0
      %p1450 = pnand %p1449, %p1448
      %p1451 = pneg %p1450
      %s1452 = sadd.s32 %s1447, 2
      %s1453 = scalar_select %p1451, %s1452, %s1447
      %s1454 = smul.u32 %s1453, 512
      %s1455 = sadd.s32 %s1454, %s558
      %s1456 = sshra.s32 %s1455, 3
      %s1457 = sand.u32 %s1455, 7
      %s1458 = smul.addr %s1456, 4
      %s1459 = scalar_lea.vmem [#allocation2], %s1458
      %1460 = vst [vmem:[%s1459] sm:$0xf] %v1426
      %1461 = vst [vmem:[%s1459 + $0x4] sm:$0xf] %v1427
      %1462 = vst [vmem:[%s1459 + $0x8] sm:$0xf] %v1428
      %1463 = vst [vmem:[%s1459 + $0xc] sm:$0xf] %v1429
      %1464 = vst [vmem:[%s1459 + $0x10] sm:$0xf] %v1430
      %1465 = vst [vmem:[%s1459 + $0x14] sm:$0xf] %v1431
      %1466 = vst [vmem:[%s1459 + $0x18] sm:$0xf] %v1432
      %1467 = vst [vmem:[%s1459 + $0x1c] sm:$0xf] %v1433
      %1468 = vst [vmem:[%s1459 + $0x20] sm:$0xf] %v1434
      %1469 = vst [vmem:[%s1459 + $0x24] sm:$0xf] %v1435
      %1470 = vst [vmem:[%s1459 + $0x28] sm:$0xf] %v1436
      %1471 = vst [vmem:[%s1459 + $0x2c] sm:$0xf] %v1437
      %1472 = vst [vmem:[%s1459 + $0x30] sm:$0xf] %v1438
      %1473 = vst [vmem:[%s1459 + $0x34] sm:$0xf] %v1439
      %1474 = vst [vmem:[%s1459 + $0x38] sm:$0xf] %v1440
      %1475 = vst [vmem:[%s1459 + $0x3c] sm:$0xf] %v1441
      %p1476 = scmp.eq.s32.totalorder %s22, 2
      // Predicated region
      $region53: #{gin_net_forward.1} parent=47 // pred_check
        %p1477 = pneg %p1476
      $region54: #{gin_net_forward.1} parent=47 // pred_check_branch
        %1479 = sbr.rel (%p1477) target = $region56
      $region55: #{gin_net_forward.1} parent=47 // pred_region
        %v1480 = vld [vmem:[%s7] sm:$0xff]
        %v1481 = vld [vmem:[%s324] sm:$0xf]
        %v1498 = vunpack.c.l.b16 %v1426
        %v1499 = vunpack.c.l.b16 %v1427
        %v1500 = vunpack.c.l.b16 %v1428
        %v1501 = vunpack.c.l.b16 %v1429
        %v1502 = vunpack.c.l.b16 %v1430
        %v1503 = vunpack.c.l.b16 %v1431
        %v1504 = vunpack.c.l.b16 %v1432
        %v1505 = vunpack.c.l.b16 %v1433
        %v1506 = vunpack.c.l.b16 %v1434
        %v1507 = vunpack.c.l.b16 %v1435
        %v1508 = vunpack.c.l.b16 %v1436
        %v1509 = vunpack.c.l.b16 %v1437
        %v1510 = vunpack.c.l.b16 %v1438
        %v1511 = vunpack.c.l.b16 %v1439
        %v1512 = vunpack.c.l.b16 %v1440
        %v1513 = vunpack.c.l.b16 %v1441
        %v1514 = vpack.c.b16 %v1499, %v1498
        %v1515 = vpack.c.b16 %v1501, %v1500
        %v1516 = vpack.c.b16 %v1503, %v1502
        %v1517 = vpack.c.b16 %v1505, %v1504
        %v1518 = vpack.c.b16 %v1507, %v1506
        %v1519 = vpack.c.b16 %v1509, %v1508
        %v1520 = vpack.c.b16 %v1511, %v1510
        %v1521 = vpack.c.b16 %v1513, %v1512
        %1530 = vmatpush.bf16.msra.mxu0 %v1521
        %1531 = vmatpush.bf16.msra.mxu0 %v1520
        %1532 = vmatpush.bf16.msra.mxu0 %v1519
        %1533 = vmatpush.bf16.msra.mxu0 %v1518
        %1534 = vmatpush.bf16.msra.mxu0 %v1517
        %1535 = vmatpush.bf16.msra.mxu0 %v1516
        %1536 = vmatpush.bf16.msra.mxu0 %v1515
        %1537 = vmatpush.bf16.msra.mxu0 %v1514
        %1538 = vmatmul.bf16.gmra.mxu0 %v1481
        %v1539 = vpop.f32.mrf.mxu0
        %v1540 = vadd.f32 0.0, %v1539
        %v1541 = vpop.f32.mrf.mxu0
        %1542 = vdwg.mxu0
        %v1543 = vadd.f32 %v1480, %v1540
        %1544 = vst [vmem:[%s7] sm:$0xff] %v1543
      $region56: #{gin_net_forward.1} parent=47 // pred_fallthru
        _
      // Predicated region
      $region57: #{gin_net_forward.1} parent=47 // pred_check
        %p1545 = pneg %p215
      $region58: #{gin_net_forward.1} parent=47 // pred_check_branch
        %1547 = sbr.rel (%p1545) target = $region60
      $region59: #{gin_net_forward.1} parent=47 // pred_region
        _
      $region60: #{gin_net_forward.1} parent=47 // pred_fallthru
        _
      // Predicated region
      $region61: #{gin_net_forward.1} parent=47 // pred_check
        %p1548 = pneg %p215
      $region62: #{gin_net_forward.1} parent=47 // pred_check_branch
        %1550 = sbr.rel (%p1548) target = $region64
      $region63: #{gin_net_forward.1} parent=47 // pred_region
        _
      $region64: #{gin_net_forward.1} parent=47 // pred_fallthru
        _
    $region48: #{gin_net_forward.1} parent=5 // pred_fallthru
      _
    %p1551 = scmp.le.s32.totalorder 2, %s13
    // Predicated region
    $region65: #{gin_net_forward.1} parent=5 // pred_check
      %p1552 = pneg %p1551
    $region66: #{gin_net_forward.1} parent=5 // pred_check_branch
      %1554 = sbr.rel (%p1552) target = $region68
    $region67: #{gin_net_forward.1} parent=5 // pred_region
      %s1555 = ssub.s32 %s13, 2
    $region68: #{gin_net_forward.1} parent=5 // pred_fallthru
      _
  $region6: #{gin_net_forward.1} parent=0 // loop_footer
    %s17 = sadd.s32 1, %s13
  $region7: #{gin_net_forward.1} parent=0 // loop_footer_branch
    %12 = sbr.rel target = $region3
  $region8: #{gin_net_forward.1} parent=0 // loop_exit
    _

// kernel: gin_net_forward.1
$region0: #{gin_net_forward.1}
  #allocation0 [shape = 'u32[]', space=smem, size = 0x4, offset = 0x4, fixed_abs, tag = 'smem constant byte address 0x4 - core index']
  #allocation1 [shape = 'u32[72,128]{1,0:T(1,128)}', space=vmem, size = 0x9000, scoped, tag = 'internal scratch']
  #allocation2 [shape = 'bf16[1024,128]{1,0:T(8,128)(2,1)}', space=vmem, size = 0x40000, scoped, tag = 'scratch operand']
  %s0 = inlined_call_operand.vmem [shape: bf16[512,512], index: 0, kind: input, shape index: {}]
  %s1 = inlined_call_operand.vmem [shape: bf16[512,128], index: 1, kind: input, shape index: {}]
  %s2 = inlined_call_operand.vmem [shape: bf16[8,512], index: 2, kind: input, shape index: {}]
  %s3 = inlined_call_operand.vmem [shape: bf16[3,128,128], index: 3, kind: input, shape index: {}]
  %s4 = inlined_call_operand.vmem [shape: f32[3,1,128], index: 4, kind: input, shape index: {}]
  %s5 = inlined_call_operand.vmem [shape: bf16[3,128,128], index: 5, kind: input, shape index: {}]
  %s6 = inlined_call_operand.vmem [shape: f32[3,1,128], index: 6, kind: input, shape index: {}]
  %s7 = inlined_call_operand.vmem [shape: f32[8,128], index: 7, kind: output, shape index: {}]
  %s8 = sld [smem:[#allocation0]]
  $region69: #{gin_net_forward.1} parent=0
    _
  %s10 = ssub.s32 1, %s8
  %s11 = scalar_select 0, %s10, %s8
  loop: start=0, step=1, limit=14
  $region2: #{gin_net_forward.1} parent=0 // loop_pre_header
    _
  $region3: #{gin_net_forward.1} parent=0 // loop_header
    %s13 = sphi 0, %s17
    %p14 = scmp.ge.s32.totalorder %s13, 14
    %s20 = sphi 0, %s32
    %s21 = sphi 0, %s28
    %s22 = sphi 0, %s20
    %s23 = sphi 0, %s21
    %s24 = sphi 0, %s22
    %s25 = sphi 0, %s23
    %s33 = sphi 0, %s33
    %s35 = sphi 0, %s33
    %s36 = sphi 0, %s35
    %s50 = sphi 0, %s36
    %s54 = sphi 0, %s54
    %s56 = sphi 0, %s54
    %s57 = sphi 0, %s56
    %s71 = sphi 0, %s57
    %s77 = sphi 0, %s79
    %s80 = sphi 0, %s77
    %s81 = sphi 0, %s80
    %s97 = sphi 0, %s81
    %s103 = sphi 0, %s105
    %s106 = sphi 0, %s103
    %s107 = sphi 0, %s106
    %s123 = sphi 0, %s107
    %s129 = sphi 0, %s131
    %s132 = sphi 0, %s129
    %s133 = sphi 0, %s132
    %s149 = sphi 0, %s133
    %s155 = sphi 0, %s157
    %s158 = sphi 0, %s155
    %s159 = sphi 0, %s158
    %s175 = sphi 0, %s159
    %s181 = sphi 0, %s183
    %s184 = sphi 0, %s181
    %s185 = sphi 0, %s184
    %s201 = sphi 0, %s185
    %s205 = sphi 0, %s205
    %s207 = sphi 0, %s205
    %s208 = sphi 0, %s207
    %s222 = sphi 0, %s208
  $region4: #{gin_net_forward.1} parent=0 // loop_header_branch
    %16 = sbr.rel (%p14) target = $region8
  $region5: #{gin_net_forward.1} parent=0 // loop_body
    %s18 = ssub.s32 %s13, 1
    %s19 = ssub.s32 %s13, 2
    %s26 = sadd.s32 1, %s21
    %p27 = scmp.ge.s32.totalorder %s26, 4
    %s28 = scalar_select %p27, 0, %s26
    %s29 = sadd.s32 1, %s20
    %s30 = scalar_select %p27, %s29, %s20
    %p31 = scmp.ge.s32.totalorder %s30, 3
    %s32 = scalar_select %p31, 0, %s30
    %s34 = sadd.s32 %s33, 1
    %p37 = scmp.eq.s32.totalorder %s13, 11
    %p38 = scmp.ne.s32.totalorder %s33, %s35
    %p39 = scmp.eq.s32.totalorder %s13, 0
    %p40 = por %p38, %p39
    %p41 = scmp.ne.s32.totalorder %s33, %s35
    %p42 = scmp.eq.s32.totalorder %s18, 11
    %p43 = por %p41, %p42
    %p44 = scmp.ne.s32.totalorder %s35, %s36
    %p45 = scmp.eq.s32.totalorder %s18, 0
    %p46 = por %p44, %p45
    %p47 = scmp.ne.s32.totalorder %s35, %s36
    %p48 = scmp.eq.s32.totalorder %s19, 11
    %p49 = por %p47, %p48
    %p51 = scmp.ne.s32.totalorder %s36, %s50
    %p52 = scmp.eq.s32.totalorder %s19, 0
    %p53 = por %p51, %p52
    %s55 = sadd.s32 %s54, 1
    %p58 = scmp.eq.s32.totalorder %s13, 11
    %p59 = scmp.ne.s32.totalorder %s54, %s56
    %p60 = scmp.eq.s32.totalorder %s13, 0
    %p61 = por %p59, %p60
    %p62 = scmp.ne.s32.totalorder %s54, %s56
    %p63 = scmp.eq.s32.totalorder %s18, 11
    %p64 = por %p62, %p63
    %p65 = scmp.ne.s32.totalorder %s56, %s57
    %p66 = scmp.eq.s32.totalorder %s18, 0
    %p67 = por %p65, %p66
    %p68 = scmp.ne.s32.totalorder %s56, %s57
    %p69 = scmp.eq.s32.totalorder %s19, 11
    %p70 = por %p68, %p69
    %p72 = scmp.ne.s32.totalorder %s57, %s71
    %p73 = scmp.eq.s32.totalorder %s19, 0
    %p74 = por %p72, %p73
    %s75 = ssub.s32 %s21, %s28
    %p76 = scmp.eq.s32.totalorder %s75, 0
    %s78 = sadd.s32 %s77, 1
    %s79 = scalar_select %p76, %s77, %s78
    %p82 = pneg %p76
    %p83 = scmp.eq.s32.totalorder %s13, 11
    %p84 = por %p82, %p83
    %p85 = scmp.ne.s32.totalorder %s77, %s80
    %p86 = scmp.eq.s32.totalorder %s13, 0
    %p87 = por %p85, %p86
    %p88 = scmp.ne.s32.totalorder %s77, %s80
    %p89 = scmp.eq.s32.totalorder %s18, 11
    %p90 = por %p88, %p89
    %p91 = scmp.ne.s32.totalorder %s80, %s81
    %p92 = scmp.eq.s32.totalorder %s18, 0
    %p93 = por %p91, %p92
    %p94 = scmp.ne.s32.totalorder %s80, %s81
    %p95 = scmp.eq.s32.totalorder %s19, 11
    %p96 = por %p94, %p95
    %p98 = scmp.ne.s32.totalorder %s81, %s97
    %p99 = scmp.eq.s32.totalorder %s19, 0
    %p100 = por %p98, %p99
    %s101 = ssub.s32 %s20, %s32
    %p102 = scmp.eq.s32.totalorder %s101, 0
    %s104 = sadd.s32 %s103, 1
    %s105 = scalar_select %p102, %s103, %s104
    %p108 = pneg %p102
    %p109 = scmp.eq.s32.totalorder %s13, 11
    %p110 = por %p108, %p109
    %p111 = scmp.ne.s32.totalorder %s103, %s106
    %p112 = scmp.eq.s32.totalorder %s13, 0
    %p113 = por %p111, %p112
    %p114 = scmp.ne.s32.totalorder %s103, %s106
    %p115 = scmp.eq.s32.totalorder %s18, 11
    %p116 = por %p114, %p115
    %p117 = scmp.ne.s32.totalorder %s106, %s107
    %p118 = scmp.eq.s32.totalorder %s18, 0
    %p119 = por %p117, %p118
    %p120 = scmp.ne.s32.totalorder %s106, %s107
    %p121 = scmp.eq.s32.totalorder %s19, 11
    %p122 = por %p120, %p121
    %p124 = scmp.ne.s32.totalorder %s107, %s123
    %p125 = scmp.eq.s32.totalorder %s19, 0
    %p126 = por %p124, %p125
    %s127 = ssub.s32 %s20, %s32
    %p128 = scmp.eq.s32.totalorder %s127, 0
    %s130 = sadd.s32 %s129, 1
    %s131 = scalar_select %p128, %s129, %s130
    %p134 = pneg %p128
    %p135 = scmp.eq.s32.totalorder %s13, 11
    %p136 = por %p134, %p135
    %p137 = scmp.ne.s32.totalorder %s129, %s132
    %p138 = scmp.eq.s32.totalorder %s13, 0
    %p139 = por %p137, %p138
    %p140 = scmp.ne.s32.totalorder %s129, %s132
    %p141 = scmp.eq.s32.totalorder %s18, 11
    %p142 = por %p140, %p141
    %p143 = scmp.ne.s32.totalorder %s132, %s133
    %p144 = scmp.eq.s32.totalorder %s18, 0
    %p145 = por %p143, %p144
    %p146 = scmp.ne.s32.totalorder %s132, %s133
    %p147 = scmp.eq.s32.totalorder %s19, 11
    %p148 = por %p146, %p147
    %p150 = scmp.ne.s32.totalorder %s133, %s149
    %p151 = scmp.eq.s32.totalorder %s19, 0
    %p152 = por %p150, %p151
    %s153 = ssub.s32 %s20, %s32
    %p154 = scmp.eq.s32.totalorder %s153, 0
    %s156 = sadd.s32 %s155, 1
    %s157 = scalar_select %p154, %s155, %s156
    %p160 = pneg %p154
    %p161 = scmp.eq.s32.totalorder %s13, 11
    %p162 = por %p160, %p161
    %p163 = scmp.ne.s32.totalorder %s155, %s158
    %p164 = scmp.eq.s32.totalorder %s13, 0
    %p165 = por %p163, %p164
    %p166 = scmp.ne.s32.totalorder %s155, %s158
    %p167 = scmp.eq.s32.totalorder %s18, 11
    %p168 = por %p166, %p167
    %p169 = scmp.ne.s32.totalorder %s158, %s159
    %p170 = scmp.eq.s32.totalorder %s18, 0
    %p171 = por %p169, %p170
    %p172 = scmp.ne.s32.totalorder %s158, %s159
    %p173 = scmp.eq.s32.totalorder %s19, 11
    %p174 = por %p172, %p173
    %p176 = scmp.ne.s32.totalorder %s159, %s175
    %p177 = scmp.eq.s32.totalorder %s19, 0
    %p178 = por %p176, %p177
    %s179 = ssub.s32 %s20, %s32
    %p180 = scmp.eq.s32.totalorder %s179, 0
    %s182 = sadd.s32 %s181, 1
    %s183 = scalar_select %p180, %s181, %s182
    %p186 = pneg %p180
    %p187 = scmp.eq.s32.totalorder %s13, 11
    %p188 = por %p186, %p187
    %p189 = scmp.ne.s32.totalorder %s181, %s184
    %p190 = scmp.eq.s32.totalorder %s13, 0
    %p191 = por %p189, %p190
    %p192 = scmp.ne.s32.totalorder %s181, %s184
    %p193 = scmp.eq.s32.totalorder %s18, 11
    %p194 = por %p192, %p193
    %p195 = scmp.ne.s32.totalorder %s184, %s185
    %p196 = scmp.eq.s32.totalorder %s18, 0
    %p197 = por %p195, %p196
    %p198 = scmp.ne.s32.totalorder %s184, %s185
    %p199 = scmp.eq.s32.totalorder %s19, 11
    %p200 = por %p198, %p199
    %p202 = scmp.ne.s32.totalorder %s185, %s201
    %p203 = scmp.eq.s32.totalorder %s19, 0
    %p204 = por %p202, %p203
    %s206 = sadd.s32 %s205, 1
    %p209 = scmp.eq.s32.totalorder %s13, 11
    %p210 = scmp.ne.s32.totalorder %s205, %s207
    %p211 = scmp.eq.s32.totalorder %s13, 0
    %p212 = por %p210, %p211
    %p213 = scmp.ne.s32.totalorder %s205, %s207
    %p214 = scmp.eq.s32.totalorder %s18, 11
    %p215 = por %p213, %p214
    %p216 = scmp.ne.s32.totalorder %s207, %s208
    %p217 = scmp.eq.s32.totalorder %s18, 0
    %p218 = por %p216, %p217
    %p219 = scmp.ne.s32.totalorder %s207, %s208
    %p220 = scmp.eq.s32.totalorder %s19, 11
    %p221 = por %p219, %p220
    %p223 = scmp.ne.s32.totalorder %s208, %s222
    %p224 = scmp.eq.s32.totalorder %s19, 0
    %p225 = por %p223, %p224
    %p226 = scmp.le.s32.totalorder 1, %s13
    %p227 = scmp.lt.s32.totalorder %s13, 13
    %p228 = pnand %p226, %p227
    %p229 = pneg %p228
    // Predicated region
    $region9: #{gin_net_forward.1} parent=5 // pred_check
      _
    $region10: #{gin_net_forward.1} parent=5 // pred_check_branch
      %231 = sbr.rel (%p228) target = $region12
    $region11: #{gin_net_forward.1} parent=5 // pred_region
      %s232 = ssub.s32 %s13, 1
      // Predicated region
      $region13: #{gin_net_forward.1} parent=11 // pred_check
        %p233 = pneg %p46
      $region14: #{gin_net_forward.1} parent=11 // pred_check_branch
        %235 = sbr.rel (%p233) target = $region16
      $region15: #{gin_net_forward.1} parent=11 // pred_region
        _
      $region16: #{gin_net_forward.1} parent=11 // pred_fallthru
        _
      // Predicated region
      $region17: #{gin_net_forward.1} parent=11 // pred_check
        %p236 = pneg %p67
      $region18: #{gin_net_forward.1} parent=11 // pred_check_branch
        %238 = sbr.rel (%p236) target = $region20
      $region19: #{gin_net_forward.1} parent=11 // pred_region
        _
      $region20: #{gin_net_forward.1} parent=11 // pred_fallthru
        _
    $region12: #{gin_net_forward.1} parent=5 // pred_fallthru
      _
    %p239 = scmp.lt.s32.totalorder %s13, 12
    // Predicated region
    $region21: #{gin_net_forward.1} parent=5 // pred_check
      %p240 = pneg %p239
    $region22: #{gin_net_forward.1} parent=5 // pred_check_branch
      %242 = sbr.rel (%p240) target = $region24
    $region23: #{gin_net_forward.1} parent=5 // pred_region
      // Predicated region
      $region25: #{gin_net_forward.1} parent=23 // pred_check
        %p243 = pneg %p87
      $region26: #{gin_net_forward.1} parent=23 // pred_check_branch
        %245 = sbr.rel (%p243) target = $region28
      $region27: #{gin_net_forward.1} parent=23 // pred_region
        %p246 = scmp.lt.s32.totalorder %s21, 3
        %s247 = scalar_select %p246, %s21, 3
        %s248 = smul.addr %s247, 4
        %s249 = scalar_lea.vmem %s2, %s248
      $region28: #{gin_net_forward.1} parent=23 // pred_fallthru
        _
      // Predicated region
      $region29: #{gin_net_forward.1} parent=23 // pred_check
        %p250 = pneg %p113
      $region30: #{gin_net_forward.1} parent=23 // pred_check_branch
        %252 = sbr.rel (%p250) target = $region32
      $region31: #{gin_net_forward.1} parent=23 // pred_region
        %p253 = scmp.lt.s32.totalorder %s20, 2
        %s254 = scalar_select %p253, %s20, 2
        %s255 = smul.addr %s254, 16
        %s256 = smul.addr %s255, 4
        %s257 = scalar_lea.vmem %s3, %s256
      $region32: #{gin_net_forward.1} parent=23 // pred_fallthru
        _
      // Predicated region
      $region33: #{gin_net_forward.1} parent=23 // pred_check
        %p258 = pneg %p139
      $region34: #{gin_net_forward.1} parent=23 // pred_check_branch
        %260 = sbr.rel (%p258) target = $region36
      $region35: #{gin_net_forward.1} parent=23 // pred_region
        %p261 = scmp.lt.s32.totalorder %s20, 2
        %s262 = scalar_select %p261, %s20, 2
        %s263 = scalar_lea.vmem %s4, %s262
      $region36: #{gin_net_forward.1} parent=23 // pred_fallthru
        _
      // Predicated region
      $region37: #{gin_net_forward.1} parent=23 // pred_check
        %p264 = pneg %p165
      $region38: #{gin_net_forward.1} parent=23 // pred_check_branch
        %266 = sbr.rel (%p264) target = $region40
      $region39: #{gin_net_forward.1} parent=23 // pred_region
        %p267 = scmp.lt.s32.totalorder %s20, 2
        %s268 = scalar_select %p267, %s20, 2
        %s269 = smul.addr %s268, 16
        %s270 = smul.addr %s269, 4
        %s271 = scalar_lea.vmem %s5, %s270
      $region40: #{gin_net_forward.1} parent=23 // pred_fallthru
        _
      // Predicated region
      $region41: #{gin_net_forward.1} parent=23 // pred_check
        %p272 = pneg %p191
      $region42: #{gin_net_forward.1} parent=23 // pred_check_branch
        %274 = sbr.rel (%p272) target = $region44
      $region43: #{gin_net_forward.1} parent=23 // pred_region
        %p275 = scmp.lt.s32.totalorder %s20, 2
        %s276 = scalar_select %p275, %s20, 2
        %s277 = scalar_lea.vmem %s6, %s276
      $region44: #{gin_net_forward.1} parent=23 // pred_fallthru
        _
    $region24: #{gin_net_forward.1} parent=5 // pred_fallthru
      _
    %p278 = scmp.le.s32.totalorder 1, %s13
    %p279 = scmp.lt.s32.totalorder %s13, 13
    %p280 = pnand %p278, %p279
    %p281 = pneg %p280
    // Predicated region
    $region45: #{gin_net_forward.1} parent=5 // pred_check
      _
    $region46: #{gin_net_forward.1} parent=5 // pred_check_branch
      %283 = sbr.rel (%p280) target = $region48
    $region47: #{gin_net_forward.1} parent=5 // pred_region
      %s284 = ssub.s32 %s13, 1
      %p285 = pneg %p46
      %p286 = pneg %p43
      %p287 = pneg %p67
      %p288 = pneg %p64
      %p289 = scmp.lt.s32.totalorder %s23, 3
      %s290 = scalar_select %p289, %s23, 3
      %s291 = smul.addr %s290, 4
      %s292 = scalar_lea.vmem %s2, %s291
      %p293 = pneg %p93
      %p294 = pneg %p90
      %p295 = scmp.lt.s32.totalorder %s22, 2
      %s296 = scalar_select %p295, %s22, 2
      %s297 = smul.addr %s296, 16
      %s298 = smul.addr %s297, 4
      %s299 = scalar_lea.vmem %s3, %s298
      %p300 = pneg %p119
      %p301 = pneg %p116
      %p302 = scmp.lt.s32.totalorder %s22, 2
      %s303 = scalar_select %p302, %s22, 2
      %s304 = scalar_lea.vmem %s4, %s303
      %p305 = pneg %p145
      %p306 = pneg %p142
      %p307 = scmp.lt.s32.totalorder %s22, 2
      %s308 = scalar_select %p307, %s22, 2
      %s309 = smul.addr %s308, 16
      %s310 = smul.addr %s309, 4
      %s311 = scalar_lea.vmem %s5, %s310
      %p312 = pneg %p171
      %p313 = pneg %p168
      %p314 = scmp.lt.s32.totalorder %s22, 2
      %s315 = scalar_select %p314, %s22, 2
      %s316 = scalar_lea.vmem %s6, %s315
      %p317 = pneg %p197
      %p318 = pneg %p194
      %p319 = pneg %p218
      %p320 = pneg %p215
      %p321 = scmp.lt.s32.totalorder %s23, 3
      %s322 = scalar_select %p321, %s23, 3
      %s323 = smul.addr %s322, 4
      %s324 = scalar_lea.vmem %s2, %s323
      %p325 = scmp.lt.s32.totalorder %s22, 2
      %s326 = scalar_select %p325, %s22, 2
      %s327 = smul.addr %s326, 16
      %s328 = smul.addr %s327, 4
      %s329 = scalar_lea.vmem %s3, %s328
      %p330 = scmp.lt.s32.totalorder %s22, 2
      %s331 = scalar_select %p330, %s22, 2
      %s332 = scalar_lea.vmem %s4, %s331
      %p333 = scmp.lt.s32.totalorder %s22, 2
      %s334 = scalar_select %p333, %s22, 2
      %s335 = smul.addr %s334, 16
      %s336 = smul.addr %s335, 4
      %s337 = scalar_lea.vmem %s5, %s336
      %p338 = scmp.lt.s32.totalorder %s22, 2
      %s339 = scalar_select %p338, %s22, 2
      %s340 = scalar_lea.vmem %s6, %s339
      %p341 = scmp.eq.s32.totalorder %s22, 0
      %p342 = scmp.eq.s32.totalorder %s23, 0
      %p343 = pnand %p341, %p342
      %p344 = pneg %p343
      // Predicated region
      $region49: #{gin_net_forward.1} parent=47 // pred_check
        _
      $region50: #{gin_net_forward.1} parent=47 // pred_check_branch
        %346 = sbr.rel (%p343) target = $region52
      $region51: #{gin_net_forward.1} parent=47 // pred_region
        %347 = vst [vmem:[%s7] sm:$0xff] 0.0
        %v348 = vld [vmem:[%s1] sm:$0xf]
        %v349 = vld [vmem:[%s1 + $0x4] sm:$0xf]
        %v350 = vld [vmem:[%s1 + $0x8] sm:$0xf]
        %v351 = vld [vmem:[%s1 + $0xc] sm:$0xf]
        %v352 = vld [vmem:[%s1 + $0x10] sm:$0xf]
        %v353 = vld [vmem:[%s1 + $0x14] sm:$0xf]
        %v354 = vld [vmem:[%s1 + $0x18] sm:$0xf]
        %v355 = vld [vmem:[%s1 + $0x1c] sm:$0xf]
        %v356 = vld [vmem:[%s1 + $0x20] sm:$0xf]
        %v357 = vld [vmem:[%s1 + $0x24] sm:$0xf]
        %v358 = vld [vmem:[%s1 + $0x28] sm:$0xf]
        %v359 = vld [vmem:[%s1 + $0x2c] sm:$0xf]
        %v360 = vld [vmem:[%s1 + $0x30] sm:$0xf]
        %v361 = vld [vmem:[%s1 + $0x34] sm:$0xf]
        %v362 = vld [vmem:[%s1 + $0x38] sm:$0xf]
        %v363 = vld [vmem:[%s1 + $0x3c] sm:$0xf]
        %v364 = vld [vmem:[%s1 + $0x40] sm:$0xf]
        %v365 = vld [vmem:[%s1 + $0x44] sm:$0xf]
        %v366 = vld [vmem:[%s1 + $0x48] sm:$0xf]
        %v367 = vld [vmem:[%s1 + $0x4c] sm:$0xf]
        %v368 = vld [vmem:[%s1 + $0x50] sm:$0xf]
        %v369 = vld [vmem:[%s1 + $0x54] sm:$0xf]
        %v370 = vld [vmem:[%s1 + $0x58] sm:$0xf]
        %v371 = vld [vmem:[%s1 + $0x5c] sm:$0xf]
        %v372 = vld [vmem:[%s1 + $0x60] sm:$0xf]
        %v373 = vld [vmem:[%s1 + $0x64] sm:$0xf]
        %v374 = vld [vmem:[%s1 + $0x68] sm:$0xf]
        %v375 = vld [vmem:[%s1 + $0x6c] sm:$0xf]
        %v376 = vld [vmem:[%s1 + $0x70] sm:$0xf]
        %v377 = vld [vmem:[%s1 + $0x74] sm:$0xf]
        %v378 = vld [vmem:[%s1 + $0x78] sm:$0xf]
        %v379 = vld [vmem:[%s1 + $0x7c] sm:$0xf]
        %v380 = vld [vmem:[%s1 + $0x80] sm:$0xf]
        %v381 = vld [vmem:[%s1 + $0x84] sm:$0xf]
        %v382 = vld [vmem:[%s1 + $0x88] sm:$0xf]
        %v383 = vld [vmem:[%s1 + $0x8c] sm:$0xf]
        %v384 = vld [vmem:[%s1 + $0x90] sm:$0xf]
        %v385 = vld [vmem:[%s1 + $0x94] sm:$0xf]
        %v386 = vld [vmem:[%s1 + $0x98] sm:$0xf]
        %v387 = vld [vmem:[%s1 + $0x9c] sm:$0xf]
        %v388 = vld [vmem:[%s1 + $0xa0] sm:$0xf]
        %v389 = vld [vmem:[%s1 + $0xa4] sm:$0xf]
        %v390 = vld [vmem:[%s1 + $0xa8] sm:$0xf]
        %v391 = vld [vmem:[%s1 + $0xac] sm:$0xf]
        %v392 = vld [vmem:[%s1 + $0xb0] sm:$0xf]
        %v393 = vld [vmem:[%s1 + $0xb4] sm:$0xf]
        %v394 = vld [vmem:[%s1 + $0xb8] sm:$0xf]
        %v395 = vld [vmem:[%s1 + $0xbc] sm:$0xf]
        %v396 = vld [vmem:[%s1 + $0xc0] sm:$0xf]
        %v397 = vld [vmem:[%s1 + $0xc4] sm:$0xf]
        %v398 = vld [vmem:[%s1 + $0xc8] sm:$0xf]
        %v399 = vld [vmem:[%s1 + $0xcc] sm:$0xf]
        %v400 = vld [vmem:[%s1 + $0xd0] sm:$0xf]
        %v401 = vld [vmem:[%s1 + $0xd4] sm:$0xf]
        %v402 = vld [vmem:[%s1 + $0xd8] sm:$0xf]
        %v403 = vld [vmem:[%s1 + $0xdc] sm:$0xf]
        %v404 = vld [vmem:[%s1 + $0xe0] sm:$0xf]
        %v405 = vld [vmem:[%s1 + $0xe4] sm:$0xf]
        %v406 = vld [vmem:[%s1 + $0xe8] sm:$0xf]
        %v407 = vld [vmem:[%s1 + $0xec] sm:$0xf]
        %v408 = vld [vmem:[%s1 + $0xf0] sm:$0xf]
        %v409 = vld [vmem:[%s1 + $0xf4] sm:$0xf]
        %v410 = vld [vmem:[%s1 + $0xf8] sm:$0xf]
        %v411 = vld [vmem:[%s1 + $0xfc] sm:$0xf]
        %412 = vst [vmem:[#allocation2 + $0x100] sm:$0xf] %v348
        %413 = vst [vmem:[#allocation2 + $0x104] sm:$0xf] %v349
        %414 = vst [vmem:[#allocation2 + $0x108] sm:$0xf] %v350
        %415 = vst [vmem:[#allocation2 + $0x10c] sm:$0xf] %v351
        %416 = vst [vmem:[#allocation2 + $0x110] sm:$0xf] %v352
        %417 = vst [vmem:[#allocation2 + $0x114] sm:$0xf] %v353
        %418 = vst [vmem:[#allocation2 + $0x118] sm:$0xf] %v354
        %419 = vst [vmem:[#allocation2 + $0x11c] sm:$0xf] %v355
        %420 = vst [vmem:[#allocation2 + $0x120] sm:$0xf] %v356
        %421 = vst [vmem:[#allocation2 + $0x124] sm:$0xf] %v357
        %422 = vst [vmem:[#allocation2 + $0x128] sm:$0xf] %v358
        %423 = vst [vmem:[#allocation2 + $0x12c] sm:$0xf] %v359
        %424 = vst [vmem:[#allocation2 + $0x130] sm:$0xf] %v360
        %425 = vst [vmem:[#allocation2 + $0x134] sm:$0xf] %v361
        %426 = vst [vmem:[#allocation2 + $0x138] sm:$0xf] %v362
        %427 = vst [vmem:[#allocation2 + $0x13c] sm:$0xf] %v363
        %428 = vst [vmem:[#allocation2 + $0x140] sm:$0xf] %v364
        %429 = vst [vmem:[#allocation2 + $0x144] sm:$0xf] %v365
        %430 = vst [vmem:[#allocation2 + $0x148] sm:$0xf] %v366
        %431 = vst [vmem:[#allocation2 + $0x14c] sm:$0xf] %v367
        %432 = vst [vmem:[#allocation2 + $0x150] sm:$0xf] %v368
        %433 = vst [vmem:[#allocation2 + $0x154] sm:$0xf] %v369
        %434 = vst [vmem:[#allocation2 + $0x158] sm:$0xf] %v370
        %435 = vst [vmem:[#allocation2 + $0x15c] sm:$0xf] %v371
        %436 = vst [vmem:[#allocation2 + $0x160] sm:$0xf] %v372
        %437 = vst [vmem:[#allocation2 + $0x164] sm:$0xf] %v373
        %438 = vst [vmem:[#allocation2 + $0x168] sm:$0xf] %v374
        %439 = vst [vmem:[#allocation2 + $0x16c] sm:$0xf] %v375
        %440 = vst [vmem:[#allocation2 + $0x170] sm:$0xf] %v376
        %441 = vst [vmem:[#allocation2 + $0x174] sm:$0xf] %v377
        %442 = vst [vmem:[#allocation2 + $0x178] sm:$0xf] %v378
        %443 = vst [vmem:[#allocation2 + $0x17c] sm:$0xf] %v379
        %444 = vst [vmem:[#allocation2 + $0x180] sm:$0xf] %v380
        %445 = vst [vmem:[#allocation2 + $0x184] sm:$0xf] %v381
        %446 = vst [vmem:[#allocation2 + $0x188] sm:$0xf] %v382
        %447 = vst [vmem:[#allocation2 + $0x18c] sm:$0xf] %v383
        %448 = vst [vmem:[#allocation2 + $0x190] sm:$0xf] %v384
        %449 = vst [vmem:[#allocation2 + $0x194] sm:$0xf] %v385
        %450 = vst [vmem:[#allocation2 + $0x198] sm:$0xf] %v386
        %451 = vst [vmem:[#allocation2 + $0x19c] sm:$0xf] %v387
        %452 = vst [vmem:[#allocation2 + $0x1a0] sm:$0xf] %v388
        %453 = vst [vmem:[#allocation2 + $0x1a4] sm:$0xf] %v389
        %454 = vst [vmem:[#allocation2 + $0x1a8] sm:$0xf] %v390
        %455 = vst [vmem:[#allocation2 + $0x1ac] sm:$0xf] %v391
        %456 = vst [vmem:[#allocation2 + $0x1b0] sm:$0xf] %v392
        %457 = vst [vmem:[#allocation2 + $0x1b4] sm:$0xf] %v393
        %458 = vst [vmem:[#allocation2 + $0x1b8] sm:$0xf] %v394
        %459 = vst [vmem:[#allocation2 + $0x1bc] sm:$0xf] %v395
        %460 = vst [vmem:[#allocation2 + $0x1c0] sm:$0xf] %v396
        %461 = vst [vmem:[#allocation2 + $0x1c4] sm:$0xf] %v397
        %462 = vst [vmem:[#allocation2 + $0x1c8] sm:$0xf] %v398
        %463 = vst [vmem:[#allocation2 + $0x1cc] sm:$0xf] %v399
        %464 = vst [vmem:[#allocation2 + $0x1d0] sm:$0xf] %v400
        %465 = vst [vmem:[#allocation2 + $0x1d4] sm:$0xf] %v401
        %466 = vst [vmem:[#allocation2 + $0x1d8] sm:$0xf] %v402
        %467 = vst [vmem:[#allocation2 + $0x1dc] sm:$0xf] %v403
        %468 = vst [vmem:[#allocation2 + $0x1e0] sm:$0xf] %v404
        %469 = vst [vmem:[#allocation2 + $0x1e4] sm:$0xf] %v405
        %470 = vst [vmem:[#allocation2 + $0x1e8] sm:$0xf] %v406
        %471 = vst [vmem:[#allocation2 + $0x1ec] sm:$0xf] %v407
        %472 = vst [vmem:[#allocation2 + $0x1f0] sm:$0xf] %v408
        %473 = vst [vmem:[#allocation2 + $0x1f4] sm:$0xf] %v409
        %474 = vst [vmem:[#allocation2 + $0x1f8] sm:$0xf] %v410
        %475 = vst [vmem:[#allocation2 + $0x1fc] sm:$0xf] %v411
      $region52: #{gin_net_forward.1} parent=47 // pred_fallthru
        _
      %s476 = sadd.s32 %s22, 1
      %p477 = scmp.lt.s32.totalorder %s476, 0
      %s478 = ssub.s32 0, %s476
      %s479 = scalar_select %p477, %s478, %s476
      %s480 = sand.u32 %s479, 1
      %s481 = ssub.s32 0, %s480
      %s482 = scalar_select %p477, %s481, %s480
      %p483 = scmp.ne.s32.totalorder %s482, 0
      %p484 = scmp.lt.s32.totalorder %s482, 0
      %p485 = pnand %p484, %p483
      %p486 = pneg %p485
      %s487 = sadd.s32 %s482, 2
      %s488 = scalar_select %p486, %s487, %s482
      %s489 = smul.u32 %s488, 512
      %s490 = sshra.s32 %s489, 3
      %s491 = sand.u32 %s489, 7
      %s492 = smul.addr %s490, 4
      %s493 = scalar_lea.vmem [#allocation2], %s492
      %v494 = vld [vmem:[%s493] sm:$0xf]
      %v495 = vld [vmem:[%s493 + $0x4] sm:$0xf]
      %v496 = vld [vmem:[%s493 + $0x8] sm:$0xf]
      %v497 = vld [vmem:[%s493 + $0xc] sm:$0xf]
      %v498 = vld [vmem:[%s493 + $0x10] sm:$0xf]
      %v499 = vld [vmem:[%s493 + $0x14] sm:$0xf]
      %v500 = vld [vmem:[%s493 + $0x18] sm:$0xf]
      %v501 = vld [vmem:[%s493 + $0x1c] sm:$0xf]
      %v502 = vld [vmem:[%s493 + $0x20] sm:$0xf]
      %v503 = vld [vmem:[%s493 + $0x24] sm:$0xf]
      %v504 = vld [vmem:[%s493 + $0x28] sm:$0xf]
      %v505 = vld [vmem:[%s493 + $0x2c] sm:$0xf]
      %v506 = vld [vmem:[%s493 + $0x30] sm:$0xf]
      %v507 = vld [vmem:[%s493 + $0x34] sm:$0xf]
      %v508 = vld [vmem:[%s493 + $0x38] sm:$0xf]
      %v509 = vld [vmem:[%s493 + $0x3c] sm:$0xf]
      %v510 = vld [vmem:[%s493 + $0x40] sm:$0xf]
      %v511 = vld [vmem:[%s493 + $0x44] sm:$0xf]
      %v512 = vld [vmem:[%s493 + $0x48] sm:$0xf]
      %v513 = vld [vmem:[%s493 + $0x4c] sm:$0xf]
      %v514 = vld [vmem:[%s493 + $0x50] sm:$0xf]
      %v515 = vld [vmem:[%s493 + $0x54] sm:$0xf]
      %v516 = vld [vmem:[%s493 + $0x58] sm:$0xf]
      %v517 = vld [vmem:[%s493 + $0x5c] sm:$0xf]
      %v518 = vld [vmem:[%s493 + $0x60] sm:$0xf]
      %v519 = vld [vmem:[%s493 + $0x64] sm:$0xf]
      %v520 = vld [vmem:[%s493 + $0x68] sm:$0xf]
      %v521 = vld [vmem:[%s493 + $0x6c] sm:$0xf]
      %v522 = vld [vmem:[%s493 + $0x70] sm:$0xf]
      %v523 = vld [vmem:[%s493 + $0x74] sm:$0xf]
      %v524 = vld [vmem:[%s493 + $0x78] sm:$0xf]
      %v525 = vld [vmem:[%s493 + $0x7c] sm:$0xf]
      %v526 = vld [vmem:[%s493 + $0x80] sm:$0xf]
      %v527 = vld [vmem:[%s493 + $0x84] sm:$0xf]
      %v528 = vld [vmem:[%s493 + $0x88] sm:$0xf]
      %v529 = vld [vmem:[%s493 + $0x8c] sm:$0xf]
      %v530 = vld [vmem:[%s493 + $0x90] sm:$0xf]
      %v531 = vld [vmem:[%s493 + $0x94] sm:$0xf]
      %v532 = vld [vmem:[%s493 + $0x98] sm:$0xf]
      %v533 = vld [vmem:[%s493 + $0x9c] sm:$0xf]
      %v534 = vld [vmem:[%s493 + $0xa0] sm:$0xf]
      %v535 = vld [vmem:[%s493 + $0xa4] sm:$0xf]
      %v536 = vld [vmem:[%s493 + $0xa8] sm:$0xf]
      %v537 = vld [vmem:[%s493 + $0xac] sm:$0xf]
      %v538 = vld [vmem:[%s493 + $0xb0] sm:$0xf]
      %v539 = vld [vmem:[%s493 + $0xb4] sm:$0xf]
      %v540 = vld [vmem:[%s493 + $0xb8] sm:$0xf]
      %v541 = vld [vmem:[%s493 + $0xbc] sm:$0xf]
      %v542 = vld [vmem:[%s493 + $0xc0] sm:$0xf]
      %v543 = vld [vmem:[%s493 + $0xc4] sm:$0xf]
      %v544 = vld [vmem:[%s493 + $0xc8] sm:$0xf]
      %v545 = vld [vmem:[%s493 + $0xcc] sm:$0xf]
      %v546 = vld [vmem:[%s493 + $0xd0] sm:$0xf]
      %v547 = vld [vmem:[%s493 + $0xd4] sm:$0xf]
      %v548 = vld [vmem:[%s493 + $0xd8] sm:$0xf]
      %v549 = vld [vmem:[%s493 + $0xdc] sm:$0xf]
      %v550 = vld [vmem:[%s493 + $0xe0] sm:$0xf]
      %v551 = vld [vmem:[%s493 + $0xe4] sm:$0xf]
      %v552 = vld [vmem:[%s493 + $0xe8] sm:$0xf]
      %v553 = vld [vmem:[%s493 + $0xec] sm:$0xf]
      %v554 = vld [vmem:[%s493 + $0xf0] sm:$0xf]
      %v555 = vld [vmem:[%s493 + $0xf4] sm:$0xf]
      %v556 = vld [vmem:[%s493 + $0xf8] sm:$0xf]
      %v557 = vld [vmem:[%s493 + $0xfc] sm:$0xf]
      %s558 = smul.u32 %s23, 128
      %s559 = sshra.s32 %s558, 3
      %s560 = sand.u32 %s558, 7
      %s561 = smul.u32 %s559, 4
      %s562 = smul.addr %s561, 4
      %s563 = scalar_lea.vmem %s0, %s562
      %v564 = vld [vmem:[%s563] sm:$0xff]
      %v565 = vld [vmem:[%s563 + $0x8] sm:$0xff]
      %v566 = vld [vmem:[%s563 + $0x10] sm:$0xff]
      %v567 = vld [vmem:[%s563 + $0x18] sm:$0xff]
      %v568 = vld [vmem:[%s563 + $0x20] sm:$0xff]
      %v569 = vld [vmem:[%s563 + $0x28] sm:$0xff]
      %v570 = vld [vmem:[%s563 + $0x30] sm:$0xff]
      %v571 = vld [vmem:[%s563 + $0x38] sm:$0xff]
      %v572 = vld [vmem:[%s563 + $0x40] sm:$0xff]
      %v573 = vld [vmem:[%s563 + $0x48] sm:$0xff]
      %v574 = vld [vmem:[%s563 + $0x50] sm:$0xff]
      %v575 = vld [vmem:[%s563 + $0x58] sm:$0xff]
      %v576 = vld [vmem:[%s563 + $0x60] sm:$0xff]
      %v577 = vld [vmem:[%s563 + $0x68] sm:$0xff]
      %v578 = vld [vmem:[%s563 + $0x70] sm:$0xff]
      %v579 = vld [vmem:[%s563 + $0x78] sm:$0xff]
      %v580 = vld [vmem:[%s563 + $0x80] sm:$0xff]
      %v581 = vld [vmem:[%s563 + $0x88] sm:$0xff]
      %v582 = vld [vmem:[%s563 + $0x90] sm:$0xff]
      %v583 = vld [vmem:[%s563 + $0x98] sm:$0xff]
      %v584 = vld [vmem:[%s563 + $0xa0] sm:$0xff]
      %v585 = vld [vmem:[%s563 + $0xa8] sm:$0xff]
      %v586 = vld [vmem:[%s563 + $0xb0] sm:$0xff]
      %v587 = vld [vmem:[%s563 + $0xb8] sm:$0xff]
      %v588 = vld [vmem:[%s563 + $0xc0] sm:$0xff]
      %v589 = vld [vmem:[%s563 + $0xc8] sm:$0xff]
      %v590 = vld [vmem:[%s563 + $0xd0] sm:$0xff]
      %v591 = vld [vmem:[%s563 + $0xd8] sm:$0xff]
      %v592 = vld [vmem:[%s563 + $0xe0] sm:$0xff]
      %v593 = vld [vmem:[%s563 + $0xe8] sm:$0xff]
      %v594 = vld [vmem:[%s563 + $0xf0] sm:$0xff]
      %v595 = vld [vmem:[%s563 + $0xf8] sm:$0xff]
      %v628 = vunpack.c.l.b16 %v564
      %v629 = vunpack.c.h.b16 %v564
      %v630 = vunpack.c.l.b16 %v565
      %v631 = vunpack.c.h.b16 %v565
      %v632 = vunpack.c.l.b16 %v566
      %v633 = vunpack.c.h.b16 %v566
      %v634 = vunpack.c.l.b16 %v567
      %v635 = vunpack.c.h.b16 %v567
      %v636 = vunpack.c.l.b16 %v568
      %v637 = vunpack.c.h.b16 %v568
      %v638 = vunpack.c.l.b16 %v569
      %v639 = vunpack.c.h.b16 %v569
      %v640 = vunpack.c.l.b16 %v570
      %v641 = vunpack.c.h.b16 %v570
      %v642 = vunpack.c.l.b16 %v571
      %v643 = vunpack.c.h.b16 %v571
      %v644 = vunpack.c.l.b16 %v572
      %v645 = vunpack.c.h.b16 %v572
      %v646 = vunpack.c.l.b16 %v573
      %v647 = vunpack.c.h.b16 %v573
      %v648 = vunpack.c.l.b16 %v574
      %v649 = vunpack.c.h.b16 %v574
      %v650 = vunpack.c.l.b16 %v575
      %v651 = vunpack.c.h.b16 %v575
      %v652 = vunpack.c.l.b16 %v576
      %v653 = vunpack.c.h.b16 %v576
      %v654 = vunpack.c.l.b16 %v577
      %v655 = vunpack.c.h.b16 %v577
      %v656 = vunpack.c.l.b16 %v578
      %v657 = vunpack.c.h.b16 %v578
      %v658 = vunpack.c.l.b16 %v579
      %v659 = vunpack.c.h.b16 %v579
      %v660 = vunpack.c.l.b16 %v580
      %v661 = vunpack.c.h.b16 %v580
      %v662 = vunpack.c.l.b16 %v581
      %v663 = vunpack.c.h.b16 %v581
      %v664 = vunpack.c.l.b16 %v582
      %v665 = vunpack.c.h.b16 %v582
      %v666 = vunpack.c.l.b16 %v583
      %v667 = vunpack.c.h.b16 %v583
      %v668 = vunpack.c.l.b16 %v584
      %v669 = vunpack.c.h.b16 %v584
      %v670 = vunpack.c.l.b16 %v585
      %v671 = vunpack.c.h.b16 %v585
      %v672 = vunpack.c.l.b16 %v586
      %v673 = vunpack.c.h.b16 %v586
      %v674 = vunpack.c.l.b16 %v587
      %v675 = vunpack.c.h.b16 %v587
      %v676 = vunpack.c.l.b16 %v588
      %v677 = vunpack.c.h.b16 %v588
      %v678 = vunpack.c.l.b16 %v589
      %v679 = vunpack.c.h.b16 %v589
      %v680 = vunpack.c.l.b16 %v590
      %v681 = vunpack.c.h.b16 %v590
      %v682 = vunpack.c.l.b16 %v591
      %v683 = vunpack.c.h.b16 %v591
      %v684 = vunpack.c.l.b16 %v592
      %v685 = vunpack.c.h.b16 %v592
      %v686 = vunpack.c.l.b16 %v593
      %v687 = vunpack.c.h.b16 %v593
      %v688 = vunpack.c.l.b16 %v594
      %v689 = vunpack.c.h.b16 %v594
      %v690 = vunpack.c.l.b16 %v595
      %v691 = vunpack.c.h.b16 %v595
      %v692 = vpack.c.b16 %v632, %v628
      %v693 = vpack.c.b16 %v633, %v629
      %v694 = vpack.c.b16 %v634, %v630
      %v695 = vpack.c.b16 %v635, %v631
      %v696 = vpack.c.b16 %v640, %v636
      %v697 = vpack.c.b16 %v641, %v637
      %v698 = vpack.c.b16 %v642, %v638
      %v699 = vpack.c.b16 %v643, %v639
      %v700 = vpack.c.b16 %v648, %v644
      %v701 = vpack.c.b16 %v649, %v645
      %v702 = vpack.c.b16 %v650, %v646
      %v703 = vpack.c.b16 %v651, %v647
      %v704 = vpack.c.b16 %v656, %v652
      %v705 = vpack.c.b16 %v657, %v653
      %v706 = vpack.c.b16 %v658, %v654
      %v707 = vpack.c.b16 %v659, %v655
      %v708 = vpack.c.b16 %v664, %v660
      %v709 = vpack.c.b16 %v665, %v661
      %v710 = vpack.c.b16 %v666, %v662
      %v711 = vpack.c.b16 %v667, %v663
      %v712 = vpack.c.b16 %v672, %v668
      %v713 = vpack.c.b16 %v673, %v669
      %v714 = vpack.c.b16 %v674, %v670
      %v715 = vpack.c.b16 %v675, %v671
      %v716 = vpack.c.b16 %v680, %v676
      %v717 = vpack.c.b16 %v681, %v677
      %v718 = vpack.c.b16 %v682, %v678
      %v719 = vpack.c.b16 %v683, %v679
      %v720 = vpack.c.b16 %v688, %v684
      %v721 = vpack.c.b16 %v689, %v685
      %v722 = vpack.c.b16 %v690, %v686
      %v723 = vpack.c.b16 %v691, %v687
      %v820 = vunpack.c.l.b16 %v494
      %v821 = vunpack.c.l.b16 %v495
      %v822 = vunpack.c.l.b16 %v496
      %v823 = vunpack.c.l.b16 %v497
      %v824 = vunpack.c.l.b16 %v498
      %v825 = vunpack.c.l.b16 %v499
      %v826 = vunpack.c.l.b16 %v500
      %v827 = vunpack.c.l.b16 %v501
      %v828 = vunpack.c.l.b16 %v502
      %v829 = vunpack.c.l.b16 %v503
      %v830 = vunpack.c.l.b16 %v504
      %v831 = vunpack.c.l.b16 %v505
      %v832 = vunpack.c.l.b16 %v506
      %v833 = vunpack.c.l.b16 %v507
      %v834 = vunpack.c.l.b16 %v508
      %v835 = vunpack.c.l.b16 %v509
      %v836 = vunpack.c.l.b16 %v510
      %v837 = vunpack.c.l.b16 %v511
      %v838 = vunpack.c.l.b16 %v512
      %v839 = vunpack.c.l.b16 %v513
      %v840 = vunpack.c.l.b16 %v514
      %v841 = vunpack.c.l.b16 %v515
      %v842 = vunpack.c.l.b16 %v516
      %v843 = vunpack.c.l.b16 %v517
      %v844 = vunpack.c.l.b16 %v518
      %v845 = vunpack.c.l.b16 %v519
      %v846 = vunpack.c.l.b16 %v520
      %v847 = vunpack.c.l.b16 %v521
      %v848 = vunpack.c.l.b16 %v522
      %v849 = vunpack.c.l.b16 %v523
      %v850 = vunpack.c.l.b16 %v524
      %v851 = vunpack.c.l.b16 %v525
      %v852 = vunpack.c.l.b16 %v526
      %v853 = vunpack.c.l.b16 %v527
      %v854 = vunpack.c.l.b16 %v528
      %v855 = vunpack.c.l.b16 %v529
      %v856 = vunpack.c.l.b16 %v530
      %v857 = vunpack.c.l.b16 %v531
      %v858 = vunpack.c.l.b16 %v532
      %v859 = vunpack.c.l.b16 %v533
      %v860 = vunpack.c.l.b16 %v534
      %v861 = vunpack.c.l.b16 %v535
      %v862 = vunpack.c.l.b16 %v536
      %v863 = vunpack.c.l.b16 %v537
      %v864 = vunpack.c.l.b16 %v538
      %v865 = vunpack.c.l.b16 %v539
      %v866 = vunpack.c.l.b16 %v540
      %v867 = vunpack.c.l.b16 %v541
      %v868 = vunpack.c.l.b16 %v542
      %v869 = vunpack.c.l.b16 %v543
      %v870 = vunpack.c.l.b16 %v544
      %v871 = vunpack.c.l.b16 %v545
      %v872 = vunpack.c.l.b16 %v546
      %v873 = vunpack.c.l.b16 %v547
      %v874 = vunpack.c.l.b16 %v548
      %v875 = vunpack.c.l.b16 %v549
      %v876 = vunpack.c.l.b16 %v550
      %v877 = vunpack.c.l.b16 %v551
      %v878 = vunpack.c.l.b16 %v552
      %v879 = vunpack.c.l.b16 %v553
      %v880 = vunpack.c.l.b16 %v554
      %v881 = vunpack.c.l.b16 %v555
      %v882 = vunpack.c.l.b16 %v556
      %v883 = vunpack.c.l.b16 %v557
      %v884 = vpack.c.b16 %v821, %v820
      %v885 = vpack.c.b16 %v823, %v822
      %v886 = vpack.c.b16 %v825, %v824
      %v887 = vpack.c.b16 %v827, %v826
      %v888 = vpack.c.b16 %v829, %v828
      %v889 = vpack.c.b16 %v831, %v830
      %v890 = vpack.c.b16 %v833, %v832
      %v891 = vpack.c.b16 %v835, %v834
      %v892 = vpack.c.b16 %v837, %v836
      %v893 = vpack.c.b16 %v839, %v838
      %v894 = vpack.c.b16 %v841, %v840
      %v895 = vpack.c.b16 %v843, %v842
      %v896 = vpack.c.b16 %v845, %v844
      %v897 = vpack.c.b16 %v847, %v846
      %v898 = vpack.c.b16 %v849, %v848
      %v899 = vpack.c.b16 %v851, %v850
      %v900 = vpack.c.b16 %v853, %v852
      %v901 = vpack.c.b16 %v855, %v854
      %v902 = vpack.c.b16 %v857, %v856
      %v903 = vpack.c.b16 %v859, %v858
      %v904 = vpack.c.b16 %v861, %v860
      %v905 = vpack.c.b16 %v863, %v862
      %v906 = vpack.c.b16 %v865, %v864
      %v907 = vpack.c.b16 %v867, %v866
      %v908 = vpack.c.b16 %v869, %v868
      %v909 = vpack.c.b16 %v871, %v870
      %v910 = vpack.c.b16 %v873, %v872
      %v911 = vpack.c.b16 %v875, %v874
      %v912 = vpack.c.b16 %v877, %v876
      %v913 = vpack.c.b16 %v879, %v878
      %v914 = vpack.c.b16 %v881, %v880
      %v915 = vpack.c.b16 %v883, %v882
      %948 = vmatpush.bf16.msra.mxu0 %v891
      %949 = vmatpush.bf16.msra.mxu0 %v890
      %950 = vmatpush.bf16.msra.mxu0 %v889
      %951 = vmatpush.bf16.msra.mxu0 %v888
      %952 = vmatpush.bf16.msra.mxu0 %v887
      %953 = vmatpush.bf16.msra.mxu0 %v886
      %954 = vmatpush.bf16.msra.mxu0 %v885
      %955 = vmatpush.bf16.msra.mxu0 %v884
      %956 = vmatmul.bf16.gmra.mxu0 %v692
      %v957 = vpop.f32.mrf.mxu0
      %v958 = vadd.f32 0.0, %v957
      %v959 = vpop.f32.mrf.mxu0
      %v960 = vadd.f32 0.0, %v959
      %961 = vmatmul.bf16.gmra.mxu0 %v696
      %v962 = vpop.f32.mrf.mxu0
      %v963 = vadd.f32 0.0, %v962
      %v964 = vpop.f32.mrf.mxu0
      %v965 = vadd.f32 0.0, %v964
      %966 = vmatmul.bf16.gmra.mxu0 %v700
      %v967 = vpop.f32.mrf.mxu0
      %v968 = vadd.f32 0.0, %v967
      %v969 = vpop.f32.mrf.mxu0
      %v970 = vadd.f32 0.0, %v969
      %971 = vmatmul.bf16.gmra.mxu0 %v704
      %v972 = vpop.f32.mrf.mxu0
      %v973 = vadd.f32 0.0, %v972
      %v974 = vpop.f32.mrf.mxu0
      %v975 = vadd.f32 0.0, %v974
      %976 = vmatmul.bf16.gmra.mxu0 %v708
      %v977 = vpop.f32.mrf.mxu0
      %v978 = vadd.f32 0.0, %v977
      %v979 = vpop.f32.mrf.mxu0
      %v980 = vadd.f32 0.0, %v979
      %981 = vmatmul.bf16.gmra.mxu0 %v712
      %v982 = vpop.f32.mrf.mxu0
      %v983 = vadd.f32 0.0, %v982
      %v984 = vpop.f32.mrf.mxu0
      %v985 = vadd.f32 0.0, %v984
      %986 = vmatmul.bf16.gmra.mxu0 %v716
      %v987 = vpop.f32.mrf.mxu0
      %v988 = vadd.f32 0.0, %v987
      %v989 = vpop.f32.mrf.mxu0
      %v990 = vadd.f32 0.0, %v989
      %991 = vmatmul.bf16.gmra.mxu0 %v720
      %v992 = vpop.f32.mrf.mxu0
      %v993 = vadd.f32 0.0, %v992
      %v994 = vpop.f32.mrf.mxu0
      %v995 = vadd.f32 0.0, %v994
      %996 = vdwg.mxu0
      %997 = vmatpush.bf16.msra.mxu0 %v899
      %998 = vmatpush.bf16.msra.mxu0 %v898
      %999 = vmatpush.bf16.msra.mxu0 %v897
      %1000 = vmatpush.bf16.msra.mxu0 %v896
      %1001 = vmatpush.bf16.msra.mxu0 %v895
      %1002 = vmatpush.bf16.msra.mxu0 %v894
      %1003 = vmatpush.bf16.msra.mxu0 %v893
      %1004 = vmatpush.bf16.msra.mxu0 %v892
      %1005 = vmatmul.bf16.gmra.mxu0 %v693
      %v1006 = vpop.f32.mrf.mxu0
      %v1007 = vadd.f32 %v958, %v1006
      %v1008 = vpop.f32.mrf.mxu0
      %v1009 = vadd.f32 %v960, %v1008
      %1010 = vmatmul.bf16.gmra.mxu0 %v697
      %v1011 = vpop.f32.mrf.mxu0
      %v1012 = vadd.f32 %v963, %v1011
      %v1013 = vpop.f32.mrf.mxu0
      %v1014 = vadd.f32 %v965, %v1013
      %1015 = vmatmul.bf16.gmra.mxu0 %v701
      %v1016 = vpop.f32.mrf.mxu0
      %v1017 = vadd.f32 %v968, %v1016
      %v1018 = vpop.f32.mrf.mxu0
      %v1019 = vadd.f32 %v970, %v1018
      %1020 = vmatmul.bf16.gmra.mxu0 %v705
      %v1021 = vpop.f32.mrf.mxu0
      %v1022 = vadd.f32 %v973, %v1021
      %v1023 = vpop.f32.mrf.mxu0
      %v1024 = vadd.f32 %v975, %v1023
      %1025 = vmatmul.bf16.gmra.mxu0 %v709
      %v1026 = vpop.f32.mrf.mxu0
      %v1027 = vadd.f32 %v978, %v1026
      %v1028 = vpop.f32.mrf.mxu0
      %v1029 = vadd.f32 %v980, %v1028
      %1030 = vmatmul.bf16.gmra.mxu0 %v713
      %v1031 = vpop.f32.mrf.mxu0
      %v1032 = vadd.f32 %v983, %v1031
      %v1033 = vpop.f32.mrf.mxu0
      %v1034 = vadd.f32 %v985, %v1033
      %1035 = vmatmul.bf16.gmra.mxu0 %v717
      %v1036 = vpop.f32.mrf.mxu0
      %v1037 = vadd.f32 %v988, %v1036
      %v1038 = vpop.f32.mrf.mxu0
      %v1039 = vadd.f32 %v990, %v1038
      %1040 = vmatmul.bf16.gmra.mxu0 %v721
      %v1041 = vpop.f32.mrf.mxu0
      %v1042 = vadd.f32 %v993, %v1041
      %v1043 = vpop.f32.mrf.mxu0
      %v1044 = vadd.f32 %v995, %v1043
      %1045 = vdwg.mxu0
      %1046 = vmatpush.bf16.msra.mxu0 %v907
      %1047 = vmatpush.bf16.msra.mxu0 %v906
      %1048 = vmatpush.bf16.msra.mxu0 %v905
      %1049 = vmatpush.bf16.msra.mxu0 %v904
      %1050 = vmatpush.bf16.msra.mxu0 %v903
      %1051 = vmatpush.bf16.msra.mxu0 %v902
      %1052 = vmatpush.bf16.msra.mxu0 %v901
      %1053 = vmatpush.bf16.msra.mxu0 %v900
      %1054 = vmatmul.bf16.gmra.mxu0 %v694
      %v1055 = vpop.f32.mrf.mxu0
      %v1056 = vadd.f32 %v1007, %v1055
      %v1057 = vpop.f32.mrf.mxu0
      %v1058 = vadd.f32 %v1009, %v1057
      %1059 = vmatmul.bf16.gmra.mxu0 %v698
      %v1060 = vpop.f32.mrf.mxu0
      %v1061 = vadd.f32 %v1012, %v1060
      %v1062 = vpop.f32.mrf.mxu0
      %v1063 = vadd.f32 %v1014, %v1062
      %1064 = vmatmul.bf16.gmra.mxu0 %v702
      %v1065 = vpop.f32.mrf.mxu0
      %v1066 = vadd.f32 %v1017, %v1065
      %v1067 = vpop.f32.mrf.mxu0
      %v1068 = vadd.f32 %v1019, %v1067
      %1069 = vmatmul.bf16.gmra.mxu0 %v706
      %v1070 = vpop.f32.mrf.mxu0
      %v1071 = vadd.f32 %v1022, %v1070
      %v1072 = vpop.f32.mrf.mxu0
      %v1073 = vadd.f32 %v1024, %v1072
      %1074 = vmatmul.bf16.gmra.mxu0 %v710
      %v1075 = vpop.f32.mrf.mxu0
      %v1076 = vadd.f32 %v1027, %v1075
      %v1077 = vpop.f32.mrf.mxu0
      %v1078 = vadd.f32 %v1029, %v1077
      %1079 = vmatmul.bf16.gmra.mxu0 %v714
      %v1080 = vpop.f32.mrf.mxu0
      %v1081 = vadd.f32 %v1032, %v1080
      %v1082 = vpop.f32.mrf.mxu0
      %v1083 = vadd.f32 %v1034, %v1082
      %1084 = vmatmul.bf16.gmra.mxu0 %v718
      %v1085 = vpop.f32.mrf.mxu0
      %v1086 = vadd.f32 %v1037, %v1085
      %v1087 = vpop.f32.mrf.mxu0
      %v1088 = vadd.f32 %v1039, %v1087
      %1089 = vmatmul.bf16.gmra.mxu0 %v722
      %v1090 = vpop.f32.mrf.mxu0
      %v1091 = vadd.f32 %v1042, %v1090
      %v1092 = vpop.f32.mrf.mxu0
      %v1093 = vadd.f32 %v1044, %v1092
      %1094 = vdwg.mxu0
      %1095 = vmatpush.bf16.msra.mxu0 %v915
      %1096 = vmatpush.bf16.msra.mxu0 %v914
      %1097 = vmatpush.bf16.msra.mxu0 %v913
      %1098 = vmatpush.bf16.msra.mxu0 %v912
      %1099 = vmatpush.bf16.msra.mxu0 %v911
      %1100 = vmatpush.bf16.msra.mxu0 %v910
      %1101 = vmatpush.bf16.msra.mxu0 %v909
      %1102 = vmatpush.bf16.msra.mxu0 %v908
      %1103 = vmatmul.bf16.gmra.mxu0 %v695
      %v1104 = vpop.f32.mrf.mxu0
      %v1105 = vadd.f32 %v1056, %v1104
      %v1106 = vpop.f32.mrf.mxu0
      %v1107 = vadd.f32 %v1058, %v1106
      %1108 = vmatmul.bf16.gmra.mxu0 %v699
      %v1109 = vpop.f32.mrf.mxu0
      %v1110 = vadd.f32 %v1061, %v1109
      %v1111 = vpop.f32.mrf.mxu0
      %v1112 = vadd.f32 %v1063, %v1111
      %1113 = vmatmul.bf16.gmra.mxu0 %v703
      %v1114 = vpop.f32.mrf.mxu0
      %v1115 = vadd.f32 %v1066, %v1114
      %v1116 = vpop.f32.mrf.mxu0
      %v1117 = vadd.f32 %v1068, %v1116
      %1118 = vmatmul.bf16.gmra.mxu0 %v707
      %v1119 = vpop.f32.mrf.mxu0
      %v1120 = vadd.f32 %v1071, %v1119
      %v1121 = vpop.f32.mrf.mxu0
      %v1122 = vadd.f32 %v1073, %v1121
      %1123 = vmatmul.bf16.gmra.mxu0 %v711
      %v1124 = vpop.f32.mrf.mxu0
      %v1125 = vadd.f32 %v1076, %v1124
      %v1126 = vpop.f32.mrf.mxu0
      %v1127 = vadd.f32 %v1078, %v1126
      %1128 = vmatmul.bf16.gmra.mxu0 %v715
      %v1129 = vpop.f32.mrf.mxu0
      %v1130 = vadd.f32 %v1081, %v1129
      %v1131 = vpop.f32.mrf.mxu0
      %v1132 = vadd.f32 %v1083, %v1131
      %1133 = vmatmul.bf16.gmra.mxu0 %v719
      %v1134 = vpop.f32.mrf.mxu0
      %v1135 = vadd.f32 %v1086, %v1134
      %v1136 = vpop.f32.mrf.mxu0
      %v1137 = vadd.f32 %v1088, %v1136
      %1138 = vmatmul.bf16.gmra.mxu0 %v723
      %v1139 = vpop.f32.mrf.mxu0
      %v1140 = vadd.f32 %v1091, %v1139
      %v1141 = vpop.f32.mrf.mxu0
      %v1142 = vadd.f32 %v1093, %v1141
      %1143 = vdwg.mxu0
      %v1144 = vpack.c.bf16 %v1107, %v1105
      %v1145 = vpack.c.bf16 %v1112, %v1110
      %v1146 = vpack.c.bf16 %v1117, %v1115
      %v1147 = vpack.c.bf16 %v1122, %v1120
      %v1148 = vpack.c.bf16 %v1127, %v1125
      %v1149 = vpack.c.bf16 %v1132, %v1130
      %v1150 = vpack.c.bf16 %v1137, %v1135
      %v1151 = vpack.c.bf16 %v1142, %v1140
      %v1152 = vld [vmem:[%s329] sm:$0xf]
      %v1153 = vld [vmem:[%s329 + $0x4] sm:$0xf]
      %v1154 = vld [vmem:[%s329 + $0x8] sm:$0xf]
      %v1155 = vld [vmem:[%s329 + $0xc] sm:$0xf]
      %v1156 = vld [vmem:[%s329 + $0x10] sm:$0xf]
      %v1157 = vld [vmem:[%s329 + $0x14] sm:$0xf]
      %v1158 = vld [vmem:[%s329 + $0x18] sm:$0xf]
      %v1159 = vld [vmem:[%s329 + $0x1c] sm:$0xf]
      %v1160 = vld [vmem:[%s329 + $0x20] sm:$0xf]
      %v1161 = vld [vmem:[%s329 + $0x24] sm:$0xf]
      %v1162 = vld [vmem:[%s329 + $0x28] sm:$0xf]
      %v1163 = vld [vmem:[%s329 + $0x2c] sm:$0xf]
      %v1164 = vld [vmem:[%s329 + $0x30] sm:$0xf]
      %v1165 = vld [vmem:[%s329 + $0x34] sm:$0xf]
      %v1166 = vld [vmem:[%s329 + $0x38] sm:$0xf]
      %v1167 = vld [vmem:[%s329 + $0x3c] sm:$0xf]
      %v1168 = vld [vmem:[%s332] sm:$0x1]
      %v1170 = vperm.slane %v1168, 0
      %v1188 = vunpack.c.l.b16 %v1152
      %v1189 = vunpack.c.l.b16 %v1153
      %v1190 = vunpack.c.l.b16 %v1154
      %v1191 = vunpack.c.l.b16 %v1155
      %v1192 = vunpack.c.l.b16 %v1156
      %v1193 = vunpack.c.l.b16 %v1157
      %v1194 = vunpack.c.l.b16 %v1158
      %v1195 = vunpack.c.l.b16 %v1159
      %v1196 = vunpack.c.l.b16 %v1160
      %v1197 = vunpack.c.l.b16 %v1161
      %v1198 = vunpack.c.l.b16 %v1162
      %v1199 = vunpack.c.l.b16 %v1163
      %v1200 = vunpack.c.l.b16 %v1164
      %v1201 = vunpack.c.l.b16 %v1165
      %v1202 = vunpack.c.l.b16 %v1166
      %v1203 = vunpack.c.l.b16 %v1167
      %v1204 = vpack.c.b16 %v1189, %v1188
      %v1205 = vpack.c.b16 %v1191, %v1190
      %v1206 = vpack.c.b16 %v1193, %v1192
      %v1207 = vpack.c.b16 %v1195, %v1194
      %v1208 = vpack.c.b16 %v1197, %v1196
      %v1209 = vpack.c.b16 %v1199, %v1198
      %v1210 = vpack.c.b16 %v1201, %v1200
      %v1211 = vpack.c.b16 %v1203, %v1202
      %1220 = vmatpush.bf16.msra.mxu0 %v1211
      %1221 = vmatpush.bf16.msra.mxu0 %v1210
      %1222 = vmatpush.bf16.msra.mxu0 %v1209
      %1223 = vmatpush.bf16.msra.mxu0 %v1208
      %1224 = vmatpush.bf16.msra.mxu0 %v1207
      %1225 = vmatpush.bf16.msra.mxu0 %v1206
      %1226 = vmatpush.bf16.msra.mxu0 %v1205
      %1227 = vmatpush.bf16.msra.mxu0 %v1204
      %1228 = vmatmul.bf16.gmra.mxu0 %v1144
      %v1229 = vpop.f32.mrf.mxu0
      %v1230 = vadd.f32 %v1170, %v1229
      %v1231 = vpop.f32.mrf.mxu0
      %v1232 = vadd.f32 %v1170, %v1231
      %1233 = vmatmul.bf16.gmra.mxu0 %v1145
      %v1234 = vpop.f32.mrf.mxu0
      %v1235 = vadd.f32 %v1170, %v1234
      %v1236 = vpop.f32.mrf.mxu0
      %v1237 = vadd.f32 %v1170, %v1236
      %1238 = vmatmul.bf16.gmra.mxu0 %v1146
      %v1239 = vpop.f32.mrf.mxu0
      %v1240 = vadd.f32 %v1170, %v1239
      %v1241 = vpop.f32.mrf.mxu0
      %v1242 = vadd.f32 %v1170, %v1241
      %1243 = vmatmul.bf16.gmra.mxu0 %v1147
      %v1244 = vpop.f32.mrf.mxu0
      %v1245 = vadd.f32 %v1170, %v1244
      %v1246 = vpop.f32.mrf.mxu0
      %v1247 = vadd.f32 %v1170, %v1246
      %1248 = vmatmul.bf16.gmra.mxu0 %v1148
      %v1249 = vpop.f32.mrf.mxu0
      %v1250 = vadd.f32 %v1170, %v1249
      %v1251 = vpop.f32.mrf.mxu0
      %v1252 = vadd.f32 %v1170, %v1251
      %1253 = vmatmul.bf16.gmra.mxu0 %v1149
      %v1254 = vpop.f32.mrf.mxu0
      %v1255 = vadd.f32 %v1170, %v1254
      %v1256 = vpop.f32.mrf.mxu0
      %v1257 = vadd.f32 %v1170, %v1256
      %1258 = vmatmul.bf16.gmra.mxu0 %v1150
      %v1259 = vpop.f32.mrf.mxu0
      %v1260 = vadd.f32 %v1170, %v1259
      %v1261 = vpop.f32.mrf.mxu0
      %v1262 = vadd.f32 %v1170, %v1261
      %1263 = vmatmul.bf16.gmra.mxu0 %v1151
      %v1264 = vpop.f32.mrf.mxu0
      %v1265 = vadd.f32 %v1170, %v1264
      %v1266 = vpop.f32.mrf.mxu0
      %v1267 = vadd.f32 %v1170, %v1266
      %1268 = vdwg.mxu0
      %v1269 = vmax.f32 %v1230, 0.0
      %v1270 = vmax.f32 %v1232, 0.0
      %v1271 = vmax.f32 %v1235, 0.0
      %v1272 = vmax.f32 %v1237, 0.0
      %v1273 = vmax.f32 %v1240, 0.0
      %v1274 = vmax.f32 %v1242, 0.0
      %v1275 = vmax.f32 %v1245, 0.0
      %v1276 = vmax.f32 %v1247, 0.0
      %v1277 = vmax.f32 %v1250, 0.0
      %v1278 = vmax.f32 %v1252, 0.0
      %v1279 = vmax.f32 %v1255, 0.0
      %v1280 = vmax.f32 %v1257, 0.0
      %v1281 = vmax.f32 %v1260, 0.0
      %v1282 = vmax.f32 %v1262, 0.0
      %v1283 = vmax.f32 %v1265, 0.0
      %v1284 = vmax.f32 %v1267, 0.0
      %v1285 = vpack.c.bf16 %v1270, %v1269
      %v1286 = vpack.c.bf16 %v1272, %v1271
      %v1287 = vpack.c.bf16 %v1274, %v1273
      %v1288 = vpack.c.bf16 %v1276, %v1275
      %v1289 = vpack.c.bf16 %v1278, %v1277
      %v1290 = vpack.c.bf16 %v1280, %v1279
      %v1291 = vpack.c.bf16 %v1282, %v1281
      %v1292 = vpack.c.bf16 %v1284, %v1283
      %v1293 = vld [vmem:[%s337] sm:$0xf]
      %v1294 = vld [vmem:[%s337 + $0x4] sm:$0xf]
      %v1295 = vld [vmem:[%s337 + $0x8] sm:$0xf]
      %v1296 = vld [vmem:[%s337 + $0xc] sm:$0xf]
      %v1297 = vld [vmem:[%s337 + $0x10] sm:$0xf]
      %v1298 = vld [vmem:[%s337 + $0x14] sm:$0xf]
      %v1299 = vld [vmem:[%s337 + $0x18] sm:$0xf]
      %v1300 = vld [vmem:[%s337 + $0x1c] sm:$0xf]
      %v1301 = vld [vmem:[%s337 + $0x20] sm:$0xf]
      %v1302 = vld [vmem:[%s337 + $0x24] sm:$0xf]
      %v1303 = vld [vmem:[%s337 + $0x28] sm:$0xf]
      %v1304 = vld [vmem:[%s337 + $0x2c] sm:$0xf]
      %v1305 = vld [vmem:[%s337 + $0x30] sm:$0xf]
      %v1306 = vld [vmem:[%s337 + $0x34] sm:$0xf]
      %v1307 = vld [vmem:[%s337 + $0x38] sm:$0xf]
      %v1308 = vld [vmem:[%s337 + $0x3c] sm:$0xf]
      %v1309 = vld [vmem:[%s340] sm:$0x1]
      %v1311 = vperm.slane %v1309, 0
      %v1329 = vunpack.c.l.b16 %v1293
      %v1330 = vunpack.c.l.b16 %v1294
      %v1331 = vunpack.c.l.b16 %v1295
      %v1332 = vunpack.c.l.b16 %v1296
      %v1333 = vunpack.c.l.b16 %v1297
      %v1334 = vunpack.c.l.b16 %v1298
      %v1335 = vunpack.c.l.b16 %v1299
      %v1336 = vunpack.c.l.b16 %v1300
      %v1337 = vunpack.c.l.b16 %v1301
      %v1338 = vunpack.c.l.b16 %v1302
      %v1339 = vunpack.c.l.b16 %v1303
      %v1340 = vunpack.c.l.b16 %v1304
      %v1341 = vunpack.c.l.b16 %v1305
      %v1342 = vunpack.c.l.b16 %v1306
      %v1343 = vunpack.c.l.b16 %v1307
      %v1344 = vunpack.c.l.b16 %v1308
      %v1345 = vpack.c.b16 %v1330, %v1329
      %v1346 = vpack.c.b16 %v1332, %v1331
      %v1347 = vpack.c.b16 %v1334, %v1333
      %v1348 = vpack.c.b16 %v1336, %v1335
      %v1349 = vpack.c.b16 %v1338, %v1337
      %v1350 = vpack.c.b16 %v1340, %v1339
      %v1351 = vpack.c.b16 %v1342, %v1341
      %v1352 = vpack.c.b16 %v1344, %v1343
      %1361 = vmatpush.bf16.msra.mxu0 %v1352
      %1362 = vmatpush.bf16.msra.mxu0 %v1351
      %1363 = vmatpush.bf16.msra.mxu0 %v1350
      %1364 = vmatpush.bf16.msra.mxu0 %v1349
      %1365 = vmatpush.bf16.msra.mxu0 %v1348
      %1366 = vmatpush.bf16.msra.mxu0 %v1347
      %1367 = vmatpush.bf16.msra.mxu0 %v1346
      %1368 = vmatpush.bf16.msra.mxu0 %v1345
      %1369 = vmatmul.bf16.gmra.mxu0 %v1285
      %v1370 = vpop.f32.mrf.mxu0
      %v1371 = vadd.f32 %v1311, %v1370
      %v1372 = vpop.f32.mrf.mxu0
      %v1373 = vadd.f32 %v1311, %v1372
      %1374 = vmatmul.bf16.gmra.mxu0 %v1286
      %v1375 = vpop.f32.mrf.mxu0
      %v1376 = vadd.f32 %v1311, %v1375
      %v1377 = vpop.f32.mrf.mxu0
      %v1378 = vadd.f32 %v1311, %v1377
      %1379 = vmatmul.bf16.gmra.mxu0 %v1287
      %v1380 = vpop.f32.mrf.mxu0
      %v1381 = vadd.f32 %v1311, %v1380
      %v1382 = vpop.f32.mrf.mxu0
      %v1383 = vadd.f32 %v1311, %v1382
      %1384 = vmatmul.bf16.gmra.mxu0 %v1288
      %v1385 = vpop.f32.mrf.mxu0
      %v1386 = vadd.f32 %v1311, %v1385
      %v1387 = vpop.f32.mrf.mxu0
      %v1388 = vadd.f32 %v1311, %v1387
      %1389 = vmatmul.bf16.gmra.mxu0 %v1289
      %v1390 = vpop.f32.mrf.mxu0
      %v1391 = vadd.f32 %v1311, %v1390
      %v1392 = vpop.f32.mrf.mxu0
      %v1393 = vadd.f32 %v1311, %v1392
      %1394 = vmatmul.bf16.gmra.mxu0 %v1290
      %v1395 = vpop.f32.mrf.mxu0
      %v1396 = vadd.f32 %v1311, %v1395
      %v1397 = vpop.f32.mrf.mxu0
      %v1398 = vadd.f32 %v1311, %v1397
      %1399 = vmatmul.bf16.gmra.mxu0 %v1291
      %v1400 = vpop.f32.mrf.mxu0
      %v1401 = vadd.f32 %v1311, %v1400
      %v1402 = vpop.f32.mrf.mxu0
      %v1403 = vadd.f32 %v1311, %v1402
      %1404 = vmatmul.bf16.gmra.mxu0 %v1292
      %v1405 = vpop.f32.mrf.mxu0
      %v1406 = vadd.f32 %v1311, %v1405
      %v1407 = vpop.f32.mrf.mxu0
      %v1408 = vadd.f32 %v1311, %v1407
      %1409 = vdwg.mxu0
      %v1410 = vmax.f32 %v1371, 0.0
      %v1411 = vmax.f32 %v1373, 0.0
      %v1412 = vmax.f32 %v1376, 0.0
      %v1413 = vmax.f32 %v1378, 0.0
      %v1414 = vmax.f32 %v1381, 0.0
      %v1415 = vmax.f32 %v1383, 0.0
      %v1416 = vmax.f32 %v1386, 0.0
      %v1417 = vmax.f32 %v1388, 0.0
      %v1418 = vmax.f32 %v1391, 0.0
      %v1419 = vmax.f32 %v1393, 0.0
      %v1420 = vmax.f32 %v1396, 0.0
      %v1421 = vmax.f32 %v1398, 0.0
      %v1422 = vmax.f32 %v1401, 0.0
      %v1423 = vmax.f32 %v1403, 0.0
      %v1424 = vmax.f32 %v1406, 0.0
      %v1425 = vmax.f32 %v1408, 0.0
      %v1426 = vpack.c.bf16 %v1410, %v1410
      %v1427 = vpack.c.bf16 %v1411, %v1411
      %v1428 = vpack.c.bf16 %v1412, %v1412
      %v1429 = vpack.c.bf16 %v1413, %v1413
      %v1430 = vpack.c.bf16 %v1414, %v1414
      %v1431 = vpack.c.bf16 %v1415, %v1415
      %v1432 = vpack.c.bf16 %v1416, %v1416
      %v1433 = vpack.c.bf16 %v1417, %v1417
      %v1434 = vpack.c.bf16 %v1418, %v1418
      %v1435 = vpack.c.bf16 %v1419, %v1419
      %v1436 = vpack.c.bf16 %v1420, %v1420
      %v1437 = vpack.c.bf16 %v1421, %v1421
      %v1438 = vpack.c.bf16 %v1422, %v1422
      %v1439 = vpack.c.bf16 %v1423, %v1423
      %v1440 = vpack.c.bf16 %v1424, %v1424
      %v1441 = vpack.c.bf16 %v1425, %v1425
      %p1442 = scmp.lt.s32.totalorder %s22, 0
      %s1443 = ssub.s32 0, %s22
      %s1444 = scalar_select %p1442, %s1443, %s22
      %s1445 = sand.u32 %s1444, 1
      %s1446 = ssub.s32 0, %s1445
      %s1447 = scalar_select %p1442, %s1446, %s1445
      %p1448 = scmp.ne.s32.totalorder %s1447, 0
      %p1449 = scmp.lt.s32.totalorder %s1447, 0
      %p1450 = pnand %p1449, %p1448
      %p1451 = pneg %p1450
      %s1452 = sadd.s32 %s1447, 2
      %s1453 = scalar_select %p1451, %s1452, %s1447
      %s1454 = smul.u32 %s1453, 512
      %s1455 = sadd.s32 %s1454, %s558
      %s1456 = sshra.s32 %s1455, 3
      %s1457 = sand.u32 %s1455, 7
      %s1458 = smul.addr %s1456, 4
      %s1459 = scalar_lea.vmem [#allocation2], %s1458
      %1460 = vst [vmem:[%s1459] sm:$0xf] %v1426
      %1461 = vst [vmem:[%s1459 + $0x4] sm:$0xf] %v1427
      %1462 = vst [vmem:[%s1459 + $0x8] sm:$0xf] %v1428
      %1463 = vst [vmem:[%s1459 + $0xc] sm:$0xf] %v1429
      %1464 = vst [vmem:[%s1459 + $0x10] sm:$0xf] %v1430
      %1465 = vst [vmem:[%s1459 + $0x14] sm:$0xf] %v1431
      %1466 = vst [vmem:[%s1459 + $0x18] sm:$0xf] %v1432
      %1467 = vst [vmem:[%s1459 + $0x1c] sm:$0xf] %v1433
      %1468 = vst [vmem:[%s1459 + $0x20] sm:$0xf] %v1434
      %1469 = vst [vmem:[%s1459 + $0x24] sm:$0xf] %v1435
      %1470 = vst [vmem:[%s1459 + $0x28] sm:$0xf] %v1436
      %1471 = vst [vmem:[%s1459 + $0x2c] sm:$0xf] %v1437
      %1472 = vst [vmem:[%s1459 + $0x30] sm:$0xf] %v1438
      %1473 = vst [vmem:[%s1459 + $0x34] sm:$0xf] %v1439
      %1474 = vst [vmem:[%s1459 + $0x38] sm:$0xf] %v1440
      %1475 = vst [vmem:[%s1459 + $0x3c] sm:$0xf] %v1441
      %p1476 = scmp.eq.s32.totalorder %s22, 2
      // Predicated region
      $region53: #{gin_net_forward.1} parent=47 // pred_check
        %p1477 = pneg %p1476
      $region54: #{gin_net_forward.1} parent=47 // pred_check_branch
        %1479 = sbr.rel (%p1477) target = $region56
      $region55: #{gin_net_forward.1} parent=47 // pred_region
        %v1480 = vld [vmem:[%s7] sm:$0xff]
        %v1481 = vld [vmem:[%s324] sm:$0xf]
        %v1498 = vunpack.c.l.b16 %v1426
        %v1499 = vunpack.c.l.b16 %v1427
        %v1500 = vunpack.c.l.b16 %v1428
        %v1501 = vunpack.c.l.b16 %v1429
        %v1502 = vunpack.c.l.b16 %v1430
        %v1503 = vunpack.c.l.b16 %v1431
        %v1504 = vunpack.c.l.b16 %v1432
        %v1505 = vunpack.c.l.b16 %v1433
        %v1506 = vunpack.c.l.b16 %v1434
        %v1507 = vunpack.c.l.b16 %v1435
        %v1508 = vunpack.c.l.b16 %v1436
        %v1509 = vunpack.c.l.b16 %v1437
        %v1510 = vunpack.c.l.b16 %v1438
        %v1511 = vunpack.c.l.b16 %v1439
        %v1512 = vunpack.c.l.b16 %v1440
        %v1513 = vunpack.c.l.b16 %v1441
        %v1514 = vpack.c.b16 %v1499, %v1498
        %v1515 = vpack.c.b16 %v1501, %v1500
        %v1516 = vpack.c.b16 %v1503, %v1502
        %v1517 = vpack.c.b16 %v1505, %v1504
        %v1518 = vpack.c.b16 %v1507, %v1506
        %v1519 = vpack.c.b16 %v1509, %v1508
        %v1520 = vpack.c.b16 %v1511, %v1510
        %v1521 = vpack.c.b16 %v1513, %v1512
        %1530 = vmatpush.bf16.msra.mxu0 %v1521
        %1531 = vmatpush.bf16.msra.mxu0 %v1520
        %1532 = vmatpush.bf16.msra.mxu0 %v1519
        %1533 = vmatpush.bf16.msra.mxu0 %v1518
        %1534 = vmatpush.bf16.msra.mxu0 %v1517
        %1535 = vmatpush.bf16.msra.mxu0 %v1516
        %1536 = vmatpush.bf16.msra.mxu0 %v1515
        %1537 = vmatpush.bf16.msra.mxu0 %v1514
        %1538 = vmatmul.bf16.gmra.mxu0 %v1481
        %v1539 = vpop.f32.mrf.mxu0
        %v1540 = vadd.f32 0.0, %v1539
        %v1541 = vpop.f32.mrf.mxu0
        %1542 = vdwg.mxu0
        %v1543 = vadd.f32 %v1480, %v1540
        %1544 = vst [vmem:[%s7] sm:$0xff] %v1543
      $region56: #{gin_net_forward.1} parent=47 // pred_fallthru
        _
      // Predicated region
      $region57: #{gin_net_forward.1} parent=47 // pred_check
        %p1545 = pneg %p215
      $region58: #{gin_net_forward.1} parent=47 // pred_check_branch
        %1547 = sbr.rel (%p1545) target = $region60
      $region59: #{gin_net_forward.1} parent=47 // pred_region
        _
      $region60: #{gin_net_forward.1} parent=47 // pred_fallthru
        _
      // Predicated region
      $region61: #{gin_net_forward.1} parent=47 // pred_check
        %p1548 = pneg %p215
      $region62: #{gin_net_forward.1} parent=47 // pred_check_branch
        %1550 = sbr.rel (%p1548) target = $region64
      $region63: #{gin_net_forward.1} parent=47 // pred_region
        _
      $region64: #{gin_net_forward.1} parent=47 // pred_fallthru
        _
    $region48: #{gin_net_forward.1} parent=5 // pred_fallthru
      _
    %p1551 = scmp.le.s32.totalorder 2, %s13
    // Predicated region
    $region65: #{gin_net_forward.1} parent=5 // pred_check
      %p1552 = pneg %p1551
    $region66: #{gin_net_forward.1} parent=5 // pred_check_branch
      %1554 = sbr.rel (%p1552) target = $region68
    $region67: #{gin_net_forward.1} parent=5 // pred_region
      %s1555 = ssub.s32 %s13, 2
    $region68: #{gin_net_forward.1} parent=5 // pred_fallthru
      _
  $region6: #{gin_net_forward.1} parent=0 // loop_footer
    %s17 = sadd.s32 1, %s13
  $region7: #{gin_net_forward.1} parent=0 // loop_footer_branch
    %12 = sbr.rel target = $region3
  $region8: #{gin_net_forward.1} parent=0 // loop_exit
    _

</llo_original>
